<compile_context>
chip_gen: v6e
topology: v6e:2x2x1
jax: 0.10.0
libtpu: 0.0.40
codegen_flags: <defaults>
</compile_context>

<pallas_src>
import functools

import jax
import jax.numpy as jnp
import numpy as np
from jax.experimental import pallas as pl
from jax.experimental.pallas import tpu as pltpu


def e_mhsa_kernel(x_ref, wqkv_ref, bqkv_ref, wproj_ref, bproj_ref, o_ref,
                  ctx_slab, *, block_b, num_heads, head_dim):
    Bb = block_b
    N = x_ref.shape[1]
    C = x_ref.shape[2]
    M = Bb * N

    # --- Fused QKV projection over all Bb*N rows: one lane-dense (M, 3C) MXU
    #     matmul with bf16 operands and f32 accumulation. ---
    x = x_ref[...].reshape(M, C).astype(jnp.bfloat16)
    qkv = jnp.dot(x, wqkv_ref[...], preferred_element_type=jnp.float32)
    qkv = (qkv + bqkv_ref[...]).astype(jnp.bfloat16)          # (M, 3C) bf16
    # Softmax scale is already folded into the Wq / bq columns host-side.

    # --- Per-batch, per-head attention (static unroll; N, head slices are
    #     static and aligned: rows at multiples of N, lanes at multiples of
    #     head_dim). ---
    for bb in range(Bb):
        r0 = bb * N
        for h in range(num_heads):
            c0 = h * head_dim
            qh = qkv[r0:r0 + N, 0 * C + c0:0 * C + c0 + head_dim]   # (N, hd)
            kh = qkv[r0:r0 + N, 1 * C + c0:1 * C + c0 + head_dim]   # (N, hd)
            vh = qkv[r0:r0 + N, 2 * C + c0:2 * C + c0 + head_dim]   # (N, hd)

            # s = (q*scale) @ k^T, contracting head_dim (no explicit transpose).
            s = jax.lax.dot_general(qh, kh, (((1,), (1,)), ((), ())),
                                    preferred_element_type=jnp.float32)
            # Numerically-stable softmax with deferred normalization.
            m = jnp.max(s, axis=-1, keepdims=True)
            p = jnp.exp(s - m)
            l = jnp.sum(p, axis=-1, keepdims=True)                  # (N, 1)
            ctx = jnp.dot(p.astype(jnp.bfloat16), vh,
                          preferred_element_type=jnp.float32)       # (N, hd)
            ctx = ctx * pl.reciprocal(l, approx=True)
            # Scatter the head context into the lane-dense VMEM slab (no
            # jnp.concatenate / lane-repacking of values).
            ctx_slab[r0:r0 + N, c0:c0 + head_dim] = ctx.astype(ctx_slab.dtype)

    # --- Output projection: one wide (M, C) @ (C, C) bf16 matmul. ---
    out = jnp.dot(ctx_slab[...], wproj_ref[...],
                  preferred_element_type=jnp.float32)
    out = out + bproj_ref[...]
    o_ref[...] = out.reshape(Bb, N, C).astype(o_ref.dtype)


def pack_e_mhsa_params(params, *, head_dim=32):
    """Pack weights ONCE at init time: fold softmax scale into Wq/bq, fuse
    q/k/v into one lane-dense (C, 3C) weight, cast weights to bf16."""
    scale = float(head_dim) ** -0.5
    w_qkv = jnp.concatenate(
        [params['wq'] * scale, params['wk'], params['wv']], axis=1)   # (C, 3C)
    b_qkv = jnp.concatenate(
        [params['bq'] * scale, params['bk'], params['bv']], axis=1)   # (1, 3C)
    return dict(
        w_qkv=w_qkv.astype(jnp.bfloat16),
        b_qkv=b_qkv.astype(jnp.float32),
        w_proj=params['wproj'].astype(jnp.bfloat16),
        b_proj=params['bproj'].astype(jnp.float32),
    )


def e_mhsa_forward(x, packed, *, head_dim=32, block_b=None):
    B, N, C = x.shape
    num_heads = C // head_dim

    if block_b is None:
        # Target ~128+ projection rows per grid step (fills MXU rows), while
        # keeping block_b a divisor of B so the grid stays exact.
        target = max(1, 128 // N)
        block_b = 1
        for d in range(1, B + 1):
            if B % d == 0 and d <= target:
                block_b = d
    assert B % block_b == 0
    grid_b = B // block_b

    kernel = functools.partial(e_mhsa_kernel, block_b=block_b,
                               num_heads=num_heads, head_dim=head_dim)

    return pl.pallas_call(
        kernel,
        out_shape=jax.ShapeDtypeStruct((B, N, C), jnp.float32),
        grid_spec=pltpu.PrefetchScalarGridSpec(
            num_scalar_prefetch=0,
            grid=(grid_b,),
            in_specs=[
                pl.BlockSpec((block_b, N, C), lambda b: (b, 0, 0)),  # x tile
                pl.BlockSpec((C, 3 * C), lambda b: (0, 0)),          # fused Wqkv
                pl.BlockSpec((1, 3 * C), lambda b: (0, 0)),          # fused bqkv
                pl.BlockSpec((C, C), lambda b: (0, 0)),              # Wproj
                pl.BlockSpec((1, C), lambda b: (0, 0)),              # bproj
            ],
            out_specs=pl.BlockSpec((block_b, N, C), lambda b: (b, 0, 0)),
            scratch_shapes=[pltpu.VMEM((block_b * N, C), jnp.bfloat16)],
        ),
        compiler_params=pltpu.CompilerParams(
            dimension_semantics=("parallel",)),
    )(x, packed['w_qkv'], packed['b_qkv'], packed['w_proj'], packed['b_proj'])


def e_mhsa_reference(x, params, *, head_dim=32):
    # Pure-JAX f32 reference mirroring the PyTorch module (sr_ratio=1, drop=0).
    B, N, C = x.shape
    H = C // head_dim
    scale = float(head_dim) ** -0.5
    hp = jax.lax.Precision.HIGHEST

    def lin(t, w, b):
        return jnp.einsum('bnc,cd->bnd', t, w, precision=hp) + b

    q = lin(x, params['wq'], params['bq']).reshape(B, N, H, head_dim).transpose(0, 2, 1, 3)
    k = lin(x, params['wk'], params['bk']).reshape(B, N, H, head_dim).transpose(0, 2, 1, 3)
    v = lin(x, params['wv'], params['bv']).reshape(B, N, H, head_dim).transpose(0, 2, 1, 3)
    attn = jnp.einsum('bhnd,bhmd->bhnm', q, k, precision=hp) * scale
    attn = jax.nn.softmax(attn, axis=-1)
    out = jnp.einsum('bhnm,bhmd->bhnd', attn, v, precision=hp)
    out = out.transpose(0, 2, 1, 3).reshape(B, N, C)
    return jnp.einsum('bnc,cd->bnd', out, params['wproj'], precision=hp) + params['bproj']


if __name__ == "__main__":
    key = jax.random.PRNGKey(0)
    B, N = 4, 64          # e.g. 4 images of 8x8 tokens
    head_dim = 32
    C = 128               # dim -> num_heads = 4; channel width is lane-dense

    ks = jax.random.split(key, 9)
    x = jax.random.normal(ks[0], (B, N, C), jnp.float32)
    params = dict(
        wq=0.05 * jax.random.normal(ks[1], (C, C), jnp.float32),
        bq=0.05 * jax.random.normal(ks[2], (1, C), jnp.float32),
        wk=0.05 * jax.random.normal(ks[3], (C, C), jnp.float32),
        bk=0.05 * jax.random.normal(ks[4], (1, C), jnp.float32),
        wv=0.05 * jax.random.normal(ks[5], (C, C), jnp.float32),
        bv=0.05 * jax.random.normal(ks[6], (1, C), jnp.float32),
        wproj=0.05 * jax.random.normal(ks[7], (C, C), jnp.float32),
        bproj=0.05 * jax.random.normal(ks[8], (1, C), jnp.float32),
    )

    packed = pack_e_mhsa_params(params, head_dim=head_dim)

    y = e_mhsa_forward(x, packed, head_dim=head_dim)
    jax.block_until_ready(y)

    y_ref = e_mhsa_reference(x, params, head_dim=head_dim)
    # bf16 MXU operands with f32 accumulation -> relaxed tolerance vs the
    # Precision.HIGHEST f32 reference.
    np.testing.assert_allclose(np.asarray(y), np.asarray(y_ref),
                               rtol=2e-2, atol=2e-2)

    print("KERNEL_OK")
</pallas_src>

<mosaic_0001>
module attributes {stable_mosaic.version = 11 : i64} {
  func.func @e_mhsa_kernel(%arg0: i32, %arg1: memref<2x64x128xf32, #tpu.memory_space<vmem>>, %arg2: memref<128x384xbf16, #tpu.memory_space<vmem>>, %arg3: memref<1x384xf32, #tpu.memory_space<vmem>>, %arg4: memref<128x128xbf16, #tpu.memory_space<vmem>>, %arg5: memref<1x128xf32, #tpu.memory_space<vmem>>, %arg6: memref<2x64x128xf32, #tpu.memory_space<vmem>>, %arg7: memref<128x128xbf16, #tpu.memory_space<vmem>>) attributes {dimension_semantics = [#tpu.dimension_semantics<parallel>], iteration_bounds = array<i64: 2>, scalar_prefetch = 0 : i64, scratch_operands = 1 : i64, tpu.core_type = #tpu.core_type<tc>, window_params = [{transform_indices = @transform_0, window_bounds = array<i64: 2, 64, 128>}, {pipeline_mode = #tpu.pipeline_mode<synchronous>, transform_indices = @transform_1, window_bounds = array<i64: 128, 384>}, {pipeline_mode = #tpu.pipeline_mode<synchronous>, transform_indices = @transform_2, window_bounds = array<i64: 1, 384>}, {pipeline_mode = #tpu.pipeline_mode<synchronous>, transform_indices = @transform_3, window_bounds = array<i64: 128, 128>}, {pipeline_mode = #tpu.pipeline_mode<synchronous>, transform_indices = @transform_4, window_bounds = array<i64: 1, 128>}, {transform_indices = @transform_5, window_bounds = array<i64: 2, 64, 128>}]} {
    %c0 = arith.constant 0 : index
    %c0_0 = arith.constant 0 : index
    %c0_1 = arith.constant 0 : index
    %0 = vector.load %arg1[%c0, %c0_0, %c0_1] : memref<2x64x128xf32, #tpu.memory_space<vmem>>, vector<2x64x128xf32>
    %1 = vector.shape_cast %0 : vector<2x64x128xf32> to vector<128x128xf32>
    %2 = arith.truncf %1 : vector<128x128xf32> to vector<128x128xbf16>
    %c0_2 = arith.constant 0 : index
    %c0_3 = arith.constant 0 : index
    %3 = vector.load %arg2[%c0_2, %c0_3] : memref<128x384xbf16, #tpu.memory_space<vmem>>, vector<128x384xbf16>
    %cst = arith.constant dense<0.000000e+00> : vector<128x384xf32>
    %4 = tpu.matmul %2, %3, %cst {dimension_numbers = #tpu.dot_dimension_numbers<[1], [0], [0], [1], [0, 0, 1, 1], [], []>} : vector<128x128xbf16>, vector<128x384xbf16>, vector<128x384xf32> -> vector<128x384xf32>
    %c0_4 = arith.constant 0 : index
    %c0_5 = arith.constant 0 : index
    %5 = vector.load %arg3[%c0_4, %c0_5] : memref<1x384xf32, #tpu.memory_space<vmem>>, vector<1x384xf32>
    %6 = vector.broadcast %5 : vector<1x384xf32> to vector<128x384xf32>
    %7 = arith.addf %4, %6 : vector<128x384xf32>
    %8 = arith.truncf %7 : vector<128x384xf32> to vector<128x384xbf16>
    %9 = vector.extract_strided_slice %8 {offsets = [0, 0], sizes = [64, 32], strides = [1, 1]} : vector<128x384xbf16> to vector<64x32xbf16>
    %10 = vector.extract_strided_slice %8 {offsets = [0, 128], sizes = [64, 32], strides = [1, 1]} : vector<128x384xbf16> to vector<64x32xbf16>
    %11 = vector.extract_strided_slice %8 {offsets = [0, 256], sizes = [64, 32], strides = [1, 1]} : vector<128x384xbf16> to vector<64x32xbf16>
    %cst_6 = arith.constant dense<0.000000e+00> : vector<64x64xf32>
    %12 = tpu.matmul %9, %10, %cst_6 {dimension_numbers = #tpu.dot_dimension_numbers<[1], [1], [0], [0], [0, 0, 1, 0], [], []>} : vector<64x32xbf16>, vector<64x32xbf16>, vector<64x64xf32> -> vector<64x64xf32>
    %cst_7 = arith.constant dense<0xFF800000> : vector<64xf32>
    %13 = vector.multi_reduction <maximumf>, %12, %cst_7 [1] : vector<64x64xf32> to vector<64xf32>
    %14 = vector.shape_cast %13 : vector<64xf32> to vector<64x1xf32>
    %15 = vector.broadcast %14 : vector<64x1xf32> to vector<64x64xf32>
    %16 = arith.subf %12, %15 : vector<64x64xf32>
    %17 = math.exp %16 : vector<64x64xf32>
    %cst_8 = arith.constant dense<0.000000e+00> : vector<64xf32>
    %18 = vector.multi_reduction <add>, %17, %cst_8 [1] : vector<64x64xf32> to vector<64xf32>
    %19 = vector.shape_cast %18 : vector<64xf32> to vector<64x1xf32>
    %20 = arith.truncf %17 : vector<64x64xf32> to vector<64x64xbf16>
    %cst_9 = arith.constant dense<0.000000e+00> : vector<64x32xf32>
    %21 = tpu.matmul %20, %11, %cst_9 {dimension_numbers = #tpu.dot_dimension_numbers<[1], [0], [0], [1], [0, 0, 1, 1], [], []>} : vector<64x64xbf16>, vector<64x32xbf16>, vector<64x32xf32> -> vector<64x32xf32>
    %22 = tpu.reciprocal %19 {approx = true} : vector<64x1xf32> -> vector<64x1xf32>
    %23 = vector.broadcast %22 : vector<64x1xf32> to vector<64x32xf32>
    %24 = arith.mulf %21, %23 : vector<64x32xf32>
    %25 = arith.truncf %24 : vector<64x32xf32> to vector<64x32xbf16>
    %c0_10 = arith.constant 0 : index
    %c0_11 = arith.constant 0 : index
    %26 = vector.load %arg7[%c0_10, %c0_11] : memref<128x128xbf16, #tpu.memory_space<vmem>>, vector<64x32xbf16>
    tpu.vector_store %arg7[%c0_10, %c0_11], %25 {strides = array<i32>} : memref<128x128xbf16, #tpu.memory_space<vmem>>, vector<64x32xbf16>,
    %27 = vector.extract_strided_slice %8 {offsets = [0, 32], sizes = [64, 32], strides = [1, 1]} : vector<128x384xbf16> to vector<64x32xbf16>
    %28 = vector.extract_strided_slice %8 {offsets = [0, 160], sizes = [64, 32], strides = [1, 1]} : vector<128x384xbf16> to vector<64x32xbf16>
    %29 = vector.extract_strided_slice %8 {offsets = [0, 288], sizes = [64, 32], strides = [1, 1]} : vector<128x384xbf16> to vector<64x32xbf16>
    %cst_12 = arith.constant dense<0.000000e+00> : vector<64x64xf32>
    %30 = tpu.matmul %27, %28, %cst_12 {dimension_numbers = #tpu.dot_dimension_numbers<[1], [1], [0], [0], [0, 0, 1, 0], [], []>} : vector<64x32xbf16>, vector<64x32xbf16>, vector<64x64xf32> -> vector<64x64xf32>
    %cst_13 = arith.constant dense<0xFF800000> : vector<64xf32>
    %31 = vector.multi_reduction <maximumf>, %30, %cst_13 [1] : vector<64x64xf32> to vector<64xf32>
    %32 = vector.shape_cast %31 : vector<64xf32> to vector<64x1xf32>
    %33 = vector.broadcast %32 : vector<64x1xf32> to vector<64x64xf32>
    %34 = arith.subf %30, %33 : vector<64x64xf32>
    %35 = math.exp %34 : vector<64x64xf32>
    %cst_14 = arith.constant dense<0.000000e+00> : vector<64xf32>
    %36 = vector.multi_reduction <add>, %35, %cst_14 [1] : vector<64x64xf32> to vector<64xf32>
    %37 = vector.shape_cast %36 : vector<64xf32> to vector<64x1xf32>
    %38 = arith.truncf %35 : vector<64x64xf32> to vector<64x64xbf16>
    %cst_15 = arith.constant dense<0.000000e+00> : vector<64x32xf32>
    %39 = tpu.matmul %38, %29, %cst_15 {dimension_numbers = #tpu.dot_dimension_numbers<[1], [0], [0], [1], [0, 0, 1, 1], [], []>} : vector<64x64xbf16>, vector<64x32xbf16>, vector<64x32xf32> -> vector<64x32xf32>
    %40 = tpu.reciprocal %37 {approx = true} : vector<64x1xf32> -> vector<64x1xf32>
    %41 = vector.broadcast %40 : vector<64x1xf32> to vector<64x32xf32>
    %42 = arith.mulf %39, %41 : vector<64x32xf32>
    %43 = arith.truncf %42 : vector<64x32xf32> to vector<64x32xbf16>
    %c0_16 = arith.constant 0 : index
    %c32 = arith.constant 32 : index
    %44 = vector.load %arg7[%c0_16, %c32] : memref<128x128xbf16, #tpu.memory_space<vmem>>, vector<64x32xbf16>
    tpu.vector_store %arg7[%c0_16, %c32], %43 {strides = array<i32>} : memref<128x128xbf16, #tpu.memory_space<vmem>>, vector<64x32xbf16>,
    %45 = vector.extract_strided_slice %8 {offsets = [0, 64], sizes = [64, 32], strides = [1, 1]} : vector<128x384xbf16> to vector<64x32xbf16>
    %46 = vector.extract_strided_slice %8 {offsets = [0, 192], sizes = [64, 32], strides = [1, 1]} : vector<128x384xbf16> to vector<64x32xbf16>
    %47 = vector.extract_strided_slice %8 {offsets = [0, 320], sizes = [64, 32], strides = [1, 1]} : vector<128x384xbf16> to vector<64x32xbf16>
    %cst_17 = arith.constant dense<0.000000e+00> : vector<64x64xf32>
    %48 = tpu.matmul %45, %46, %cst_17 {dimension_numbers = #tpu.dot_dimension_numbers<[1], [1], [0], [0], [0, 0, 1, 0], [], []>} : vector<64x32xbf16>, vector<64x32xbf16>, vector<64x64xf32> -> vector<64x64xf32>
    %cst_18 = arith.constant dense<0xFF800000> : vector<64xf32>
    %49 = vector.multi_reduction <maximumf>, %48, %cst_18 [1] : vector<64x64xf32> to vector<64xf32>
    %50 = vector.shape_cast %49 : vector<64xf32> to vector<64x1xf32>
    %51 = vector.broadcast %50 : vector<64x1xf32> to vector<64x64xf32>
    %52 = arith.subf %48, %51 : vector<64x64xf32>
    %53 = math.exp %52 : vector<64x64xf32>
    %cst_19 = arith.constant dense<0.000000e+00> : vector<64xf32>
    %54 = vector.multi_reduction <add>, %53, %cst_19 [1] : vector<64x64xf32> to vector<64xf32>
    %55 = vector.shape_cast %54 : vector<64xf32> to vector<64x1xf32>
    %56 = arith.truncf %53 : vector<64x64xf32> to vector<64x64xbf16>
    %cst_20 = arith.constant dense<0.000000e+00> : vector<64x32xf32>
    %57 = tpu.matmul %56, %47, %cst_20 {dimension_numbers = #tpu.dot_dimension_numbers<[1], [0], [0], [1], [0, 0, 1, 1], [], []>} : vector<64x64xbf16>, vector<64x32xbf16>, vector<64x32xf32> -> vector<64x32xf32>
    %58 = tpu.reciprocal %55 {approx = true} : vector<64x1xf32> -> vector<64x1xf32>
    %59 = vector.broadcast %58 : vector<64x1xf32> to vector<64x32xf32>
    %60 = arith.mulf %57, %59 : vector<64x32xf32>
    %61 = arith.truncf %60 : vector<64x32xf32> to vector<64x32xbf16>
    %c0_21 = arith.constant 0 : index
    %c64 = arith.constant 64 : index
    %62 = vector.load %arg7[%c0_21, %c64] : memref<128x128xbf16, #tpu.memory_space<vmem>>, vector<64x32xbf16>
    tpu.vector_store %arg7[%c0_21, %c64], %61 {strides = array<i32>} : memref<128x128xbf16, #tpu.memory_space<vmem>>, vector<64x32xbf16>,
    %63 = vector.extract_strided_slice %8 {offsets = [0, 96], sizes = [64, 32], strides = [1, 1]} : vector<128x384xbf16> to vector<64x32xbf16>
    %64 = vector.extract_strided_slice %8 {offsets = [0, 224], sizes = [64, 32], strides = [1, 1]} : vector<128x384xbf16> to vector<64x32xbf16>
    %65 = vector.extract_strided_slice %8 {offsets = [0, 352], sizes = [64, 32], strides = [1, 1]} : vector<128x384xbf16> to vector<64x32xbf16>
    %cst_22 = arith.constant dense<0.000000e+00> : vector<64x64xf32>
    %66 = tpu.matmul %63, %64, %cst_22 {dimension_numbers = #tpu.dot_dimension_numbers<[1], [1], [0], [0], [0, 0, 1, 0], [], []>} : vector<64x32xbf16>, vector<64x32xbf16>, vector<64x64xf32> -> vector<64x64xf32>
    %cst_23 = arith.constant dense<0xFF800000> : vector<64xf32>
    %67 = vector.multi_reduction <maximumf>, %66, %cst_23 [1] : vector<64x64xf32> to vector<64xf32>
    %68 = vector.shape_cast %67 : vector<64xf32> to vector<64x1xf32>
    %69 = vector.broadcast %68 : vector<64x1xf32> to vector<64x64xf32>
    %70 = arith.subf %66, %69 : vector<64x64xf32>
    %71 = math.exp %70 : vector<64x64xf32>
    %cst_24 = arith.constant dense<0.000000e+00> : vector<64xf32>
    %72 = vector.multi_reduction <add>, %71, %cst_24 [1] : vector<64x64xf32> to vector<64xf32>
    %73 = vector.shape_cast %72 : vector<64xf32> to vector<64x1xf32>
    %74 = arith.truncf %71 : vector<64x64xf32> to vector<64x64xbf16>
    %cst_25 = arith.constant dense<0.000000e+00> : vector<64x32xf32>
    %75 = tpu.matmul %74, %65, %cst_25 {dimension_numbers = #tpu.dot_dimension_numbers<[1], [0], [0], [1], [0, 0, 1, 1], [], []>} : vector<64x64xbf16>, vector<64x32xbf16>, vector<64x32xf32> -> vector<64x32xf32>
    %76 = tpu.reciprocal %73 {approx = true} : vector<64x1xf32> -> vector<64x1xf32>
    %77 = vector.broadcast %76 : vector<64x1xf32> to vector<64x32xf32>
    %78 = arith.mulf %75, %77 : vector<64x32xf32>
    %79 = arith.truncf %78 : vector<64x32xf32> to vector<64x32xbf16>
    %c0_26 = arith.constant 0 : index
    %c96 = arith.constant 96 : index
    %80 = vector.load %arg7[%c0_26, %c96] : memref<128x128xbf16, #tpu.memory_space<vmem>>, vector<64x32xbf16>
    tpu.vector_store %arg7[%c0_26, %c96], %79 {strides = array<i32>} : memref<128x128xbf16, #tpu.memory_space<vmem>>, vector<64x32xbf16>,
    %81 = vector.extract_strided_slice %8 {offsets = [64, 0], sizes = [64, 32], strides = [1, 1]} : vector<128x384xbf16> to vector<64x32xbf16>
    %82 = vector.extract_strided_slice %8 {offsets = [64, 128], sizes = [64, 32], strides = [1, 1]} : vector<128x384xbf16> to vector<64x32xbf16>
    %83 = vector.extract_strided_slice %8 {offsets = [64, 256], sizes = [64, 32], strides = [1, 1]} : vector<128x384xbf16> to vector<64x32xbf16>
    %cst_27 = arith.constant dense<0.000000e+00> : vector<64x64xf32>
    %84 = tpu.matmul %81, %82, %cst_27 {dimension_numbers = #tpu.dot_dimension_numbers<[1], [1], [0], [0], [0, 0, 1, 0], [], []>} : vector<64x32xbf16>, vector<64x32xbf16>, vector<64x64xf32> -> vector<64x64xf32>
    %cst_28 = arith.constant dense<0xFF800000> : vector<64xf32>
    %85 = vector.multi_reduction <maximumf>, %84, %cst_28 [1] : vector<64x64xf32> to vector<64xf32>
    %86 = vector.shape_cast %85 : vector<64xf32> to vector<64x1xf32>
    %87 = vector.broadcast %86 : vector<64x1xf32> to vector<64x64xf32>
    %88 = arith.subf %84, %87 : vector<64x64xf32>
    %89 = math.exp %88 : vector<64x64xf32>
    %cst_29 = arith.constant dense<0.000000e+00> : vector<64xf32>
    %90 = vector.multi_reduction <add>, %89, %cst_29 [1] : vector<64x64xf32> to vector<64xf32>
    %91 = vector.shape_cast %90 : vector<64xf32> to vector<64x1xf32>
    %92 = arith.truncf %89 : vector<64x64xf32> to vector<64x64xbf16>
    %cst_30 = arith.constant dense<0.000000e+00> : vector<64x32xf32>
    %93 = tpu.matmul %92, %83, %cst_30 {dimension_numbers = #tpu.dot_dimension_numbers<[1], [0], [0], [1], [0, 0, 1, 1], [], []>} : vector<64x64xbf16>, vector<64x32xbf16>, vector<64x32xf32> -> vector<64x32xf32>
    %94 = tpu.reciprocal %91 {approx = true} : vector<64x1xf32> -> vector<64x1xf32>
    %95 = vector.broadcast %94 : vector<64x1xf32> to vector<64x32xf32>
    %96 = arith.mulf %93, %95 : vector<64x32xf32>
    %97 = arith.truncf %96 : vector<64x32xf32> to vector<64x32xbf16>
    %c64_31 = arith.constant 64 : index
    %c0_32 = arith.constant 0 : index
    %98 = vector.load %arg7[%c64_31, %c0_32] : memref<128x128xbf16, #tpu.memory_space<vmem>>, vector<64x32xbf16>
    tpu.vector_store %arg7[%c64_31, %c0_32], %97 {strides = array<i32>} : memref<128x128xbf16, #tpu.memory_space<vmem>>, vector<64x32xbf16>,
    %99 = vector.extract_strided_slice %8 {offsets = [64, 32], sizes = [64, 32], strides = [1, 1]} : vector<128x384xbf16> to vector<64x32xbf16>
    %100 = vector.extract_strided_slice %8 {offsets = [64, 160], sizes = [64, 32], strides = [1, 1]} : vector<128x384xbf16> to vector<64x32xbf16>
    %101 = vector.extract_strided_slice %8 {offsets = [64, 288], sizes = [64, 32], strides = [1, 1]} : vector<128x384xbf16> to vector<64x32xbf16>
    %cst_33 = arith.constant dense<0.000000e+00> : vector<64x64xf32>
    %102 = tpu.matmul %99, %100, %cst_33 {dimension_numbers = #tpu.dot_dimension_numbers<[1], [1], [0], [0], [0, 0, 1, 0], [], []>} : vector<64x32xbf16>, vector<64x32xbf16>, vector<64x64xf32> -> vector<64x64xf32>
    %cst_34 = arith.constant dense<0xFF800000> : vector<64xf32>
    %103 = vector.multi_reduction <maximumf>, %102, %cst_34 [1] : vector<64x64xf32> to vector<64xf32>
    %104 = vector.shape_cast %103 : vector<64xf32> to vector<64x1xf32>
    %105 = vector.broadcast %104 : vector<64x1xf32> to vector<64x64xf32>
    %106 = arith.subf %102, %105 : vector<64x64xf32>
    %107 = math.exp %106 : vector<64x64xf32>
    %cst_35 = arith.constant dense<0.000000e+00> : vector<64xf32>
    %108 = vector.multi_reduction <add>, %107, %cst_35 [1] : vector<64x64xf32> to vector<64xf32>
    %109 = vector.shape_cast %108 : vector<64xf32> to vector<64x1xf32>
    %110 = arith.truncf %107 : vector<64x64xf32> to vector<64x64xbf16>
    %cst_36 = arith.constant dense<0.000000e+00> : vector<64x32xf32>
    %111 = tpu.matmul %110, %101, %cst_36 {dimension_numbers = #tpu.dot_dimension_numbers<[1], [0], [0], [1], [0, 0, 1, 1], [], []>} : vector<64x64xbf16>, vector<64x32xbf16>, vector<64x32xf32> -> vector<64x32xf32>
    %112 = tpu.reciprocal %109 {approx = true} : vector<64x1xf32> -> vector<64x1xf32>
    %113 = vector.broadcast %112 : vector<64x1xf32> to vector<64x32xf32>
    %114 = arith.mulf %111, %113 : vector<64x32xf32>
    %115 = arith.truncf %114 : vector<64x32xf32> to vector<64x32xbf16>
    %c64_37 = arith.constant 64 : index
    %c32_38 = arith.constant 32 : index
    %116 = vector.load %arg7[%c64_37, %c32_38] : memref<128x128xbf16, #tpu.memory_space<vmem>>, vector<64x32xbf16>
    tpu.vector_store %arg7[%c64_37, %c32_38], %115 {strides = array<i32>} : memref<128x128xbf16, #tpu.memory_space<vmem>>, vector<64x32xbf16>,
    %117 = vector.extract_strided_slice %8 {offsets = [64, 64], sizes = [64, 32], strides = [1, 1]} : vector<128x384xbf16> to vector<64x32xbf16>
    %118 = vector.extract_strided_slice %8 {offsets = [64, 192], sizes = [64, 32], strides = [1, 1]} : vector<128x384xbf16> to vector<64x32xbf16>
    %119 = vector.extract_strided_slice %8 {offsets = [64, 320], sizes = [64, 32], strides = [1, 1]} : vector<128x384xbf16> to vector<64x32xbf16>
    %cst_39 = arith.constant dense<0.000000e+00> : vector<64x64xf32>
    %120 = tpu.matmul %117, %118, %cst_39 {dimension_numbers = #tpu.dot_dimension_numbers<[1], [1], [0], [0], [0, 0, 1, 0], [], []>} : vector<64x32xbf16>, vector<64x32xbf16>, vector<64x64xf32> -> vector<64x64xf32>
    %cst_40 = arith.constant dense<0xFF800000> : vector<64xf32>
    %121 = vector.multi_reduction <maximumf>, %120, %cst_40 [1] : vector<64x64xf32> to vector<64xf32>
    %122 = vector.shape_cast %121 : vector<64xf32> to vector<64x1xf32>
    %123 = vector.broadcast %122 : vector<64x1xf32> to vector<64x64xf32>
    %124 = arith.subf %120, %123 : vector<64x64xf32>
    %125 = math.exp %124 : vector<64x64xf32>
    %cst_41 = arith.constant dense<0.000000e+00> : vector<64xf32>
    %126 = vector.multi_reduction <add>, %125, %cst_41 [1] : vector<64x64xf32> to vector<64xf32>
    %127 = vector.shape_cast %126 : vector<64xf32> to vector<64x1xf32>
    %128 = arith.truncf %125 : vector<64x64xf32> to vector<64x64xbf16>
    %cst_42 = arith.constant dense<0.000000e+00> : vector<64x32xf32>
    %129 = tpu.matmul %128, %119, %cst_42 {dimension_numbers = #tpu.dot_dimension_numbers<[1], [0], [0], [1], [0, 0, 1, 1], [], []>} : vector<64x64xbf16>, vector<64x32xbf16>, vector<64x32xf32> -> vector<64x32xf32>
    %130 = tpu.reciprocal %127 {approx = true} : vector<64x1xf32> -> vector<64x1xf32>
    %131 = vector.broadcast %130 : vector<64x1xf32> to vector<64x32xf32>
    %132 = arith.mulf %129, %131 : vector<64x32xf32>
    %133 = arith.truncf %132 : vector<64x32xf32> to vector<64x32xbf16>
    %c64_43 = arith.constant 64 : index
    %c64_44 = arith.constant 64 : index
    %134 = vector.load %arg7[%c64_43, %c64_44] : memref<128x128xbf16, #tpu.memory_space<vmem>>, vector<64x32xbf16>
    tpu.vector_store %arg7[%c64_43, %c64_44], %133 {strides = array<i32>} : memref<128x128xbf16, #tpu.memory_space<vmem>>, vector<64x32xbf16>,
    %135 = vector.extract_strided_slice %8 {offsets = [64, 96], sizes = [64, 32], strides = [1, 1]} : vector<128x384xbf16> to vector<64x32xbf16>
    %136 = vector.extract_strided_slice %8 {offsets = [64, 224], sizes = [64, 32], strides = [1, 1]} : vector<128x384xbf16> to vector<64x32xbf16>
    %137 = vector.extract_strided_slice %8 {offsets = [64, 352], sizes = [64, 32], strides = [1, 1]} : vector<128x384xbf16> to vector<64x32xbf16>
    %cst_45 = arith.constant dense<0.000000e+00> : vector<64x64xf32>
    %138 = tpu.matmul %135, %136, %cst_45 {dimension_numbers = #tpu.dot_dimension_numbers<[1], [1], [0], [0], [0, 0, 1, 0], [], []>} : vector<64x32xbf16>, vector<64x32xbf16>, vector<64x64xf32> -> vector<64x64xf32>
    %cst_46 = arith.constant dense<0xFF800000> : vector<64xf32>
    %139 = vector.multi_reduction <maximumf>, %138, %cst_46 [1] : vector<64x64xf32> to vector<64xf32>
    %140 = vector.shape_cast %139 : vector<64xf32> to vector<64x1xf32>
    %141 = vector.broadcast %140 : vector<64x1xf32> to vector<64x64xf32>
    %142 = arith.subf %138, %141 : vector<64x64xf32>
    %143 = math.exp %142 : vector<64x64xf32>
    %cst_47 = arith.constant dense<0.000000e+00> : vector<64xf32>
    %144 = vector.multi_reduction <add>, %143, %cst_47 [1] : vector<64x64xf32> to vector<64xf32>
    %145 = vector.shape_cast %144 : vector<64xf32> to vector<64x1xf32>
    %146 = arith.truncf %143 : vector<64x64xf32> to vector<64x64xbf16>
    %cst_48 = arith.constant dense<0.000000e+00> : vector<64x32xf32>
    %147 = tpu.matmul %146, %137, %cst_48 {dimension_numbers = #tpu.dot_dimension_numbers<[1], [0], [0], [1], [0, 0, 1, 1], [], []>} : vector<64x64xbf16>, vector<64x32xbf16>, vector<64x32xf32> -> vector<64x32xf32>
    %148 = tpu.reciprocal %145 {approx = true} : vector<64x1xf32> -> vector<64x1xf32>
    %149 = vector.broadcast %148 : vector<64x1xf32> to vector<64x32xf32>
    %150 = arith.mulf %147, %149 : vector<64x32xf32>
    %151 = arith.truncf %150 : vector<64x32xf32> to vector<64x32xbf16>
    %c64_49 = arith.constant 64 : index
    %c96_50 = arith.constant 96 : index
    %152 = vector.load %arg7[%c64_49, %c96_50] : memref<128x128xbf16, #tpu.memory_space<vmem>>, vector<64x32xbf16>
    tpu.vector_store %arg7[%c64_49, %c96_50], %151 {strides = array<i32>} : memref<128x128xbf16, #tpu.memory_space<vmem>>, vector<64x32xbf16>,
    %c0_51 = arith.constant 0 : index
    %c0_52 = arith.constant 0 : index
    %153 = vector.load %arg7[%c0_51, %c0_52] : memref<128x128xbf16, #tpu.memory_space<vmem>>, vector<128x128xbf16>
    %c0_53 = arith.constant 0 : index
    %c0_54 = arith.constant 0 : index
    %154 = vector.load %arg4[%c0_53, %c0_54] : memref<128x128xbf16, #tpu.memory_space<vmem>>, vector<128x128xbf16>
    %cst_55 = arith.constant dense<0.000000e+00> : vector<128x128xf32>
    %155 = tpu.matmul %153, %154, %cst_55 {dimension_numbers = #tpu.dot_dimension_numbers<[1], [0], [0], [1], [0, 0, 1, 1], [], []>} : vector<128x128xbf16>, vector<128x128xbf16>, vector<128x128xf32> -> vector<128x128xf32>
    %c0_56 = arith.constant 0 : index
    %c0_57 = arith.constant 0 : index
    %156 = vector.load %arg5[%c0_56, %c0_57] : memref<1x128xf32, #tpu.memory_space<vmem>>, vector<1x128xf32>
    %157 = vector.broadcast %156 : vector<1x128xf32> to vector<128x128xf32>
    %158 = arith.addf %155, %157 : vector<128x128xf32>
    %159 = vector.shape_cast %158 : vector<128x128xf32> to vector<2x64x128xf32>
    %c0_58 = arith.constant 0 : index
    %c0_59 = arith.constant 0 : index
    %c0_60 = arith.constant 0 : index
    %160 = vector.load %arg6[%c0_58, %c0_59, %c0_60] : memref<2x64x128xf32, #tpu.memory_space<vmem>>, vector<2x64x128xf32>
    tpu.vector_store %arg6[%c0_58, %c0_59, %c0_60], %159 {strides = array<i32>} : memref<2x64x128xf32, #tpu.memory_space<vmem>>, vector<2x64x128xf32>,
    return
  }
  func.func @transform_0(%arg0: i32) -> (i32, i32, i32) {
    %c0_i32 = arith.constant 0 : i32
    %c0_i32_0 = arith.constant 0 : i32
    %c0_i32_1 = arith.constant 0 : i32
    return %arg0, %c0_i32, %c0_i32_0 : i32, i32, i32
  }
  func.func @transform_1(%arg0: i32) -> (i32, i32) {
    %c0_i32 = arith.constant 0 : i32
    %c0_i32_0 = arith.constant 0 : i32
    %c0_i32_1 = arith.constant 0 : i32
    return %c0_i32, %c0_i32_0 : i32, i32
  }
  func.func @transform_2(%arg0: i32) -> (i32, i32) {
    %c0_i32 = arith.constant 0 : i32
    %c0_i32_0 = arith.constant 0 : i32
    %c0_i32_1 = arith.constant 0 : i32
    return %c0_i32, %c0_i32_0 : i32, i32
  }
  func.func @transform_3(%arg0: i32) -> (i32, i32) {
    %c0_i32 = arith.constant 0 : i32
    %c0_i32_0 = arith.constant 0 : i32
    %c0_i32_1 = arith.constant 0 : i32
    return %c0_i32, %c0_i32_0 : i32, i32
  }
  func.func @transform_4(%arg0: i32) -> (i32, i32) {
    %c0_i32 = arith.constant 0 : i32
    %c0_i32_0 = arith.constant 0 : i32
    %c0_i32_1 = arith.constant 0 : i32
    return %c0_i32, %c0_i32_0 : i32, i32
  }
  func.func @transform_5(%arg0: i32) -> (i32, i32, i32) {
    %c0_i32 = arith.constant 0 : i32
    %c0_i32_0 = arith.constant 0 : i32
    %c0_i32_1 = arith.constant 0 : i32
    return %arg0, %c0_i32, %c0_i32_0 : i32, i32, i32
  }
}

</mosaic_0001>

<llo_original>
// kernel: tpu_custom_call.1
$region0: #{tpu_custom_call.1}
  #allocation0 [shape = 'u32[]', space=smem, size = 0x4, offset = 0x4, fixed_abs, tag = 'smem constant byte address 0x4 - core index']
  #allocation1 [shape = 'u32[144,128]{1,0:T(1,128)}', space=vmem, size = 0x12000, scoped, tag = 'internal scratch']
  #allocation2 [shape = 'bf16[128,128]{1,0:T(8,128)(2,1)}', space=vmem, size = 0x8000, scoped, tag = 'scratch operand']
  %s0 = inlined_call_operand.hbm [shape: f32[4,64,128], index: 0, kind: input, shape index: {}]
  %s1 = inlined_call_operand.hbm [shape: bf16[128,384], index: 1, kind: input, shape index: {}]
  %s2 = inlined_call_operand.vmem [shape: f32[1,384], index: 2, kind: input, shape index: {}]
  %s3 = inlined_call_operand.hbm [shape: bf16[128,128], index: 3, kind: input, shape index: {}]
  %s4 = inlined_call_operand.vmem [shape: f32[1,128], index: 4, kind: input, shape index: {}]
  %s5 = inlined_call_operand.hbm [shape: f32[4,64,128], index: 5, kind: output, shape index: {}]
  %s6 = sld [smem:[#allocation0]]
  $region65: #{tpu_custom_call.1} parent=0
    _
  %s8 = ssub.s32 1, %s6
  %s9 = scalar_select 0, %s8, %s6
  $region1: #{tpu_custom_call.1} parent=0
    #allocation3 [shape = 'u8[131072]{0}', space=vmem, size = 0x20000, scoped, tag = 'input window, operand 0']
    #allocation4 [shape = 's32[2]{0}', space=sflag, size = 0x8, scoped, tag = 'scoped memory for tpu_custom_call.1']
    #allocation5 [shape = 's32[2]{0}', space=sflag, size = 0x8, scoped, tag = 'scoped memory for tpu_custom_call.1']
    #allocation6 [shape = 'u8[98304]{0}', space=vmem, size = 0x18000, scoped, tag = 'input window, operand 1, single buffered']
    #allocation7 [shape = 's32[1]{0}', space=sflag, size = 0x4, scoped, tag = 'scoped memory for tpu_custom_call.1']
    #allocation8 [shape = 'u8[32768]{0}', space=vmem, size = 0x8000, scoped, tag = 'input window, operand 3, single buffered']
    #allocation9 [shape = 'u8[131072]{0}', space=vmem, size = 0x20000, scoped, tag = 'output window, operand 0']
    %10 = vsyncpa [#allocation4], 0
    %s11 = scalar_lea.sflag [#allocation4], 1
    %12 = vsyncpa %s11, 0
    %13 = vsyncpa [#allocation7], 0
    %14 = vsyncpa [#allocation5], 0
    %s15 = scalar_lea.sflag [#allocation5], 1
    %16 = vsyncpa %s15, 0
    loop: start=0, step=1, limit=4
    $region2: #{tpu_custom_call.1} parent=1 // loop_pre_header
      _
    $region3: #{tpu_custom_call.1} parent=1 // loop_header
      %s18 = sphi 0, %s22
      %p19 = scmp.ge.s32.totalorder %s18, 4
      %s28 = sphi 0, %s30
      %s31 = sphi 0, %s28
      %s32 = sphi 0, %s31
      %s48 = sphi 0, %s32
      %s52 = sphi 0, %s52
      %s54 = sphi 0, %s52
      %s55 = sphi 0, %s54
      %s69 = sphi 0, %s55
      %s73 = sphi 0, %s73
      %s75 = sphi 0, %s73
      %s76 = sphi 0, %s75
      %s90 = sphi 0, %s76
      %s94 = sphi 0, %s94
      %s96 = sphi 0, %s94
      %s97 = sphi 0, %s96
      %s111 = sphi 0, %s97
      %s115 = sphi 0, %s115
      %s117 = sphi 0, %s115
      %s118 = sphi 0, %s117
      %s132 = sphi 0, %s118
      %s138 = sphi 0, %s140
      %s141 = sphi 0, %s138
      %s142 = sphi 0, %s141
      %s158 = sphi 0, %s142
    $region4: #{tpu_custom_call.1} parent=1 // loop_header_branch
      %21 = sbr.rel (%p19) target = $region8
    $region5: #{tpu_custom_call.1} parent=1 // loop_body
      %s23 = ssub.s32 %s18, 1
      %s24 = ssub.s32 %s18, 2
      %s25 = sadd.s32 %s18, 1
      %s26 = ssub.s32 %s18, %s25
      %p27 = scmp.eq.s32.totalorder %s26, 0
      %s29 = sadd.s32 %s28, 1
      %s30 = scalar_select %p27, %s28, %s29
      %p33 = pneg %p27
      %p34 = scmp.eq.s32.totalorder %s18, 1
      %p35 = por %p33, %p34
      %p36 = scmp.ne.s32.totalorder %s28, %s31
      %p37 = scmp.eq.s32.totalorder %s18, 0
      %p38 = por %p36, %p37
      %p39 = scmp.ne.s32.totalorder %s28, %s31
      %p40 = scmp.eq.s32.totalorder %s23, 1
      %p41 = por %p39, %p40
      %p42 = scmp.ne.s32.totalorder %s31, %s32
      %p43 = scmp.eq.s32.totalorder %s23, 0
      %p44 = por %p42, %p43
      %p45 = scmp.ne.s32.totalorder %s31, %s32
      %p46 = scmp.eq.s32.totalorder %s24, 1
      %p47 = por %p45, %p46
      %p49 = scmp.ne.s32.totalorder %s32, %s48
      %p50 = scmp.eq.s32.totalorder %s24, 0
      %p51 = por %p49, %p50
      %s53 = sadd.s32 %s52, 1
      %p56 = scmp.eq.s32.totalorder %s18, 1
      %p57 = scmp.ne.s32.totalorder %s52, %s54
      %p58 = scmp.eq.s32.totalorder %s18, 0
      %p59 = por %p57, %p58
      %p60 = scmp.ne.s32.totalorder %s52, %s54
      %p61 = scmp.eq.s32.totalorder %s23, 1
      %p62 = por %p60, %p61
      %p63 = scmp.ne.s32.totalorder %s54, %s55
      %p64 = scmp.eq.s32.totalorder %s23, 0
      %p65 = por %p63, %p64
      %p66 = scmp.ne.s32.totalorder %s54, %s55
      %p67 = scmp.eq.s32.totalorder %s24, 1
      %p68 = por %p66, %p67
      %p70 = scmp.ne.s32.totalorder %s55, %s69
      %p71 = scmp.eq.s32.totalorder %s24, 0
      %p72 = por %p70, %p71
      %s74 = sadd.s32 %s73, 1
      %p77 = scmp.eq.s32.totalorder %s18, 1
      %p78 = scmp.ne.s32.totalorder %s73, %s75
      %p79 = scmp.eq.s32.totalorder %s18, 0
      %p80 = por %p78, %p79
      %p81 = scmp.ne.s32.totalorder %s73, %s75
      %p82 = scmp.eq.s32.totalorder %s23, 1
      %p83 = por %p81, %p82
      %p84 = scmp.ne.s32.totalorder %s75, %s76
      %p85 = scmp.eq.s32.totalorder %s23, 0
      %p86 = por %p84, %p85
      %p87 = scmp.ne.s32.totalorder %s75, %s76
      %p88 = scmp.eq.s32.totalorder %s24, 1
      %p89 = por %p87, %p88
      %p91 = scmp.ne.s32.totalorder %s76, %s90
      %p92 = scmp.eq.s32.totalorder %s24, 0
      %p93 = por %p91, %p92
      %s95 = sadd.s32 %s94, 1
      %p98 = scmp.eq.s32.totalorder %s18, 1
      %p99 = scmp.ne.s32.totalorder %s94, %s96
      %p100 = scmp.eq.s32.totalorder %s18, 0
      %p101 = por %p99, %p100
      %p102 = scmp.ne.s32.totalorder %s94, %s96
      %p103 = scmp.eq.s32.totalorder %s23, 1
      %p104 = por %p102, %p103
      %p105 = scmp.ne.s32.totalorder %s96, %s97
      %p106 = scmp.eq.s32.totalorder %s23, 0
      %p107 = por %p105, %p106
      %p108 = scmp.ne.s32.totalorder %s96, %s97
      %p109 = scmp.eq.s32.totalorder %s24, 1
      %p110 = por %p108, %p109
      %p112 = scmp.ne.s32.totalorder %s97, %s111
      %p113 = scmp.eq.s32.totalorder %s24, 0
      %p114 = por %p112, %p113
      %s116 = sadd.s32 %s115, 1
      %p119 = scmp.eq.s32.totalorder %s18, 1
      %p120 = scmp.ne.s32.totalorder %s115, %s117
      %p121 = scmp.eq.s32.totalorder %s18, 0
      %p122 = por %p120, %p121
      %p123 = scmp.ne.s32.totalorder %s115, %s117
      %p124 = scmp.eq.s32.totalorder %s23, 1
      %p125 = por %p123, %p124
      %p126 = scmp.ne.s32.totalorder %s117, %s118
      %p127 = scmp.eq.s32.totalorder %s23, 0
      %p128 = por %p126, %p127
      %p129 = scmp.ne.s32.totalorder %s117, %s118
      %p130 = scmp.eq.s32.totalorder %s24, 1
      %p131 = por %p129, %p130
      %p133 = scmp.ne.s32.totalorder %s118, %s132
      %p134 = scmp.eq.s32.totalorder %s24, 0
      %p135 = por %p133, %p134
      %s136 = ssub.s32 %s18, %s25
      %p137 = scmp.eq.s32.totalorder %s136, 0
      %s139 = sadd.s32 %s138, 1
      %s140 = scalar_select %p137, %s138, %s139
      %p143 = pneg %p137
      %p144 = scmp.eq.s32.totalorder %s18, 1
      %p145 = por %p143, %p144
      %p146 = scmp.ne.s32.totalorder %s138, %s141
      %p147 = scmp.eq.s32.totalorder %s18, 0
      %p148 = por %p146, %p147
      %p149 = scmp.ne.s32.totalorder %s138, %s141
      %p150 = scmp.eq.s32.totalorder %s23, 1
      %p151 = por %p149, %p150
      %p152 = scmp.ne.s32.totalorder %s141, %s142
      %p153 = scmp.eq.s32.totalorder %s23, 0
      %p154 = por %p152, %p153
      %p155 = scmp.ne.s32.totalorder %s141, %s142
      %p156 = scmp.eq.s32.totalorder %s24, 1
      %p157 = por %p155, %p156
      %p159 = scmp.ne.s32.totalorder %s142, %s158
      %p160 = scmp.eq.s32.totalorder %s24, 0
      %p161 = por %p159, %p160
      %p162 = scmp.le.s32.totalorder 1, %s18
      %p163 = scmp.lt.s32.totalorder %s18, 3
      %p164 = pnand %p162, %p163
      %p165 = pneg %p164
      // Predicated region
      $region9: #{tpu_custom_call.1} parent=5 // pred_check
        _
      $region10: #{tpu_custom_call.1} parent=5 // pred_check_branch
        %167 = sbr.rel (%p164) target = $region12
      $region11: #{tpu_custom_call.1} parent=5 // pred_region
        %s168 = ssub.s32 %s18, 1
        // Predicated region
        $region13: #{tpu_custom_call.1} parent=11 // pred_check
          %p169 = pneg %p65
        $region14: #{tpu_custom_call.1} parent=11 // pred_check_branch
          %171 = sbr.rel (%p169) target = $region16
        $region15: #{tpu_custom_call.1} parent=11 // pred_region
          %s173 = ssub.s32 3072, 3072
          %174 = vsyncadd [#allocation7], %s173
          %s175 = sshll.u32 [#allocation6], 4
          %s176 = int_to_ptr.vmem [resolvable:$true] %s175
          %181 = dma.hbm_to_vmem [thread:$0]  %s1, 3072, %s176, [#allocation7], 192, 192, 12
        $region16: #{tpu_custom_call.1} parent=11 // pred_fallthru
          _
        // Predicated region
        $region17: #{tpu_custom_call.1} parent=11 // pred_check
          %p182 = pneg %p86
        $region18: #{tpu_custom_call.1} parent=11 // pred_check_branch
          %184 = sbr.rel (%p182) target = $region20
        $region19: #{tpu_custom_call.1} parent=11 // pred_region
          _
        $region20: #{tpu_custom_call.1} parent=11 // pred_fallthru
          _
        // Predicated region
        $region21: #{tpu_custom_call.1} parent=11 // pred_check
          %p185 = pneg %p107
        $region22: #{tpu_custom_call.1} parent=11 // pred_check_branch
          %187 = sbr.rel (%p185) target = $region24
        $region23: #{tpu_custom_call.1} parent=11 // pred_region
          %s189 = ssub.s32 1024, 1024
          %190 = vsyncadd [#allocation7], %s189
          %s191 = sshll.u32 [#allocation8], 4
          %s192 = int_to_ptr.vmem [resolvable:$true] %s191
          %197 = dma.hbm_to_vmem [thread:$0]  %s3, 1024, %s192, [#allocation7], 64, 64, 4
        $region24: #{tpu_custom_call.1} parent=11 // pred_fallthru
          _
        // Predicated region
        $region25: #{tpu_custom_call.1} parent=11 // pred_check
          %p198 = pneg %p128
        $region26: #{tpu_custom_call.1} parent=11 // pred_check_branch
          %200 = sbr.rel (%p198) target = $region28
        $region27: #{tpu_custom_call.1} parent=11 // pred_region
          _
        $region28: #{tpu_custom_call.1} parent=11 // pred_fallthru
          _
      $region12: #{tpu_custom_call.1} parent=5 // pred_fallthru
        _
      %p201 = scmp.lt.s32.totalorder %s18, 2
      // Predicated region
      $region29: #{tpu_custom_call.1} parent=5 // pred_check
        %p202 = pneg %p201
      $region30: #{tpu_custom_call.1} parent=5 // pred_check_branch
        %204 = sbr.rel (%p202) target = $region32
      $region31: #{tpu_custom_call.1} parent=5 // pred_region
        // Predicated region
        $region33: #{tpu_custom_call.1} parent=31 // pred_check
          %p205 = pneg %p38
        $region34: #{tpu_custom_call.1} parent=31 // pred_check_branch
          %207 = sbr.rel (%p205) target = $region36
        $region35: #{tpu_custom_call.1} parent=31 // pred_region
          %s208 = sand.u32 %s28, 1
          %s209 = scalar_lea.sflag [#allocation4], %s208
          %s210 = sand.u32 %s28, 1
          %s211 = smul.addr %s210, 128
          %s212 = scalar_lea.vmem [#allocation3], %s211
          %s213 = smul.u32 2, %s18
          %s215 = ssub.s32 2048, 2048
          %216 = vsyncadd %s209, %s215
          %s217 = smul.addr %s213, 8
          %s218 = smul.addr %s217, 128
          %s219 = scalar_lea.hbm %s0, %s218
          %s220 = sshll.u32 %s212, 4
          %s221 = int_to_ptr.vmem [resolvable:$true] %s220
          %226 = dma.hbm_to_vmem [thread:$0]  %s219, 2048, %s221, %s209, 128, 128, 8
        $region36: #{tpu_custom_call.1} parent=31 // pred_fallthru
          _
      $region32: #{tpu_custom_call.1} parent=5 // pred_fallthru
        _
      %p227 = scmp.le.s32.totalorder 1, %s18
      %p228 = scmp.lt.s32.totalorder %s18, 3
      %p229 = pnand %p227, %p228
      %p230 = pneg %p229
      // Predicated region
      $region37: #{tpu_custom_call.1} parent=5 // pred_check
        _
      $region38: #{tpu_custom_call.1} parent=5 // pred_check_branch
        %232 = sbr.rel (%p229) target = $region40
      $region39: #{tpu_custom_call.1} parent=5 // pred_region
        %s233 = ssub.s32 %s18, 1
        %s234 = sand.u32 %s31, 1
        %s235 = scalar_lea.sflag [#allocation4], %s234
        %s236 = sand.u32 %s31, 1
        %s237 = smul.addr %s236, 128
        %s238 = scalar_lea.vmem [#allocation3], %s237
        // Predicated region
        $region41: #{tpu_custom_call.1} parent=39 // pred_check
          %p239 = pneg %p44
        $region42: #{tpu_custom_call.1} parent=39 // pred_check_branch
          %241 = sbr.rel (%p239) target = $region44
        $region43: #{tpu_custom_call.1} parent=39 // pred_region
          %242 = dma.done %s235, 2048
        $region44: #{tpu_custom_call.1} parent=39 // pred_fallthru
          _
        // Predicated region
        $region45: #{tpu_custom_call.1} parent=39 // pred_check
          %p243 = pneg %p65
        $region46: #{tpu_custom_call.1} parent=39 // pred_check_branch
          %245 = sbr.rel (%p243) target = $region48
        $region47: #{tpu_custom_call.1} parent=39 // pred_region
          %246 = dma.done [#allocation7], 3072
        $region48: #{tpu_custom_call.1} parent=39 // pred_fallthru
          _
        // Predicated region
        $region49: #{tpu_custom_call.1} parent=39 // pred_check
          %p247 = pneg %p107
        $region50: #{tpu_custom_call.1} parent=39 // pred_check_branch
          %249 = sbr.rel (%p247) target = $region52
        $region51: #{tpu_custom_call.1} parent=39 // pred_region
          %250 = dma.done [#allocation7], 1024
        $region52: #{tpu_custom_call.1} parent=39 // pred_fallthru
          _
        %s251 = sand.u32 %s31, 1
        %s252 = scalar_lea.sflag [#allocation4], %s251
        %s253 = sand.u32 %s31, 1
        %s254 = smul.addr %s253, 128
        %s255 = scalar_lea.vmem [#allocation3], %s254
        %p256 = pneg %p44
        %p257 = pneg %p41
        %p258 = pneg %p65
        %p259 = pneg %p62
        %p260 = pneg %p86
        %p261 = pneg %p83
        %p262 = pneg %p107
        %p263 = pneg %p104
        %p264 = pneg %p128
        %p265 = pneg %p125
        %p266 = pneg %p154
        %p267 = pneg %p151
        %s268 = sand.u32 %s141, 1
        %s269 = scalar_lea.sflag [#allocation5], %s268
        %s270 = sand.u32 %s141, 1
        %s271 = smul.addr %s270, 128
        %s272 = scalar_lea.vmem [#allocation9], %s271
        %s273 = smul.u32 2, %s23
        %s274 = smul.u32 2, %s23
        %v276 = vld [vmem:[%s238] sm:$0xff]
        %v277 = vld [vmem:[%s238 + $0x8] sm:$0xff]
        %v278 = vld [vmem:[%s238 + $0x10] sm:$0xff]
        %v279 = vld [vmem:[%s238 + $0x18] sm:$0xff]
        %v280 = vld [vmem:[%s238 + $0x20] sm:$0xff]
        %v281 = vld [vmem:[%s238 + $0x28] sm:$0xff]
        %v282 = vld [vmem:[%s238 + $0x30] sm:$0xff]
        %v283 = vld [vmem:[%s238 + $0x38] sm:$0xff]
        %v284 = vld [vmem:[%s238 + $0x40] sm:$0xff]
        %v285 = vld [vmem:[%s238 + $0x48] sm:$0xff]
        %v286 = vld [vmem:[%s238 + $0x50] sm:$0xff]
        %v287 = vld [vmem:[%s238 + $0x58] sm:$0xff]
        %v288 = vld [vmem:[%s238 + $0x60] sm:$0xff]
        %v289 = vld [vmem:[%s238 + $0x68] sm:$0xff]
        %v290 = vld [vmem:[%s238 + $0x70] sm:$0xff]
        %v291 = vld [vmem:[%s238 + $0x78] sm:$0xff]
        %v292 = vpack.c.bf16 %v277, %v276
        %v293 = vpack.c.bf16 %v279, %v278
        %v294 = vpack.c.bf16 %v281, %v280
        %v295 = vpack.c.bf16 %v283, %v282
        %v296 = vpack.c.bf16 %v285, %v284
        %v297 = vpack.c.bf16 %v287, %v286
        %v298 = vpack.c.bf16 %v289, %v288
        %v299 = vpack.c.bf16 %v291, %v290
        %v300 = vld [vmem:[#allocation6] sm:$0xff]
        %v301 = vld [vmem:[#allocation6 + $0x8] sm:$0xf]
        %v302 = vld [vmem:[#allocation6 + $0xc] sm:$0xff]
        %v303 = vld [vmem:[#allocation6 + $0x14] sm:$0xf]
        %v304 = vld [vmem:[#allocation6 + $0x18] sm:$0xff]
        %v305 = vld [vmem:[#allocation6 + $0x20] sm:$0xf]
        %v306 = vld [vmem:[#allocation6 + $0x24] sm:$0xff]
        %v307 = vld [vmem:[#allocation6 + $0x2c] sm:$0xf]
        %v308 = vld [vmem:[#allocation6 + $0x30] sm:$0xff]
        %v309 = vld [vmem:[#allocation6 + $0x38] sm:$0xf]
        %v310 = vld [vmem:[#allocation6 + $0x3c] sm:$0xff]
        %v311 = vld [vmem:[#allocation6 + $0x44] sm:$0xf]
        %v312 = vld [vmem:[#allocation6 + $0x48] sm:$0xff]
        %v313 = vld [vmem:[#allocation6 + $0x50] sm:$0xf]
        %v314 = vld [vmem:[#allocation6 + $0x54] sm:$0xff]
        %v315 = vld [vmem:[#allocation6 + $0x5c] sm:$0xf]
        %v316 = vld [vmem:[#allocation6 + $0x60] sm:$0xff]
        %v317 = vld [vmem:[#allocation6 + $0x68] sm:$0xf]
        %v318 = vld [vmem:[#allocation6 + $0x6c] sm:$0xff]
        %v319 = vld [vmem:[#allocation6 + $0x74] sm:$0xf]
        %v320 = vld [vmem:[#allocation6 + $0x78] sm:$0xff]
        %v321 = vld [vmem:[#allocation6 + $0x80] sm:$0xf]
        %v322 = vld [vmem:[#allocation6 + $0x84] sm:$0xff]
        %v323 = vld [vmem:[#allocation6 + $0x8c] sm:$0xf]
        %v324 = vld [vmem:[#allocation6 + $0x90] sm:$0xff]
        %v325 = vld [vmem:[#allocation6 + $0x98] sm:$0xf]
        %v326 = vld [vmem:[#allocation6 + $0x9c] sm:$0xff]
        %v327 = vld [vmem:[#allocation6 + $0xa4] sm:$0xf]
        %v328 = vld [vmem:[#allocation6 + $0xa8] sm:$0xff]
        %v329 = vld [vmem:[#allocation6 + $0xb0] sm:$0xf]
        %v330 = vld [vmem:[#allocation6 + $0xb4] sm:$0xff]
        %v331 = vld [vmem:[#allocation6 + $0xbc] sm:$0xf]
        %v332 = vld [vmem:[%s2] sm:$0x7]
        %v334 = vlaneseq
        %v335 = vshrl.u32 %v334, 7
        %v336 = vsub.s32 0, %v335
        %v337 = vrot.slane %v332, %v336
        %v338 = vlaneseq
        %v339 = vshrl.u32 %v338, 7
        %v340 = vsub.s32 1, %v339
        %v341 = vrot.slane %v332, %v340
        %v342 = vlaneseq
        %v343 = vshrl.u32 %v342, 7
        %v344 = vsub.s32 2, %v343
        %v345 = vrot.slane %v332, %v344
        %v381 = vunpack.c.l.b16 %v300
        %v382 = vunpack.c.h.b16 %v300
        %v383 = vunpack.c.l.b16 %v301
        %v384 = vunpack.c.l.b16 %v302
        %v385 = vunpack.c.h.b16 %v302
        %v386 = vunpack.c.l.b16 %v303
        %v387 = vunpack.c.l.b16 %v304
        %v388 = vunpack.c.h.b16 %v304
        %v389 = vunpack.c.l.b16 %v305
        %v390 = vunpack.c.l.b16 %v306
        %v391 = vunpack.c.h.b16 %v306
        %v392 = vunpack.c.l.b16 %v307
        %v393 = vunpack.c.l.b16 %v308
        %v394 = vunpack.c.h.b16 %v308
        %v395 = vunpack.c.l.b16 %v309
        %v396 = vunpack.c.l.b16 %v310
        %v397 = vunpack.c.h.b16 %v310
        %v398 = vunpack.c.l.b16 %v311
        %v399 = vunpack.c.l.b16 %v312
        %v400 = vunpack.c.h.b16 %v312
        %v401 = vunpack.c.l.b16 %v313
        %v402 = vunpack.c.l.b16 %v314
        %v403 = vunpack.c.h.b16 %v314
        %v404 = vunpack.c.l.b16 %v315
        %v405 = vunpack.c.l.b16 %v316
        %v406 = vunpack.c.h.b16 %v316
        %v407 = vunpack.c.l.b16 %v317
        %v408 = vunpack.c.l.b16 %v318
        %v409 = vunpack.c.h.b16 %v318
        %v410 = vunpack.c.l.b16 %v319
        %v411 = vunpack.c.l.b16 %v320
        %v412 = vunpack.c.h.b16 %v320
        %v413 = vunpack.c.l.b16 %v321
        %v414 = vunpack.c.l.b16 %v322
        %v415 = vunpack.c.h.b16 %v322
        %v416 = vunpack.c.l.b16 %v323
        %v417 = vunpack.c.l.b16 %v324
        %v418 = vunpack.c.h.b16 %v324
        %v419 = vunpack.c.l.b16 %v325
        %v420 = vunpack.c.l.b16 %v326
        %v421 = vunpack.c.h.b16 %v326
        %v422 = vunpack.c.l.b16 %v327
        %v423 = vunpack.c.l.b16 %v328
        %v424 = vunpack.c.h.b16 %v328
        %v425 = vunpack.c.l.b16 %v329
        %v426 = vunpack.c.l.b16 %v330
        %v427 = vunpack.c.h.b16 %v330
        %v428 = vunpack.c.l.b16 %v331
        %v429 = vpack.c.b16 %v384, %v381
        %v430 = vpack.c.b16 %v385, %v382
        %v431 = vpack.c.b16 %v386, %v383
        %v432 = vpack.c.b16 %v390, %v387
        %v433 = vpack.c.b16 %v391, %v388
        %v434 = vpack.c.b16 %v392, %v389
        %v435 = vpack.c.b16 %v396, %v393
        %v436 = vpack.c.b16 %v397, %v394
        %v437 = vpack.c.b16 %v398, %v395
        %v438 = vpack.c.b16 %v402, %v399
        %v439 = vpack.c.b16 %v403, %v400
        %v440 = vpack.c.b16 %v404, %v401
        %v441 = vpack.c.b16 %v408, %v405
        %v442 = vpack.c.b16 %v409, %v406
        %v443 = vpack.c.b16 %v410, %v407
        %v444 = vpack.c.b16 %v414, %v411
        %v445 = vpack.c.b16 %v415, %v412
        %v446 = vpack.c.b16 %v416, %v413
        %v447 = vpack.c.b16 %v420, %v417
        %v448 = vpack.c.b16 %v421, %v418
        %v449 = vpack.c.b16 %v422, %v419
        %v450 = vpack.c.b16 %v426, %v423
        %v451 = vpack.c.b16 %v427, %v424
        %v452 = vpack.c.b16 %v428, %v425
        %477 = vmatprep.subr.bf16.mxu0 %v451
        %478 = vmatpush1.bf16.msra.mxu0 %v450
        %479 = vmatprep.subr.bf16.mxu0 %v448
        %480 = vmatpush1.bf16.msra.mxu0 %v447
        %481 = vmatprep.subr.bf16.mxu0 %v445
        %482 = vmatpush1.bf16.msra.mxu0 %v444
        %483 = vmatprep.subr.bf16.mxu0 %v442
        %484 = vmatpush1.bf16.msra.mxu0 %v441
        %485 = vmatprep.subr.bf16.mxu0 %v439
        %486 = vmatpush1.bf16.msra.mxu0 %v438
        %487 = vmatprep.subr.bf16.mxu0 %v436
        %488 = vmatpush1.bf16.msra.mxu0 %v435
        %489 = vmatprep.subr.bf16.mxu0 %v433
        %490 = vmatpush1.bf16.msra.mxu0 %v432
        %491 = vmatprep.subr.bf16.mxu0 %v430
        %492 = vmatpush1.bf16.msra.mxu0 %v429
        %493 = vmatprep.subr.bf16.mxu0 0
        %494 = vmatpush2.bf16.msra.mxu0 0
        %495 = vmatprep.subr.bf16.mxu0 0
        %496 = vmatpush2.bf16.msra.mxu0 0
        %497 = vmatprep.subr.bf16.mxu0 0
        %498 = vmatpush2.bf16.msra.mxu0 0
        %499 = vmatprep.subr.bf16.mxu0 0
        %500 = vmatpush2.bf16.msra.mxu0 0
        %501 = vmatprep.subr.bf16.mxu0 0
        %502 = vmatpush2.bf16.msra.mxu0 0
        %503 = vmatprep.subr.bf16.mxu0 0
        %504 = vmatpush2.bf16.msra.mxu0 0
        %505 = vmatprep.subr.bf16.mxu0 0
        %506 = vmatpush2.bf16.msra.mxu0 0
        %507 = vmatprep.subr.bf16.mxu0 0
        %508 = vmatpush2.bf16.msra.mxu0 0
        %509 = vmatprep.mubr.bf16.mxu0 0
        %510 = vmatmul.mubr.bf16.gmra.mxu0 %v292
        %v511 = vpop.f32.mrf.mxu0
        %v512 = vadd.f32 %v337, %v511
        %v513 = vpop.f32.mrf.mxu0
        %v514 = vadd.f32 %v341, %v513
        %v515 = vpop.f32.mrf.mxu0
        %v516 = vadd.f32 %v337, %v515
        %v517 = vpop.f32.mrf.mxu0
        %v518 = vadd.f32 %v341, %v517
        %519 = vmatprep.mubr.bf16.mxu0 0
        %520 = vmatmul.mubr.bf16.gmra.mxu0 %v293
        %v521 = vpop.f32.mrf.mxu0
        %v522 = vadd.f32 %v337, %v521
        %v523 = vpop.f32.mrf.mxu0
        %v524 = vadd.f32 %v341, %v523
        %v525 = vpop.f32.mrf.mxu0
        %v526 = vadd.f32 %v337, %v525
        %v527 = vpop.f32.mrf.mxu0
        %v528 = vadd.f32 %v341, %v527
        %529 = vmatprep.mubr.bf16.mxu0 0
        %530 = vmatmul.mubr.bf16.gmra.mxu0 %v294
        %v531 = vpop.f32.mrf.mxu0
        %v532 = vadd.f32 %v337, %v531
        %v533 = vpop.f32.mrf.mxu0
        %v534 = vadd.f32 %v341, %v533
        %v535 = vpop.f32.mrf.mxu0
        %v536 = vadd.f32 %v337, %v535
        %v537 = vpop.f32.mrf.mxu0
        %v538 = vadd.f32 %v341, %v537
        %539 = vmatprep.mubr.bf16.mxu0 0
        %540 = vmatmul.mubr.bf16.gmra.mxu0 %v295
        %v541 = vpop.f32.mrf.mxu0
        %v542 = vadd.f32 %v337, %v541
        %v543 = vpop.f32.mrf.mxu0
        %v544 = vadd.f32 %v341, %v543
        %v545 = vpop.f32.mrf.mxu0
        %v546 = vadd.f32 %v337, %v545
        %v547 = vpop.f32.mrf.mxu0
        %v548 = vadd.f32 %v341, %v547
        %549 = vmatprep.mubr.bf16.mxu0 0
        %550 = vmatmul.mubr.bf16.gmra.mxu0 %v296
        %v551 = vpop.f32.mrf.mxu0
        %v552 = vadd.f32 %v337, %v551
        %v553 = vpop.f32.mrf.mxu0
        %v554 = vadd.f32 %v341, %v553
        %v555 = vpop.f32.mrf.mxu0
        %v556 = vadd.f32 %v337, %v555
        %v557 = vpop.f32.mrf.mxu0
        %v558 = vadd.f32 %v341, %v557
        %559 = vmatprep.mubr.bf16.mxu0 0
        %560 = vmatmul.mubr.bf16.gmra.mxu0 %v297
        %v561 = vpop.f32.mrf.mxu0
        %v562 = vadd.f32 %v337, %v561
        %v563 = vpop.f32.mrf.mxu0
        %v564 = vadd.f32 %v341, %v563
        %v565 = vpop.f32.mrf.mxu0
        %v566 = vadd.f32 %v337, %v565
        %v567 = vpop.f32.mrf.mxu0
        %v568 = vadd.f32 %v341, %v567
        %569 = vmatprep.mubr.bf16.mxu0 0
        %570 = vmatmul.mubr.bf16.gmra.mxu0 %v298
        %v571 = vpop.f32.mrf.mxu0
        %v572 = vadd.f32 %v337, %v571
        %v573 = vpop.f32.mrf.mxu0
        %v574 = vadd.f32 %v341, %v573
        %v575 = vpop.f32.mrf.mxu0
        %v576 = vadd.f32 %v337, %v575
        %v577 = vpop.f32.mrf.mxu0
        %v578 = vadd.f32 %v341, %v577
        %579 = vmatprep.mubr.bf16.mxu0 0
        %580 = vmatmul.mubr.bf16.gmra.mxu0 %v299
        %v581 = vpop.f32.mrf.mxu0
        %v582 = vadd.f32 %v337, %v581
        %v583 = vpop.f32.mrf.mxu0
        %v584 = vadd.f32 %v341, %v583
        %v585 = vpop.f32.mrf.mxu0
        %v586 = vadd.f32 %v337, %v585
        %v587 = vpop.f32.mrf.mxu0
        %v588 = vadd.f32 %v341, %v587
        %589 = vdwg.mxu0
        %590 = vmatprep.subr.bf16.mxu0 0
        %591 = vmatpush1.bf16.msra.mxu0 %v452
        %592 = vmatprep.subr.bf16.mxu0 0
        %593 = vmatpush1.bf16.msra.mxu0 %v449
        %594 = vmatprep.subr.bf16.mxu0 0
        %595 = vmatpush1.bf16.msra.mxu0 %v446
        %596 = vmatprep.subr.bf16.mxu0 0
        %597 = vmatpush1.bf16.msra.mxu0 %v443
        %598 = vmatprep.subr.bf16.mxu0 0
        %599 = vmatpush1.bf16.msra.mxu0 %v440
        %600 = vmatprep.subr.bf16.mxu0 0
        %601 = vmatpush1.bf16.msra.mxu0 %v437
        %602 = vmatprep.subr.bf16.mxu0 0
        %603 = vmatpush1.bf16.msra.mxu0 %v434
        %604 = vmatprep.subr.bf16.mxu0 0
        %605 = vmatpush1.bf16.msra.mxu0 %v431
        %606 = vmatprep.subr.bf16.mxu0 0
        %607 = vmatpush2.bf16.msra.mxu0 0
        %608 = vmatprep.subr.bf16.mxu0 0
        %609 = vmatpush2.bf16.msra.mxu0 0
        %610 = vmatprep.subr.bf16.mxu0 0
        %611 = vmatpush2.bf16.msra.mxu0 0
        %612 = vmatprep.subr.bf16.mxu0 0
        %613 = vmatpush2.bf16.msra.mxu0 0
        %614 = vmatprep.subr.bf16.mxu0 0
        %615 = vmatpush2.bf16.msra.mxu0 0
        %616 = vmatprep.subr.bf16.mxu0 0
        %617 = vmatpush2.bf16.msra.mxu0 0
        %618 = vmatprep.subr.bf16.mxu0 0
        %619 = vmatpush2.bf16.msra.mxu0 0
        %620 = vmatprep.subr.bf16.mxu0 0
        %621 = vmatpush2.bf16.msra.mxu0 0
        %622 = vmatprep.mubr.bf16.mxu0 0
        %623 = vmatmul.mubr.bf16.gmra.mxu0 %v292
        %v624 = vpop.f32.mrf.mxu0
        %v625 = vadd.f32 %v345, %v624
        %v626 = vpop.f32.mrf.mxu0
        %v627 = vpop.f32.mrf.mxu0
        %v628 = vadd.f32 %v345, %v627
        %v629 = vpop.f32.mrf.mxu0
        %630 = vmatprep.mubr.bf16.mxu0 0
        %631 = vmatmul.mubr.bf16.gmra.mxu0 %v293
        %v632 = vpop.f32.mrf.mxu0
        %v633 = vadd.f32 %v345, %v632
        %v634 = vpop.f32.mrf.mxu0
        %v635 = vpop.f32.mrf.mxu0
        %v636 = vadd.f32 %v345, %v635
        %v637 = vpop.f32.mrf.mxu0
        %638 = vmatprep.mubr.bf16.mxu0 0
        %639 = vmatmul.mubr.bf16.gmra.mxu0 %v294
        %v640 = vpop.f32.mrf.mxu0
        %v641 = vadd.f32 %v345, %v640
        %v642 = vpop.f32.mrf.mxu0
        %v643 = vpop.f32.mrf.mxu0
        %v644 = vadd.f32 %v345, %v643
        %v645 = vpop.f32.mrf.mxu0
        %646 = vmatprep.mubr.bf16.mxu0 0
        %647 = vmatmul.mubr.bf16.gmra.mxu0 %v295
        %v648 = vpop.f32.mrf.mxu0
        %v649 = vadd.f32 %v345, %v648
        %v650 = vpop.f32.mrf.mxu0
        %v651 = vpop.f32.mrf.mxu0
        %v652 = vadd.f32 %v345, %v651
        %v653 = vpop.f32.mrf.mxu0
        %654 = vmatprep.mubr.bf16.mxu0 0
        %655 = vmatmul.mubr.bf16.gmra.mxu0 %v296
        %v656 = vpop.f32.mrf.mxu0
        %v657 = vadd.f32 %v345, %v656
        %v658 = vpop.f32.mrf.mxu0
        %v659 = vpop.f32.mrf.mxu0
        %v660 = vadd.f32 %v345, %v659
        %v661 = vpop.f32.mrf.mxu0
        %662 = vmatprep.mubr.bf16.mxu0 0
        %663 = vmatmul.mubr.bf16.gmra.mxu0 %v297
        %v664 = vpop.f32.mrf.mxu0
        %v665 = vadd.f32 %v345, %v664
        %v666 = vpop.f32.mrf.mxu0
        %v667 = vpop.f32.mrf.mxu0
        %v668 = vadd.f32 %v345, %v667
        %v669 = vpop.f32.mrf.mxu0
        %670 = vmatprep.mubr.bf16.mxu0 0
        %671 = vmatmul.mubr.bf16.gmra.mxu0 %v298
        %v672 = vpop.f32.mrf.mxu0
        %v673 = vadd.f32 %v345, %v672
        %v674 = vpop.f32.mrf.mxu0
        %v675 = vpop.f32.mrf.mxu0
        %v676 = vadd.f32 %v345, %v675
        %v677 = vpop.f32.mrf.mxu0
        %678 = vmatprep.mubr.bf16.mxu0 0
        %679 = vmatmul.mubr.bf16.gmra.mxu0 %v299
        %v680 = vpop.f32.mrf.mxu0
        %v681 = vadd.f32 %v345, %v680
        %v682 = vpop.f32.mrf.mxu0
        %v683 = vpop.f32.mrf.mxu0
        %v684 = vadd.f32 %v345, %v683
        %v685 = vpop.f32.mrf.mxu0
        %686 = vdwg.mxu0
        %v687 = vpack.c.bf16 %v516, %v512
        %v688 = vpack.c.bf16 %v518, %v514
        %v689 = vpack.c.bf16 %v628, %v625
        %v690 = vpack.c.bf16 %v526, %v522
        %v691 = vpack.c.bf16 %v528, %v524
        %v692 = vpack.c.bf16 %v636, %v633
        %v693 = vpack.c.bf16 %v536, %v532
        %v694 = vpack.c.bf16 %v538, %v534
        %v695 = vpack.c.bf16 %v644, %v641
        %v696 = vpack.c.bf16 %v546, %v542
        %v697 = vpack.c.bf16 %v548, %v544
        %v698 = vpack.c.bf16 %v652, %v649
        %v699 = vpack.c.bf16 %v556, %v552
        %v700 = vpack.c.bf16 %v558, %v554
        %v701 = vpack.c.bf16 %v660, %v657
        %v702 = vpack.c.bf16 %v566, %v562
        %v703 = vpack.c.bf16 %v568, %v564
        %v704 = vpack.c.bf16 %v668, %v665
        %v705 = vpack.c.bf16 %v576, %v572
        %v706 = vpack.c.bf16 %v578, %v574
        %v707 = vpack.c.bf16 %v676, %v673
        %v708 = vpack.c.bf16 %v586, %v582
        %v709 = vpack.c.bf16 %v588, %v584
        %v710 = vpack.c.bf16 %v684, %v681
        %vm711 = vcmask 261120
        %v713 = vsel %vm711, %v687, 0
        %v716 = vsel %vm711, %v690, 0
        %v719 = vsel %vm711, %v693, 0
        %v722 = vsel %vm711, %v696, 0
        %v725 = vsel %vm711, %v688, 0
        %v728 = vsel %vm711, %v691, 0
        %v731 = vsel %vm711, %v694, 0
        %v734 = vsel %vm711, %v697, 0
        %736 = vmatprep.subr.bf16.mxu0 0
        %737 = vmatpush1.bf16.xpose.msra.mxu0 0
        %738 = vmatprep.subr.bf16.mxu0 0
        %739 = vmatpush1.bf16.xpose.msra.mxu0 0
        %740 = vmatprep.subr.bf16.mxu0 0
        %741 = vmatpush1.bf16.xpose.msra.mxu0 0
        %742 = vmatprep.subr.bf16.mxu0 0
        %743 = vmatpush1.bf16.xpose.msra.mxu0 0
        %744 = vmatprep.subr.bf16.mxu0 0
        %745 = vmatpush1.bf16.xpose.msra.mxu0 %v734
        %746 = vmatprep.subr.bf16.mxu0 0
        %747 = vmatpush1.bf16.xpose.msra.mxu0 %v731
        %748 = vmatprep.subr.bf16.mxu0 0
        %749 = vmatpush1.bf16.xpose.msra.mxu0 %v728
        %750 = vmatprep.subr.bf16.mxu0 0
        %751 = vmatpush1.bf16.xpose.msra.mxu0 %v725
        %752 = vmatprep.subr.bf16.mxu0 0
        %753 = vmatpush2.bf16.xpose.msra.mxu0 0
        %754 = vmatprep.subr.bf16.mxu0 0
        %755 = vmatpush2.bf16.xpose.msra.mxu0 0
        %756 = vmatprep.subr.bf16.mxu0 0
        %757 = vmatpush2.bf16.xpose.msra.mxu0 0
        %758 = vmatprep.subr.bf16.mxu0 0
        %759 = vmatpush2.bf16.xpose.msra.mxu0 0
        %760 = vmatprep.subr.bf16.mxu0 0
        %761 = vmatpush2.bf16.xpose.msra.mxu0 0
        %762 = vmatprep.subr.bf16.mxu0 0
        %763 = vmatpush2.bf16.xpose.msra.mxu0 0
        %764 = vmatprep.subr.bf16.mxu0 0
        %765 = vmatpush2.bf16.xpose.msra.mxu0 0
        %766 = vmatprep.subr.bf16.mxu0 0
        %767 = vmatpush2.bf16.xpose.msra.mxu0 0
        %768 = vmatprep.mubr.bf16.mxu0 0
        %769 = vmatmul.mubr.bf16.gmra.mxu0 %v713
        %v770 = vpop.f32.mrf.mxu0
        %v771 = vadd.f32 0.0, %v770
        %v772 = vpop.f32.mrf.mxu0
        %v773 = vpop.f32.mrf.mxu0
        %v774 = vadd.f32 0.0, %v773
        %v775 = vpop.f32.mrf.mxu0
        %776 = vmatprep.mubr.bf16.mxu0 0
        %777 = vmatmul.mubr.bf16.gmra.mxu0 %v716
        %v778 = vpop.f32.mrf.mxu0
        %v779 = vadd.f32 0.0, %v778
        %v780 = vpop.f32.mrf.mxu0
        %v781 = vpop.f32.mrf.mxu0
        %v782 = vadd.f32 0.0, %v781
        %v783 = vpop.f32.mrf.mxu0
        %784 = vmatprep.mubr.bf16.mxu0 0
        %785 = vmatmul.mubr.bf16.gmra.mxu0 %v719
        %v786 = vpop.f32.mrf.mxu0
        %v787 = vadd.f32 0.0, %v786
        %v788 = vpop.f32.mrf.mxu0
        %v789 = vpop.f32.mrf.mxu0
        %v790 = vadd.f32 0.0, %v789
        %v791 = vpop.f32.mrf.mxu0
        %792 = vmatprep.mubr.bf16.mxu0 0
        %793 = vmatmul.mubr.bf16.gmra.mxu0 %v722
        %v794 = vpop.f32.mrf.mxu0
        %v795 = vadd.f32 0.0, %v794
        %v796 = vpop.f32.mrf.mxu0
        %v797 = vpop.f32.mrf.mxu0
        %v798 = vadd.f32 0.0, %v797
        %v799 = vpop.f32.mrf.mxu0
        %800 = vdwg.mxu0
        %vm801 = vcmask 523264
        %v802 = vsel %vm801, %v771, -inf
        %803 = vmax.xlane.f32.xlu0 %v802
        %v804 = vpop.xlane.xlu0 %803
        %v805 = vsel %vm801, %v774, -inf
        %806 = vmax.xlane.f32.xlu0 %v805
        %v807 = vpop.xlane.xlu0 %806
        %v808 = vsel %vm801, %v779, -inf
        %809 = vmax.xlane.f32.xlu0 %v808
        %v810 = vpop.xlane.xlu0 %809
        %v811 = vsel %vm801, %v782, -inf
        %812 = vmax.xlane.f32.xlu0 %v811
        %v813 = vpop.xlane.xlu0 %812
        %v814 = vsel %vm801, %v787, -inf
        %815 = vmax.xlane.f32.xlu0 %v814
        %v816 = vpop.xlane.xlu0 %815
        %v817 = vsel %vm801, %v790, -inf
        %818 = vmax.xlane.f32.xlu0 %v817
        %v819 = vpop.xlane.xlu0 %818
        %v820 = vsel %vm801, %v795, -inf
        %821 = vmax.xlane.f32.xlu0 %v820
        %v822 = vpop.xlane.xlu0 %821
        %v823 = vsel %vm801, %v798, -inf
        %824 = vmax.xlane.f32.xlu0 %v823
        %v825 = vpop.xlane.xlu0 %824
        %v826 = vsub.f32 %v771, %v804
        %v827 = vsub.f32 %v774, %v807
        %v828 = vsub.f32 %v779, %v810
        %v829 = vsub.f32 %v782, %v813
        %v830 = vsub.f32 %v787, %v816
        %v831 = vsub.f32 %v790, %v819
        %v832 = vsub.f32 %v795, %v822
        %v833 = vsub.f32 %v798, %v825
        %v834 = vmul.f32 %v826, 1.442695
        %v835 = vpow.pop %v834
        %v836 = vmul.f32 %v827, 1.442695
        %v837 = vpow.pop %v836
        %v838 = vmul.f32 %v828, 1.442695
        %v839 = vpow.pop %v838
        %v840 = vmul.f32 %v829, 1.442695
        %v841 = vpow.pop %v840
        %v842 = vmul.f32 %v830, 1.442695
        %v843 = vpow.pop %v842
        %v844 = vmul.f32 %v831, 1.442695
        %v845 = vpow.pop %v844
        %v846 = vmul.f32 %v832, 1.442695
        %v847 = vpow.pop %v846
        %v848 = vmul.f32 %v833, 1.442695
        %v849 = vpow.pop %v848
        %v850 = vsel %vm801, %v835, 0.0
        %851 = vadd.xlane.f32.xlu0 %v850
        %v852 = vpop.xlane.xlu0 %851
        %v853 = vsel %vm801, %v837, 0.0
        %854 = vadd.xlane.f32.xlu0 %v853
        %v855 = vpop.xlane.xlu0 %854
        %v856 = vsel %vm801, %v839, 0.0
        %857 = vadd.xlane.f32.xlu0 %v856
        %v858 = vpop.xlane.xlu0 %857
        %v859 = vsel %vm801, %v841, 0.0
        %860 = vadd.xlane.f32.xlu0 %v859
        %v861 = vpop.xlane.xlu0 %860
        %v862 = vsel %vm801, %v843, 0.0
        %863 = vadd.xlane.f32.xlu0 %v862
        %v864 = vpop.xlane.xlu0 %863
        %v865 = vsel %vm801, %v845, 0.0
        %866 = vadd.xlane.f32.xlu0 %v865
        %v867 = vpop.xlane.xlu0 %866
        %v868 = vsel %vm801, %v847, 0.0
        %869 = vadd.xlane.f32.xlu0 %v868
        %v870 = vpop.xlane.xlu0 %869
        %v871 = vsel %vm801, %v849, 0.0
        %872 = vadd.xlane.f32.xlu0 %v871
        %v873 = vpop.xlane.xlu0 %872
        %v874 = vpack.c.bf16 %v837, %v835
        %v875 = vpack.c.bf16 %v841, %v839
        %v876 = vpack.c.bf16 %v845, %v843
        %v877 = vpack.c.bf16 %v849, %v847
        %v879 = vsel %vm801, %v874, 0
        %v882 = vsel %vm801, %v875, 0
        %v885 = vsel %vm801, %v876, 0
        %v888 = vsel %vm801, %v877, 0
        %890 = vmatprep.subr.bf16.mxu0 0
        %891 = vmatpush1.bf16.msra.mxu0 0
        %892 = vmatprep.subr.bf16.mxu0 0
        %893 = vmatpush1.bf16.msra.mxu0 0
        %894 = vmatprep.subr.bf16.mxu0 0
        %895 = vmatpush1.bf16.msra.mxu0 0
        %896 = vmatprep.subr.bf16.mxu0 0
        %897 = vmatpush1.bf16.msra.mxu0 0
        %898 = vmatprep.subr.bf16.mxu0 0
        %899 = vmatpush1.bf16.msra.mxu0 %v698
        %900 = vmatprep.subr.bf16.mxu0 0
        %901 = vmatpush1.bf16.msra.mxu0 %v695
        %902 = vmatprep.subr.bf16.mxu0 0
        %903 = vmatpush1.bf16.msra.mxu0 %v692
        %904 = vmatprep.subr.bf16.mxu0 0
        %905 = vmatpush1.bf16.msra.mxu0 %v689
        %906 = vmatprep.subr.bf16.mxu0 0
        %907 = vmatpush2.bf16.msra.mxu0 0
        %908 = vmatprep.subr.bf16.mxu0 0
        %909 = vmatpush2.bf16.msra.mxu0 0
        %910 = vmatprep.subr.bf16.mxu0 0
        %911 = vmatpush2.bf16.msra.mxu0 0
        %912 = vmatprep.subr.bf16.mxu0 0
        %913 = vmatpush2.bf16.msra.mxu0 0
        %914 = vmatprep.subr.bf16.mxu0 0
        %915 = vmatpush2.bf16.msra.mxu0 0
        %916 = vmatprep.subr.bf16.mxu0 0
        %917 = vmatpush2.bf16.msra.mxu0 0
        %918 = vmatprep.subr.bf16.mxu0 0
        %919 = vmatpush2.bf16.msra.mxu0 0
        %920 = vmatprep.subr.bf16.mxu0 0
        %921 = vmatpush2.bf16.msra.mxu0 0
        %922 = vmatprep.mubr.bf16.mxu0 0
        %923 = vmatmul.mubr.bf16.gmra.mxu0 %v879
        %v924 = vpop.f32.mrf.mxu0
        %v925 = vadd.f32 0.0, %v924
        %v926 = vpop.f32.mrf.mxu0
        %v927 = vpop.f32.mrf.mxu0
        %v928 = vadd.f32 0.0, %v927
        %v929 = vpop.f32.mrf.mxu0
        %930 = vmatprep.mubr.bf16.mxu0 0
        %931 = vmatmul.mubr.bf16.gmra.mxu0 %v882
        %v932 = vpop.f32.mrf.mxu0
        %v933 = vadd.f32 0.0, %v932
        %v934 = vpop.f32.mrf.mxu0
        %v935 = vpop.f32.mrf.mxu0
        %v936 = vadd.f32 0.0, %v935
        %v937 = vpop.f32.mrf.mxu0
        %938 = vmatprep.mubr.bf16.mxu0 0
        %939 = vmatmul.mubr.bf16.gmra.mxu0 %v885
        %v940 = vpop.f32.mrf.mxu0
        %v941 = vadd.f32 0.0, %v940
        %v942 = vpop.f32.mrf.mxu0
        %v943 = vpop.f32.mrf.mxu0
        %v944 = vadd.f32 0.0, %v943
        %v945 = vpop.f32.mrf.mxu0
        %946 = vmatprep.mubr.bf16.mxu0 0
        %947 = vmatmul.mubr.bf16.gmra.mxu0 %v888
        %v948 = vpop.f32.mrf.mxu0
        %v949 = vadd.f32 0.0, %v948
        %v950 = vpop.f32.mrf.mxu0
        %v951 = vpop.f32.mrf.mxu0
        %v952 = vadd.f32 0.0, %v951
        %v953 = vpop.f32.mrf.mxu0
        %954 = vdwg.mxu0
        %v955 = vrcp.pop %v852
        %v956 = vrcp.pop %v855
        %v957 = vrcp.pop %v858
        %v958 = vrcp.pop %v861
        %v959 = vrcp.pop %v864
        %v960 = vrcp.pop %v867
        %v961 = vrcp.pop %v870
        %v962 = vrcp.pop %v873
        %v963 = vmul.f32 %v925, %v955
        %v964 = vmul.f32 %v928, %v956
        %v965 = vmul.f32 %v933, %v957
        %v966 = vmul.f32 %v936, %v958
        %v967 = vmul.f32 %v941, %v959
        %v968 = vmul.f32 %v944, %v960
        %v969 = vmul.f32 %v949, %v961
        %v970 = vmul.f32 %v952, %v962
        %v971 = vpack.c.bf16 %v964, %v963
        %v972 = vpack.c.bf16 %v966, %v965
        %v973 = vpack.c.bf16 %v968, %v967
        %v974 = vpack.c.bf16 %v970, %v969
        %v979 = vunpack.c.l.b16 %v971
        %v980 = vunpack.c.h.b16 %v971
        %v981 = vunpack.c.l.b16 %v972
        %v982 = vunpack.c.h.b16 %v972
        %v983 = vunpack.c.l.b16 %v973
        %v984 = vunpack.c.h.b16 %v973
        %v985 = vunpack.c.l.b16 %v974
        %v986 = vunpack.c.h.b16 %v974
        %v987 = vpack.c.b16 %v979, %v979
        %v988 = vpack.c.b16 %v980, %v980
        %v989 = vpack.c.b16 %v981, %v981
        %v990 = vpack.c.b16 %v982, %v982
        %v991 = vpack.c.b16 %v983, %v983
        %v992 = vpack.c.b16 %v984, %v984
        %v993 = vpack.c.b16 %v985, %v985
        %v994 = vpack.c.b16 %v986, %v986
        %vm1003 = vcmask 257024
        %1004 = vst.msk [vmem:[#allocation2] sm:$0xf] %vm1003, %v987
        %1005 = vst.msk [vmem:[#allocation2 + $0x4] sm:$0xf] %vm1003, %v988
        %1006 = vst.msk [vmem:[#allocation2 + $0x8] sm:$0xf] %vm1003, %v989
        %1007 = vst.msk [vmem:[#allocation2 + $0xc] sm:$0xf] %vm1003, %v990
        %1008 = vst.msk [vmem:[#allocation2 + $0x10] sm:$0xf] %vm1003, %v991
        %1009 = vst.msk [vmem:[#allocation2 + $0x14] sm:$0xf] %vm1003, %v992
        %1010 = vst.msk [vmem:[#allocation2 + $0x18] sm:$0xf] %vm1003, %v993
        %1011 = vst.msk [vmem:[#allocation2 + $0x1c] sm:$0xf] %vm1003, %v994
        %1016 = vrot.lane.b32.xlu0 %v687, 96
        %v1017 = vpop.permute.xlu0 %1016
        %1018 = vrot.lane.b32.xlu0 %v690, 96
        %v1019 = vpop.permute.xlu0 %1018
        %1020 = vrot.lane.b32.xlu0 %v693, 96
        %v1021 = vpop.permute.xlu0 %1020
        %1022 = vrot.lane.b32.xlu0 %v696, 96
        %v1023 = vpop.permute.xlu0 %1022
        %1028 = vrot.lane.b32.xlu0 %v688, 96
        %v1029 = vpop.permute.xlu0 %1028
        %1030 = vrot.lane.b32.xlu0 %v691, 96
        %v1031 = vpop.permute.xlu0 %1030
        %1032 = vrot.lane.b32.xlu0 %v694, 96
        %v1033 = vpop.permute.xlu0 %1032
        %1034 = vrot.lane.b32.xlu0 %v697, 96
        %v1035 = vpop.permute.xlu0 %1034
        %v1037 = vsel %vm711, %v1017, 0
        %v1040 = vsel %vm711, %v1019, 0
        %v1043 = vsel %vm711, %v1021, 0
        %v1046 = vsel %vm711, %v1023, 0
        %v1049 = vsel %vm711, %v1029, 0
        %v1052 = vsel %vm711, %v1031, 0
        %v1055 = vsel %vm711, %v1033, 0
        %v1058 = vsel %vm711, %v1035, 0
        %1060 = vmatprep.subr.bf16.mxu0 0
        %1061 = vmatpush1.bf16.xpose.msra.mxu0 0
        %1062 = vmatprep.subr.bf16.mxu0 0
        %1063 = vmatpush1.bf16.xpose.msra.mxu0 0
        %1064 = vmatprep.subr.bf16.mxu0 0
        %1065 = vmatpush1.bf16.xpose.msra.mxu0 0
        %1066 = vmatprep.subr.bf16.mxu0 0
        %1067 = vmatpush1.bf16.xpose.msra.mxu0 0
        %1068 = vmatprep.subr.bf16.mxu0 0
        %1069 = vmatpush1.bf16.xpose.msra.mxu0 %v1058
        %1070 = vmatprep.subr.bf16.mxu0 0
        %1071 = vmatpush1.bf16.xpose.msra.mxu0 %v1055
        %1072 = vmatprep.subr.bf16.mxu0 0
        %1073 = vmatpush1.bf16.xpose.msra.mxu0 %v1052
        %1074 = vmatprep.subr.bf16.mxu0 0
        %1075 = vmatpush1.bf16.xpose.msra.mxu0 %v1049
        %1076 = vmatprep.subr.bf16.mxu0 0
        %1077 = vmatpush2.bf16.xpose.msra.mxu0 0
        %1078 = vmatprep.subr.bf16.mxu0 0
        %1079 = vmatpush2.bf16.xpose.msra.mxu0 0
        %1080 = vmatprep.subr.bf16.mxu0 0
        %1081 = vmatpush2.bf16.xpose.msra.mxu0 0
        %1082 = vmatprep.subr.bf16.mxu0 0
        %1083 = vmatpush2.bf16.xpose.msra.mxu0 0
        %1084 = vmatprep.subr.bf16.mxu0 0
        %1085 = vmatpush2.bf16.xpose.msra.mxu0 0
        %1086 = vmatprep.subr.bf16.mxu0 0
        %1087 = vmatpush2.bf16.xpose.msra.mxu0 0
        %1088 = vmatprep.subr.bf16.mxu0 0
        %1089 = vmatpush2.bf16.xpose.msra.mxu0 0
        %1090 = vmatprep.subr.bf16.mxu0 0
        %1091 = vmatpush2.bf16.xpose.msra.mxu0 0
        %1092 = vmatprep.mubr.bf16.mxu0 0
        %1093 = vmatmul.mubr.bf16.gmra.mxu0 %v1037
        %v1094 = vpop.f32.mrf.mxu0
        %v1095 = vadd.f32 0.0, %v1094
        %v1096 = vpop.f32.mrf.mxu0
        %v1097 = vpop.f32.mrf.mxu0
        %v1098 = vadd.f32 0.0, %v1097
        %v1099 = vpop.f32.mrf.mxu0
        %1100 = vmatprep.mubr.bf16.mxu0 0
        %1101 = vmatmul.mubr.bf16.gmra.mxu0 %v1040
        %v1102 = vpop.f32.mrf.mxu0
        %v1103 = vadd.f32 0.0, %v1102
        %v1104 = vpop.f32.mrf.mxu0
        %v1105 = vpop.f32.mrf.mxu0
        %v1106 = vadd.f32 0.0, %v1105
        %v1107 = vpop.f32.mrf.mxu0
        %1108 = vmatprep.mubr.bf16.mxu0 0
        %1109 = vmatmul.mubr.bf16.gmra.mxu0 %v1043
        %v1110 = vpop.f32.mrf.mxu0
        %v1111 = vadd.f32 0.0, %v1110
        %v1112 = vpop.f32.mrf.mxu0
        %v1113 = vpop.f32.mrf.mxu0
        %v1114 = vadd.f32 0.0, %v1113
        %v1115 = vpop.f32.mrf.mxu0
        %1116 = vmatprep.mubr.bf16.mxu0 0
        %1117 = vmatmul.mubr.bf16.gmra.mxu0 %v1046
        %v1118 = vpop.f32.mrf.mxu0
        %v1119 = vadd.f32 0.0, %v1118
        %v1120 = vpop.f32.mrf.mxu0
        %v1121 = vpop.f32.mrf.mxu0
        %v1122 = vadd.f32 0.0, %v1121
        %v1123 = vpop.f32.mrf.mxu0
        %1124 = vdwg.mxu0
        %v1125 = vsel %vm801, %v1095, -inf
        %1126 = vmax.xlane.f32.xlu0 %v1125
        %v1127 = vpop.xlane.xlu0 %1126
        %v1128 = vsel %vm801, %v1098, -inf
        %1129 = vmax.xlane.f32.xlu0 %v1128
        %v1130 = vpop.xlane.xlu0 %1129
        %v1131 = vsel %vm801, %v1103, -inf
        %1132 = vmax.xlane.f32.xlu0 %v1131
        %v1133 = vpop.xlane.xlu0 %1132
        %v1134 = vsel %vm801, %v1106, -inf
        %1135 = vmax.xlane.f32.xlu0 %v1134
        %v1136 = vpop.xlane.xlu0 %1135
        %v1137 = vsel %vm801, %v1111, -inf
        %1138 = vmax.xlane.f32.xlu0 %v1137
        %v1139 = vpop.xlane.xlu0 %1138
        %v1140 = vsel %vm801, %v1114, -inf
        %1141 = vmax.xlane.f32.xlu0 %v1140
        %v1142 = vpop.xlane.xlu0 %1141
        %v1143 = vsel %vm801, %v1119, -inf
        %1144 = vmax.xlane.f32.xlu0 %v1143
        %v1145 = vpop.xlane.xlu0 %1144
        %v1146 = vsel %vm801, %v1122, -inf
        %1147 = vmax.xlane.f32.xlu0 %v1146
        %v1148 = vpop.xlane.xlu0 %1147
        %v1149 = vsub.f32 %v1095, %v1127
        %v1150 = vsub.f32 %v1098, %v1130
        %v1151 = vsub.f32 %v1103, %v1133
        %v1152 = vsub.f32 %v1106, %v1136
        %v1153 = vsub.f32 %v1111, %v1139
        %v1154 = vsub.f32 %v1114, %v1142
        %v1155 = vsub.f32 %v1119, %v1145
        %v1156 = vsub.f32 %v1122, %v1148
        %v1157 = vmul.f32 %v1149, 1.442695
        %v1158 = vpow.pop %v1157
        %v1159 = vmul.f32 %v1150, 1.442695
        %v1160 = vpow.pop %v1159
        %v1161 = vmul.f32 %v1151, 1.442695
        %v1162 = vpow.pop %v1161
        %v1163 = vmul.f32 %v1152, 1.442695
        %v1164 = vpow.pop %v1163
        %v1165 = vmul.f32 %v1153, 1.442695
        %v1166 = vpow.pop %v1165
        %v1167 = vmul.f32 %v1154, 1.442695
        %v1168 = vpow.pop %v1167
        %v1169 = vmul.f32 %v1155, 1.442695
        %v1170 = vpow.pop %v1169
        %v1171 = vmul.f32 %v1156, 1.442695
        %v1172 = vpow.pop %v1171
        %v1173 = vsel %vm801, %v1158, 0.0
        %1174 = vadd.xlane.f32.xlu0 %v1173
        %v1175 = vpop.xlane.xlu0 %1174
        %v1176 = vsel %vm801, %v1160, 0.0
        %1177 = vadd.xlane.f32.xlu0 %v1176
        %v1178 = vpop.xlane.xlu0 %1177
        %v1179 = vsel %vm801, %v1162, 0.0
        %1180 = vadd.xlane.f32.xlu0 %v1179
        %v1181 = vpop.xlane.xlu0 %1180
        %v1182 = vsel %vm801, %v1164, 0.0
        %1183 = vadd.xlane.f32.xlu0 %v1182
        %v1184 = vpop.xlane.xlu0 %1183
        %v1185 = vsel %vm801, %v1166, 0.0
        %1186 = vadd.xlane.f32.xlu0 %v1185
        %v1187 = vpop.xlane.xlu0 %1186
        %v1188 = vsel %vm801, %v1168, 0.0
        %1189 = vadd.xlane.f32.xlu0 %v1188
        %v1190 = vpop.xlane.xlu0 %1189
        %v1191 = vsel %vm801, %v1170, 0.0
        %1192 = vadd.xlane.f32.xlu0 %v1191
        %v1193 = vpop.xlane.xlu0 %1192
        %v1194 = vsel %vm801, %v1172, 0.0
        %1195 = vadd.xlane.f32.xlu0 %v1194
        %v1196 = vpop.xlane.xlu0 %1195
        %v1197 = vpack.c.bf16 %v1160, %v1158
        %v1198 = vpack.c.bf16 %v1164, %v1162
        %v1199 = vpack.c.bf16 %v1168, %v1166
        %v1200 = vpack.c.bf16 %v1172, %v1170
        %1205 = vrot.lane.b32.xlu0 %v689, 96
        %v1206 = vpop.permute.xlu0 %1205
        %1207 = vrot.lane.b32.xlu0 %v692, 96
        %v1208 = vpop.permute.xlu0 %1207
        %1209 = vrot.lane.b32.xlu0 %v695, 96
        %v1210 = vpop.permute.xlu0 %1209
        %1211 = vrot.lane.b32.xlu0 %v698, 96
        %v1212 = vpop.permute.xlu0 %1211
        %v1218 = vsel %vm801, %v1197, 0
        %v1221 = vsel %vm801, %v1198, 0
        %v1224 = vsel %vm801, %v1199, 0
        %v1227 = vsel %vm801, %v1200, 0
        %1229 = vmatprep.subr.bf16.mxu0 0
        %1230 = vmatpush1.bf16.msra.mxu0 0
        %1231 = vmatprep.subr.bf16.mxu0 0
        %1232 = vmatpush1.bf16.msra.mxu0 0
        %1233 = vmatprep.subr.bf16.mxu0 0
        %1234 = vmatpush1.bf16.msra.mxu0 0
        %1235 = vmatprep.subr.bf16.mxu0 0
        %1236 = vmatpush1.bf16.msra.mxu0 0
        %1237 = vmatprep.subr.bf16.mxu0 0
        %1238 = vmatpush1.bf16.msra.mxu0 %v1212
        %1239 = vmatprep.subr.bf16.mxu0 0
        %1240 = vmatpush1.bf16.msra.mxu0 %v1210
        %1241 = vmatprep.subr.bf16.mxu0 0
        %1242 = vmatpush1.bf16.msra.mxu0 %v1208
        %1243 = vmatprep.subr.bf16.mxu0 0
        %1244 = vmatpush1.bf16.msra.mxu0 %v1206
        %1245 = vmatprep.subr.bf16.mxu0 0
        %1246 = vmatpush2.bf16.msra.mxu0 0
        %1247 = vmatprep.subr.bf16.mxu0 0
        %1248 = vmatpush2.bf16.msra.mxu0 0
        %1249 = vmatprep.subr.bf16.mxu0 0
        %1250 = vmatpush2.bf16.msra.mxu0 0
        %1251 = vmatprep.subr.bf16.mxu0 0
        %1252 = vmatpush2.bf16.msra.mxu0 0
        %1253 = vmatprep.subr.bf16.mxu0 0
        %1254 = vmatpush2.bf16.msra.mxu0 0
        %1255 = vmatprep.subr.bf16.mxu0 0
        %1256 = vmatpush2.bf16.msra.mxu0 0
        %1257 = vmatprep.subr.bf16.mxu0 0
        %1258 = vmatpush2.bf16.msra.mxu0 0
        %1259 = vmatprep.subr.bf16.mxu0 0
        %1260 = vmatpush2.bf16.msra.mxu0 0
        %1261 = vmatprep.mubr.bf16.mxu0 0
        %1262 = vmatmul.mubr.bf16.gmra.mxu0 %v1218
        %v1263 = vpop.f32.mrf.mxu0
        %v1264 = vadd.f32 0.0, %v1263
        %v1265 = vpop.f32.mrf.mxu0
        %v1266 = vpop.f32.mrf.mxu0
        %v1267 = vadd.f32 0.0, %v1266
        %v1268 = vpop.f32.mrf.mxu0
        %1269 = vmatprep.mubr.bf16.mxu0 0
        %1270 = vmatmul.mubr.bf16.gmra.mxu0 %v1221
        %v1271 = vpop.f32.mrf.mxu0
        %v1272 = vadd.f32 0.0, %v1271
        %v1273 = vpop.f32.mrf.mxu0
        %v1274 = vpop.f32.mrf.mxu0
        %v1275 = vadd.f32 0.0, %v1274
        %v1276 = vpop.f32.mrf.mxu0
        %1277 = vmatprep.mubr.bf16.mxu0 0
        %1278 = vmatmul.mubr.bf16.gmra.mxu0 %v1224
        %v1279 = vpop.f32.mrf.mxu0
        %v1280 = vadd.f32 0.0, %v1279
        %v1281 = vpop.f32.mrf.mxu0
        %v1282 = vpop.f32.mrf.mxu0
        %v1283 = vadd.f32 0.0, %v1282
        %v1284 = vpop.f32.mrf.mxu0
        %1285 = vmatprep.mubr.bf16.mxu0 0
        %1286 = vmatmul.mubr.bf16.gmra.mxu0 %v1227
        %v1287 = vpop.f32.mrf.mxu0
        %v1288 = vadd.f32 0.0, %v1287
        %v1289 = vpop.f32.mrf.mxu0
        %v1290 = vpop.f32.mrf.mxu0
        %v1291 = vadd.f32 0.0, %v1290
        %v1292 = vpop.f32.mrf.mxu0
        %1293 = vdwg.mxu0
        %v1294 = vrcp.pop %v1175
        %v1295 = vrcp.pop %v1178
        %v1296 = vrcp.pop %v1181
        %v1297 = vrcp.pop %v1184
        %v1298 = vrcp.pop %v1187
        %v1299 = vrcp.pop %v1190
        %v1300 = vrcp.pop %v1193
        %v1301 = vrcp.pop %v1196
        %v1302 = vmul.f32 %v1264, %v1294
        %v1303 = vmul.f32 %v1267, %v1295
        %v1304 = vmul.f32 %v1272, %v1296
        %v1305 = vmul.f32 %v1275, %v1297
        %v1306 = vmul.f32 %v1280, %v1298
        %v1307 = vmul.f32 %v1283, %v1299
        %v1308 = vmul.f32 %v1288, %v1300
        %v1309 = vmul.f32 %v1291, %v1301
        %v1310 = vpack.c.bf16 %v1303, %v1302
        %v1311 = vpack.c.bf16 %v1305, %v1304
        %v1312 = vpack.c.bf16 %v1307, %v1306
        %v1313 = vpack.c.bf16 %v1309, %v1308
        %v1318 = vunpack.c.l.b16 %v1310
        %v1319 = vunpack.c.h.b16 %v1310
        %v1320 = vunpack.c.l.b16 %v1311
        %v1321 = vunpack.c.h.b16 %v1311
        %v1322 = vunpack.c.l.b16 %v1312
        %v1323 = vunpack.c.h.b16 %v1312
        %v1324 = vunpack.c.l.b16 %v1313
        %v1325 = vunpack.c.h.b16 %v1313
        %v1326 = vpack.c.b16 %v1318, %v1318
        %v1327 = vpack.c.b16 %v1319, %v1319
        %v1328 = vpack.c.b16 %v1320, %v1320
        %v1329 = vpack.c.b16 %v1321, %v1321
        %v1330 = vpack.c.b16 %v1322, %v1322
        %v1331 = vpack.c.b16 %v1323, %v1323
        %v1332 = vpack.c.b16 %v1324, %v1324
        %v1333 = vpack.c.b16 %v1325, %v1325
        %1334 = vrot.lane.b32.xlu0 %v1326, 32
        %v1335 = vpop.permute.xlu0 %1334
        %1336 = vrot.lane.b32.xlu0 %v1327, 32
        %v1337 = vpop.permute.xlu0 %1336
        %1338 = vrot.lane.b32.xlu0 %v1328, 32
        %v1339 = vpop.permute.xlu0 %1338
        %1340 = vrot.lane.b32.xlu0 %v1329, 32
        %v1341 = vpop.permute.xlu0 %1340
        %1342 = vrot.lane.b32.xlu0 %v1330, 32
        %v1343 = vpop.permute.xlu0 %1342
        %1344 = vrot.lane.b32.xlu0 %v1331, 32
        %v1345 = vpop.permute.xlu0 %1344
        %1346 = vrot.lane.b32.xlu0 %v1332, 32
        %v1347 = vpop.permute.xlu0 %1346
        %1348 = vrot.lane.b32.xlu0 %v1333, 32
        %v1349 = vpop.permute.xlu0 %1348
        %vm1358 = vcmask 519424
        %1359 = vst.msk [vmem:[#allocation2] sm:$0xf] %vm1358, %v1335
        %1360 = vst.msk [vmem:[#allocation2 + $0x4] sm:$0xf] %vm1358, %v1337
        %1361 = vst.msk [vmem:[#allocation2 + $0x8] sm:$0xf] %vm1358, %v1339
        %1362 = vst.msk [vmem:[#allocation2 + $0xc] sm:$0xf] %vm1358, %v1341
        %1363 = vst.msk [vmem:[#allocation2 + $0x10] sm:$0xf] %vm1358, %v1343
        %1364 = vst.msk [vmem:[#allocation2 + $0x14] sm:$0xf] %vm1358, %v1345
        %1365 = vst.msk [vmem:[#allocation2 + $0x18] sm:$0xf] %vm1358, %v1347
        %1366 = vst.msk [vmem:[#allocation2 + $0x1c] sm:$0xf] %vm1358, %v1349
        %1367 = vrot.lane.b32.xlu0 %v687, 64
        %v1368 = vpop.permute.xlu0 %1367
        %1369 = vrot.lane.b32.xlu0 %v690, 64
        %v1370 = vpop.permute.xlu0 %1369
        %1371 = vrot.lane.b32.xlu0 %v693, 64
        %v1372 = vpop.permute.xlu0 %1371
        %1373 = vrot.lane.b32.xlu0 %v696, 64
        %v1374 = vpop.permute.xlu0 %1373
        %1375 = vrot.lane.b32.xlu0 %v688, 64
        %v1376 = vpop.permute.xlu0 %1375
        %1377 = vrot.lane.b32.xlu0 %v691, 64
        %v1378 = vpop.permute.xlu0 %1377
        %1379 = vrot.lane.b32.xlu0 %v694, 64
        %v1380 = vpop.permute.xlu0 %1379
        %1381 = vrot.lane.b32.xlu0 %v697, 64
        %v1382 = vpop.permute.xlu0 %1381
        %v1384 = vsel %vm711, %v1368, 0
        %v1387 = vsel %vm711, %v1370, 0
        %v1390 = vsel %vm711, %v1372, 0
        %v1393 = vsel %vm711, %v1374, 0
        %v1396 = vsel %vm711, %v1376, 0
        %v1399 = vsel %vm711, %v1378, 0
        %v1402 = vsel %vm711, %v1380, 0
        %v1405 = vsel %vm711, %v1382, 0
        %1407 = vmatprep.subr.bf16.mxu0 0
        %1408 = vmatpush1.bf16.xpose.msra.mxu0 0
        %1409 = vmatprep.subr.bf16.mxu0 0
        %1410 = vmatpush1.bf16.xpose.msra.mxu0 0
        %1411 = vmatprep.subr.bf16.mxu0 0
        %1412 = vmatpush1.bf16.xpose.msra.mxu0 0
        %1413 = vmatprep.subr.bf16.mxu0 0
        %1414 = vmatpush1.bf16.xpose.msra.mxu0 0
        %1415 = vmatprep.subr.bf16.mxu0 0
        %1416 = vmatpush1.bf16.xpose.msra.mxu0 %v1405
        %1417 = vmatprep.subr.bf16.mxu0 0
        %1418 = vmatpush1.bf16.xpose.msra.mxu0 %v1402
        %1419 = vmatprep.subr.bf16.mxu0 0
        %1420 = vmatpush1.bf16.xpose.msra.mxu0 %v1399
        %1421 = vmatprep.subr.bf16.mxu0 0
        %1422 = vmatpush1.bf16.xpose.msra.mxu0 %v1396
        %1423 = vmatprep.subr.bf16.mxu0 0
        %1424 = vmatpush2.bf16.xpose.msra.mxu0 0
        %1425 = vmatprep.subr.bf16.mxu0 0
        %1426 = vmatpush2.bf16.xpose.msra.mxu0 0
        %1427 = vmatprep.subr.bf16.mxu0 0
        %1428 = vmatpush2.bf16.xpose.msra.mxu0 0
        %1429 = vmatprep.subr.bf16.mxu0 0
        %1430 = vmatpush2.bf16.xpose.msra.mxu0 0
        %1431 = vmatprep.subr.bf16.mxu0 0
        %1432 = vmatpush2.bf16.xpose.msra.mxu0 0
        %1433 = vmatprep.subr.bf16.mxu0 0
        %1434 = vmatpush2.bf16.xpose.msra.mxu0 0
        %1435 = vmatprep.subr.bf16.mxu0 0
        %1436 = vmatpush2.bf16.xpose.msra.mxu0 0
        %1437 = vmatprep.subr.bf16.mxu0 0
        %1438 = vmatpush2.bf16.xpose.msra.mxu0 0
        %1439 = vmatprep.mubr.bf16.mxu0 0
        %1440 = vmatmul.mubr.bf16.gmra.mxu0 %v1384
        %v1441 = vpop.f32.mrf.mxu0
        %v1442 = vadd.f32 0.0, %v1441
        %v1443 = vpop.f32.mrf.mxu0
        %v1444 = vpop.f32.mrf.mxu0
        %v1445 = vadd.f32 0.0, %v1444
        %v1446 = vpop.f32.mrf.mxu0
        %1447 = vmatprep.mubr.bf16.mxu0 0
        %1448 = vmatmul.mubr.bf16.gmra.mxu0 %v1387
        %v1449 = vpop.f32.mrf.mxu0
        %v1450 = vadd.f32 0.0, %v1449
        %v1451 = vpop.f32.mrf.mxu0
        %v1452 = vpop.f32.mrf.mxu0
        %v1453 = vadd.f32 0.0, %v1452
        %v1454 = vpop.f32.mrf.mxu0
        %1455 = vmatprep.mubr.bf16.mxu0 0
        %1456 = vmatmul.mubr.bf16.gmra.mxu0 %v1390
        %v1457 = vpop.f32.mrf.mxu0
        %v1458 = vadd.f32 0.0, %v1457
        %v1459 = vpop.f32.mrf.mxu0
        %v1460 = vpop.f32.mrf.mxu0
        %v1461 = vadd.f32 0.0, %v1460
        %v1462 = vpop.f32.mrf.mxu0
        %1463 = vmatprep.mubr.bf16.mxu0 0
        %1464 = vmatmul.mubr.bf16.gmra.mxu0 %v1393
        %v1465 = vpop.f32.mrf.mxu0
        %v1466 = vadd.f32 0.0, %v1465
        %v1467 = vpop.f32.mrf.mxu0
        %v1468 = vpop.f32.mrf.mxu0
        %v1469 = vadd.f32 0.0, %v1468
        %v1470 = vpop.f32.mrf.mxu0
        %1471 = vdwg.mxu0
        %v1472 = vsel %vm801, %v1442, -inf
        %1473 = vmax.xlane.f32.xlu0 %v1472
        %v1474 = vpop.xlane.xlu0 %1473
        %v1475 = vsel %vm801, %v1445, -inf
        %1476 = vmax.xlane.f32.xlu0 %v1475
        %v1477 = vpop.xlane.xlu0 %1476
        %v1478 = vsel %vm801, %v1450, -inf
        %1479 = vmax.xlane.f32.xlu0 %v1478
        %v1480 = vpop.xlane.xlu0 %1479
        %v1481 = vsel %vm801, %v1453, -inf
        %1482 = vmax.xlane.f32.xlu0 %v1481
        %v1483 = vpop.xlane.xlu0 %1482
        %v1484 = vsel %vm801, %v1458, -inf
        %1485 = vmax.xlane.f32.xlu0 %v1484
        %v1486 = vpop.xlane.xlu0 %1485
        %v1487 = vsel %vm801, %v1461, -inf
        %1488 = vmax.xlane.f32.xlu0 %v1487
        %v1489 = vpop.xlane.xlu0 %1488
        %v1490 = vsel %vm801, %v1466, -inf
        %1491 = vmax.xlane.f32.xlu0 %v1490
        %v1492 = vpop.xlane.xlu0 %1491
        %v1493 = vsel %vm801, %v1469, -inf
        %1494 = vmax.xlane.f32.xlu0 %v1493
        %v1495 = vpop.xlane.xlu0 %1494
        %v1496 = vsub.f32 %v1442, %v1474
        %v1497 = vsub.f32 %v1445, %v1477
        %v1498 = vsub.f32 %v1450, %v1480
        %v1499 = vsub.f32 %v1453, %v1483
        %v1500 = vsub.f32 %v1458, %v1486
        %v1501 = vsub.f32 %v1461, %v1489
        %v1502 = vsub.f32 %v1466, %v1492
        %v1503 = vsub.f32 %v1469, %v1495
        %v1504 = vmul.f32 %v1496, 1.442695
        %v1505 = vpow.pop %v1504
        %v1506 = vmul.f32 %v1497, 1.442695
        %v1507 = vpow.pop %v1506
        %v1508 = vmul.f32 %v1498, 1.442695
        %v1509 = vpow.pop %v1508
        %v1510 = vmul.f32 %v1499, 1.442695
        %v1511 = vpow.pop %v1510
        %v1512 = vmul.f32 %v1500, 1.442695
        %v1513 = vpow.pop %v1512
        %v1514 = vmul.f32 %v1501, 1.442695
        %v1515 = vpow.pop %v1514
        %v1516 = vmul.f32 %v1502, 1.442695
        %v1517 = vpow.pop %v1516
        %v1518 = vmul.f32 %v1503, 1.442695
        %v1519 = vpow.pop %v1518
        %v1520 = vsel %vm801, %v1505, 0.0
        %1521 = vadd.xlane.f32.xlu0 %v1520
        %v1522 = vpop.xlane.xlu0 %1521
        %v1523 = vsel %vm801, %v1507, 0.0
        %1524 = vadd.xlane.f32.xlu0 %v1523
        %v1525 = vpop.xlane.xlu0 %1524
        %v1526 = vsel %vm801, %v1509, 0.0
        %1527 = vadd.xlane.f32.xlu0 %v1526
        %v1528 = vpop.xlane.xlu0 %1527
        %v1529 = vsel %vm801, %v1511, 0.0
        %1530 = vadd.xlane.f32.xlu0 %v1529
        %v1531 = vpop.xlane.xlu0 %1530
        %v1532 = vsel %vm801, %v1513, 0.0
        %1533 = vadd.xlane.f32.xlu0 %v1532
        %v1534 = vpop.xlane.xlu0 %1533
        %v1535 = vsel %vm801, %v1515, 0.0
        %1536 = vadd.xlane.f32.xlu0 %v1535
        %v1537 = vpop.xlane.xlu0 %1536
        %v1538 = vsel %vm801, %v1517, 0.0
        %1539 = vadd.xlane.f32.xlu0 %v1538
        %v1540 = vpop.xlane.xlu0 %1539
        %v1541 = vsel %vm801, %v1519, 0.0
        %1542 = vadd.xlane.f32.xlu0 %v1541
        %v1543 = vpop.xlane.xlu0 %1542
        %v1544 = vpack.c.bf16 %v1507, %v1505
        %v1545 = vpack.c.bf16 %v1511, %v1509
        %v1546 = vpack.c.bf16 %v1515, %v1513
        %v1547 = vpack.c.bf16 %v1519, %v1517
        %1548 = vrot.lane.b32.xlu0 %v689, 64
        %v1549 = vpop.permute.xlu0 %1548
        %1550 = vrot.lane.b32.xlu0 %v692, 64
        %v1551 = vpop.permute.xlu0 %1550
        %1552 = vrot.lane.b32.xlu0 %v695, 64
        %v1553 = vpop.permute.xlu0 %1552
        %1554 = vrot.lane.b32.xlu0 %v698, 64
        %v1555 = vpop.permute.xlu0 %1554
        %v1561 = vsel %vm801, %v1544, 0
        %v1564 = vsel %vm801, %v1545, 0
        %v1567 = vsel %vm801, %v1546, 0
        %v1570 = vsel %vm801, %v1547, 0
        %1572 = vmatprep.subr.bf16.mxu0 0
        %1573 = vmatpush1.bf16.msra.mxu0 0
        %1574 = vmatprep.subr.bf16.mxu0 0
        %1575 = vmatpush1.bf16.msra.mxu0 0
        %1576 = vmatprep.subr.bf16.mxu0 0
        %1577 = vmatpush1.bf16.msra.mxu0 0
        %1578 = vmatprep.subr.bf16.mxu0 0
        %1579 = vmatpush1.bf16.msra.mxu0 0
        %1580 = vmatprep.subr.bf16.mxu0 0
        %1581 = vmatpush1.bf16.msra.mxu0 %v1555
        %1582 = vmatprep.subr.bf16.mxu0 0
        %1583 = vmatpush1.bf16.msra.mxu0 %v1553
        %1584 = vmatprep.subr.bf16.mxu0 0
        %1585 = vmatpush1.bf16.msra.mxu0 %v1551
        %1586 = vmatprep.subr.bf16.mxu0 0
        %1587 = vmatpush1.bf16.msra.mxu0 %v1549
        %1588 = vmatprep.subr.bf16.mxu0 0
        %1589 = vmatpush2.bf16.msra.mxu0 0
        %1590 = vmatprep.subr.bf16.mxu0 0
        %1591 = vmatpush2.bf16.msra.mxu0 0
        %1592 = vmatprep.subr.bf16.mxu0 0
        %1593 = vmatpush2.bf16.msra.mxu0 0
        %1594 = vmatprep.subr.bf16.mxu0 0
        %1595 = vmatpush2.bf16.msra.mxu0 0
        %1596 = vmatprep.subr.bf16.mxu0 0
        %1597 = vmatpush2.bf16.msra.mxu0 0
        %1598 = vmatprep.subr.bf16.mxu0 0
        %1599 = vmatpush2.bf16.msra.mxu0 0
        %1600 = vmatprep.subr.bf16.mxu0 0
        %1601 = vmatpush2.bf16.msra.mxu0 0
        %1602 = vmatprep.subr.bf16.mxu0 0
        %1603 = vmatpush2.bf16.msra.mxu0 0
        %1604 = vmatprep.mubr.bf16.mxu0 0
        %1605 = vmatmul.mubr.bf16.gmra.mxu0 %v1561
        %v1606 = vpop.f32.mrf.mxu0
        %v1607 = vadd.f32 0.0, %v1606
        %v1608 = vpop.f32.mrf.mxu0
        %v1609 = vpop.f32.mrf.mxu0
        %v1610 = vadd.f32 0.0, %v1609
        %v1611 = vpop.f32.mrf.mxu0
        %1612 = vmatprep.mubr.bf16.mxu0 0
        %1613 = vmatmul.mubr.bf16.gmra.mxu0 %v1564
        %v1614 = vpop.f32.mrf.mxu0
        %v1615 = vadd.f32 0.0, %v1614
        %v1616 = vpop.f32.mrf.mxu0
        %v1617 = vpop.f32.mrf.mxu0
        %v1618 = vadd.f32 0.0, %v1617
        %v1619 = vpop.f32.mrf.mxu0
        %1620 = vmatprep.mubr.bf16.mxu0 0
        %1621 = vmatmul.mubr.bf16.gmra.mxu0 %v1567
        %v1622 = vpop.f32.mrf.mxu0
        %v1623 = vadd.f32 0.0, %v1622
        %v1624 = vpop.f32.mrf.mxu0
        %v1625 = vpop.f32.mrf.mxu0
        %v1626 = vadd.f32 0.0, %v1625
        %v1627 = vpop.f32.mrf.mxu0
        %1628 = vmatprep.mubr.bf16.mxu0 0
        %1629 = vmatmul.mubr.bf16.gmra.mxu0 %v1570
        %v1630 = vpop.f32.mrf.mxu0
        %v1631 = vadd.f32 0.0, %v1630
        %v1632 = vpop.f32.mrf.mxu0
        %v1633 = vpop.f32.mrf.mxu0
        %v1634 = vadd.f32 0.0, %v1633
        %v1635 = vpop.f32.mrf.mxu0
        %1636 = vdwg.mxu0
        %v1637 = vrcp.pop %v1522
        %v1638 = vrcp.pop %v1525
        %v1639 = vrcp.pop %v1528
        %v1640 = vrcp.pop %v1531
        %v1641 = vrcp.pop %v1534
        %v1642 = vrcp.pop %v1537
        %v1643 = vrcp.pop %v1540
        %v1644 = vrcp.pop %v1543
        %v1645 = vmul.f32 %v1607, %v1637
        %v1646 = vmul.f32 %v1610, %v1638
        %v1647 = vmul.f32 %v1615, %v1639
        %v1648 = vmul.f32 %v1618, %v1640
        %v1649 = vmul.f32 %v1623, %v1641
        %v1650 = vmul.f32 %v1626, %v1642
        %v1651 = vmul.f32 %v1631, %v1643
        %v1652 = vmul.f32 %v1634, %v1644
        %v1653 = vpack.c.bf16 %v1646, %v1645
        %v1654 = vpack.c.bf16 %v1648, %v1647
        %v1655 = vpack.c.bf16 %v1650, %v1649
        %v1656 = vpack.c.bf16 %v1652, %v1651
        %v1661 = vunpack.c.l.b16 %v1653
        %v1662 = vunpack.c.h.b16 %v1653
        %v1663 = vunpack.c.l.b16 %v1654
        %v1664 = vunpack.c.h.b16 %v1654
        %v1665 = vunpack.c.l.b16 %v1655
        %v1666 = vunpack.c.h.b16 %v1655
        %v1667 = vunpack.c.l.b16 %v1656
        %v1668 = vunpack.c.h.b16 %v1656
        %v1669 = vpack.c.b16 %v1661, %v1661
        %v1670 = vpack.c.b16 %v1662, %v1662
        %v1671 = vpack.c.b16 %v1663, %v1663
        %v1672 = vpack.c.b16 %v1664, %v1664
        %v1673 = vpack.c.b16 %v1665, %v1665
        %v1674 = vpack.c.b16 %v1666, %v1666
        %v1675 = vpack.c.b16 %v1667, %v1667
        %v1676 = vpack.c.b16 %v1668, %v1668
        %1677 = vrot.lane.b32.xlu0 %v1669, 64
        %v1678 = vpop.permute.xlu0 %1677
        %1679 = vrot.lane.b32.xlu0 %v1670, 64
        %v1680 = vpop.permute.xlu0 %1679
        %1681 = vrot.lane.b32.xlu0 %v1671, 64
        %v1682 = vpop.permute.xlu0 %1681
        %1683 = vrot.lane.b32.xlu0 %v1672, 64
        %v1684 = vpop.permute.xlu0 %1683
        %1685 = vrot.lane.b32.xlu0 %v1673, 64
        %v1686 = vpop.permute.xlu0 %1685
        %1687 = vrot.lane.b32.xlu0 %v1674, 64
        %v1688 = vpop.permute.xlu0 %1687
        %1689 = vrot.lane.b32.xlu0 %v1675, 64
        %v1690 = vpop.permute.xlu0 %1689
        %1691 = vrot.lane.b32.xlu0 %v1676, 64
        %v1692 = vpop.permute.xlu0 %1691
        %vm1701 = vcmask 781824
        %1702 = vst.msk [vmem:[#allocation2] sm:$0xf] %vm1701, %v1678
        %1703 = vst.msk [vmem:[#allocation2 + $0x4] sm:$0xf] %vm1701, %v1680
        %1704 = vst.msk [vmem:[#allocation2 + $0x8] sm:$0xf] %vm1701, %v1682
        %1705 = vst.msk [vmem:[#allocation2 + $0xc] sm:$0xf] %vm1701, %v1684
        %1706 = vst.msk [vmem:[#allocation2 + $0x10] sm:$0xf] %vm1701, %v1686
        %1707 = vst.msk [vmem:[#allocation2 + $0x14] sm:$0xf] %vm1701, %v1688
        %1708 = vst.msk [vmem:[#allocation2 + $0x18] sm:$0xf] %vm1701, %v1690
        %1709 = vst.msk [vmem:[#allocation2 + $0x1c] sm:$0xf] %vm1701, %v1692
        %1710 = vrot.lane.b32.xlu0 %v687, 32
        %v1711 = vpop.permute.xlu0 %1710
        %1712 = vrot.lane.b32.xlu0 %v690, 32
        %v1713 = vpop.permute.xlu0 %1712
        %1714 = vrot.lane.b32.xlu0 %v693, 32
        %v1715 = vpop.permute.xlu0 %1714
        %1716 = vrot.lane.b32.xlu0 %v696, 32
        %v1717 = vpop.permute.xlu0 %1716
        %1718 = vrot.lane.b32.xlu0 %v688, 32
        %v1719 = vpop.permute.xlu0 %1718
        %1720 = vrot.lane.b32.xlu0 %v691, 32
        %v1721 = vpop.permute.xlu0 %1720
        %1722 = vrot.lane.b32.xlu0 %v694, 32
        %v1723 = vpop.permute.xlu0 %1722
        %1724 = vrot.lane.b32.xlu0 %v697, 32
        %v1725 = vpop.permute.xlu0 %1724
        %v1727 = vsel %vm711, %v1711, 0
        %v1730 = vsel %vm711, %v1713, 0
        %v1733 = vsel %vm711, %v1715, 0
        %v1736 = vsel %vm711, %v1717, 0
        %v1739 = vsel %vm711, %v1719, 0
        %v1742 = vsel %vm711, %v1721, 0
        %v1745 = vsel %vm711, %v1723, 0
        %v1748 = vsel %vm711, %v1725, 0
        %1750 = vmatprep.subr.bf16.mxu0 0
        %1751 = vmatpush1.bf16.xpose.msra.mxu0 0
        %1752 = vmatprep.subr.bf16.mxu0 0
        %1753 = vmatpush1.bf16.xpose.msra.mxu0 0
        %1754 = vmatprep.subr.bf16.mxu0 0
        %1755 = vmatpush1.bf16.xpose.msra.mxu0 0
        %1756 = vmatprep.subr.bf16.mxu0 0
        %1757 = vmatpush1.bf16.xpose.msra.mxu0 0
        %1758 = vmatprep.subr.bf16.mxu0 0
        %1759 = vmatpush1.bf16.xpose.msra.mxu0 %v1748
        %1760 = vmatprep.subr.bf16.mxu0 0
        %1761 = vmatpush1.bf16.xpose.msra.mxu0 %v1745
        %1762 = vmatprep.subr.bf16.mxu0 0
        %1763 = vmatpush1.bf16.xpose.msra.mxu0 %v1742
        %1764 = vmatprep.subr.bf16.mxu0 0
        %1765 = vmatpush1.bf16.xpose.msra.mxu0 %v1739
        %1766 = vmatprep.subr.bf16.mxu0 0
        %1767 = vmatpush2.bf16.xpose.msra.mxu0 0
        %1768 = vmatprep.subr.bf16.mxu0 0
        %1769 = vmatpush2.bf16.xpose.msra.mxu0 0
        %1770 = vmatprep.subr.bf16.mxu0 0
        %1771 = vmatpush2.bf16.xpose.msra.mxu0 0
        %1772 = vmatprep.subr.bf16.mxu0 0
        %1773 = vmatpush2.bf16.xpose.msra.mxu0 0
        %1774 = vmatprep.subr.bf16.mxu0 0
        %1775 = vmatpush2.bf16.xpose.msra.mxu0 0
        %1776 = vmatprep.subr.bf16.mxu0 0
        %1777 = vmatpush2.bf16.xpose.msra.mxu0 0
        %1778 = vmatprep.subr.bf16.mxu0 0
        %1779 = vmatpush2.bf16.xpose.msra.mxu0 0
        %1780 = vmatprep.subr.bf16.mxu0 0
        %1781 = vmatpush2.bf16.xpose.msra.mxu0 0
        %1782 = vmatprep.mubr.bf16.mxu0 0
        %1783 = vmatmul.mubr.bf16.gmra.mxu0 %v1727
        %v1784 = vpop.f32.mrf.mxu0
        %v1785 = vadd.f32 0.0, %v1784
        %v1786 = vpop.f32.mrf.mxu0
        %v1787 = vpop.f32.mrf.mxu0
        %v1788 = vadd.f32 0.0, %v1787
        %v1789 = vpop.f32.mrf.mxu0
        %1790 = vmatprep.mubr.bf16.mxu0 0
        %1791 = vmatmul.mubr.bf16.gmra.mxu0 %v1730
        %v1792 = vpop.f32.mrf.mxu0
        %v1793 = vadd.f32 0.0, %v1792
        %v1794 = vpop.f32.mrf.mxu0
        %v1795 = vpop.f32.mrf.mxu0
        %v1796 = vadd.f32 0.0, %v1795
        %v1797 = vpop.f32.mrf.mxu0
        %1798 = vmatprep.mubr.bf16.mxu0 0
        %1799 = vmatmul.mubr.bf16.gmra.mxu0 %v1733
        %v1800 = vpop.f32.mrf.mxu0
        %v1801 = vadd.f32 0.0, %v1800
        %v1802 = vpop.f32.mrf.mxu0
        %v1803 = vpop.f32.mrf.mxu0
        %v1804 = vadd.f32 0.0, %v1803
        %v1805 = vpop.f32.mrf.mxu0
        %1806 = vmatprep.mubr.bf16.mxu0 0
        %1807 = vmatmul.mubr.bf16.gmra.mxu0 %v1736
        %v1808 = vpop.f32.mrf.mxu0
        %v1809 = vadd.f32 0.0, %v1808
        %v1810 = vpop.f32.mrf.mxu0
        %v1811 = vpop.f32.mrf.mxu0
        %v1812 = vadd.f32 0.0, %v1811
        %v1813 = vpop.f32.mrf.mxu0
        %1814 = vdwg.mxu0
        %v1815 = vsel %vm801, %v1785, -inf
        %1816 = vmax.xlane.f32.xlu0 %v1815
        %v1817 = vpop.xlane.xlu0 %1816
        %v1818 = vsel %vm801, %v1788, -inf
        %1819 = vmax.xlane.f32.xlu0 %v1818
        %v1820 = vpop.xlane.xlu0 %1819
        %v1821 = vsel %vm801, %v1793, -inf
        %1822 = vmax.xlane.f32.xlu0 %v1821
        %v1823 = vpop.xlane.xlu0 %1822
        %v1824 = vsel %vm801, %v1796, -inf
        %1825 = vmax.xlane.f32.xlu0 %v1824
        %v1826 = vpop.xlane.xlu0 %1825
        %v1827 = vsel %vm801, %v1801, -inf
        %1828 = vmax.xlane.f32.xlu0 %v1827
        %v1829 = vpop.xlane.xlu0 %1828
        %v1830 = vsel %vm801, %v1804, -inf
        %1831 = vmax.xlane.f32.xlu0 %v1830
        %v1832 = vpop.xlane.xlu0 %1831
        %v1833 = vsel %vm801, %v1809, -inf
        %1834 = vmax.xlane.f32.xlu0 %v1833
        %v1835 = vpop.xlane.xlu0 %1834
        %v1836 = vsel %vm801, %v1812, -inf
        %1837 = vmax.xlane.f32.xlu0 %v1836
        %v1838 = vpop.xlane.xlu0 %1837
        %v1839 = vsub.f32 %v1785, %v1817
        %v1840 = vsub.f32 %v1788, %v1820
        %v1841 = vsub.f32 %v1793, %v1823
        %v1842 = vsub.f32 %v1796, %v1826
        %v1843 = vsub.f32 %v1801, %v1829
        %v1844 = vsub.f32 %v1804, %v1832
        %v1845 = vsub.f32 %v1809, %v1835
        %v1846 = vsub.f32 %v1812, %v1838
        %v1847 = vmul.f32 %v1839, 1.442695
        %v1848 = vpow.pop %v1847
        %v1849 = vmul.f32 %v1840, 1.442695
        %v1850 = vpow.pop %v1849
        %v1851 = vmul.f32 %v1841, 1.442695
        %v1852 = vpow.pop %v1851
        %v1853 = vmul.f32 %v1842, 1.442695
        %v1854 = vpow.pop %v1853
        %v1855 = vmul.f32 %v1843, 1.442695
        %v1856 = vpow.pop %v1855
        %v1857 = vmul.f32 %v1844, 1.442695
        %v1858 = vpow.pop %v1857
        %v1859 = vmul.f32 %v1845, 1.442695
        %v1860 = vpow.pop %v1859
        %v1861 = vmul.f32 %v1846, 1.442695
        %v1862 = vpow.pop %v1861
        %v1863 = vsel %vm801, %v1848, 0.0
        %1864 = vadd.xlane.f32.xlu0 %v1863
        %v1865 = vpop.xlane.xlu0 %1864
        %v1866 = vsel %vm801, %v1850, 0.0
        %1867 = vadd.xlane.f32.xlu0 %v1866
        %v1868 = vpop.xlane.xlu0 %1867
        %v1869 = vsel %vm801, %v1852, 0.0
        %1870 = vadd.xlane.f32.xlu0 %v1869
        %v1871 = vpop.xlane.xlu0 %1870
        %v1872 = vsel %vm801, %v1854, 0.0
        %1873 = vadd.xlane.f32.xlu0 %v1872
        %v1874 = vpop.xlane.xlu0 %1873
        %v1875 = vsel %vm801, %v1856, 0.0
        %1876 = vadd.xlane.f32.xlu0 %v1875
        %v1877 = vpop.xlane.xlu0 %1876
        %v1878 = vsel %vm801, %v1858, 0.0
        %1879 = vadd.xlane.f32.xlu0 %v1878
        %v1880 = vpop.xlane.xlu0 %1879
        %v1881 = vsel %vm801, %v1860, 0.0
        %1882 = vadd.xlane.f32.xlu0 %v1881
        %v1883 = vpop.xlane.xlu0 %1882
        %v1884 = vsel %vm801, %v1862, 0.0
        %1885 = vadd.xlane.f32.xlu0 %v1884
        %v1886 = vpop.xlane.xlu0 %1885
        %v1887 = vpack.c.bf16 %v1850, %v1848
        %v1888 = vpack.c.bf16 %v1854, %v1852
        %v1889 = vpack.c.bf16 %v1858, %v1856
        %v1890 = vpack.c.bf16 %v1862, %v1860
        %1891 = vrot.lane.b32.xlu0 %v689, 32
        %v1892 = vpop.permute.xlu0 %1891
        %1893 = vrot.lane.b32.xlu0 %v692, 32
        %v1894 = vpop.permute.xlu0 %1893
        %1895 = vrot.lane.b32.xlu0 %v695, 32
        %v1896 = vpop.permute.xlu0 %1895
        %1897 = vrot.lane.b32.xlu0 %v698, 32
        %v1898 = vpop.permute.xlu0 %1897
        %v1904 = vsel %vm801, %v1887, 0
        %v1907 = vsel %vm801, %v1888, 0
        %v1910 = vsel %vm801, %v1889, 0
        %v1913 = vsel %vm801, %v1890, 0
        %1915 = vmatprep.subr.bf16.mxu0 0
        %1916 = vmatpush1.bf16.msra.mxu0 0
        %1917 = vmatprep.subr.bf16.mxu0 0
        %1918 = vmatpush1.bf16.msra.mxu0 0
        %1919 = vmatprep.subr.bf16.mxu0 0
        %1920 = vmatpush1.bf16.msra.mxu0 0
        %1921 = vmatprep.subr.bf16.mxu0 0
        %1922 = vmatpush1.bf16.msra.mxu0 0
        %1923 = vmatprep.subr.bf16.mxu0 0
        %1924 = vmatpush1.bf16.msra.mxu0 %v1898
        %1925 = vmatprep.subr.bf16.mxu0 0
        %1926 = vmatpush1.bf16.msra.mxu0 %v1896
        %1927 = vmatprep.subr.bf16.mxu0 0
        %1928 = vmatpush1.bf16.msra.mxu0 %v1894
        %1929 = vmatprep.subr.bf16.mxu0 0
        %1930 = vmatpush1.bf16.msra.mxu0 %v1892
        %1931 = vmatprep.subr.bf16.mxu0 0
        %1932 = vmatpush2.bf16.msra.mxu0 0
        %1933 = vmatprep.subr.bf16.mxu0 0
        %1934 = vmatpush2.bf16.msra.mxu0 0
        %1935 = vmatprep.subr.bf16.mxu0 0
        %1936 = vmatpush2.bf16.msra.mxu0 0
        %1937 = vmatprep.subr.bf16.mxu0 0
        %1938 = vmatpush2.bf16.msra.mxu0 0
        %1939 = vmatprep.subr.bf16.mxu0 0
        %1940 = vmatpush2.bf16.msra.mxu0 0
        %1941 = vmatprep.subr.bf16.mxu0 0
        %1942 = vmatpush2.bf16.msra.mxu0 0
        %1943 = vmatprep.subr.bf16.mxu0 0
        %1944 = vmatpush2.bf16.msra.mxu0 0
        %1945 = vmatprep.subr.bf16.mxu0 0
        %1946 = vmatpush2.bf16.msra.mxu0 0
        %1947 = vmatprep.mubr.bf16.mxu0 0
        %1948 = vmatmul.mubr.bf16.gmra.mxu0 %v1904
        %v1949 = vpop.f32.mrf.mxu0
        %v1950 = vadd.f32 0.0, %v1949
        %v1951 = vpop.f32.mrf.mxu0
        %v1952 = vpop.f32.mrf.mxu0
        %v1953 = vadd.f32 0.0, %v1952
        %v1954 = vpop.f32.mrf.mxu0
        %1955 = vmatprep.mubr.bf16.mxu0 0
        %1956 = vmatmul.mubr.bf16.gmra.mxu0 %v1907
        %v1957 = vpop.f32.mrf.mxu0
        %v1958 = vadd.f32 0.0, %v1957
        %v1959 = vpop.f32.mrf.mxu0
        %v1960 = vpop.f32.mrf.mxu0
        %v1961 = vadd.f32 0.0, %v1960
        %v1962 = vpop.f32.mrf.mxu0
        %1963 = vmatprep.mubr.bf16.mxu0 0
        %1964 = vmatmul.mubr.bf16.gmra.mxu0 %v1910
        %v1965 = vpop.f32.mrf.mxu0
        %v1966 = vadd.f32 0.0, %v1965
        %v1967 = vpop.f32.mrf.mxu0
        %v1968 = vpop.f32.mrf.mxu0
        %v1969 = vadd.f32 0.0, %v1968
        %v1970 = vpop.f32.mrf.mxu0
        %1971 = vmatprep.mubr.bf16.mxu0 0
        %1972 = vmatmul.mubr.bf16.gmra.mxu0 %v1913
        %v1973 = vpop.f32.mrf.mxu0
        %v1974 = vadd.f32 0.0, %v1973
        %v1975 = vpop.f32.mrf.mxu0
        %v1976 = vpop.f32.mrf.mxu0
        %v1977 = vadd.f32 0.0, %v1976
        %v1978 = vpop.f32.mrf.mxu0
        %1979 = vdwg.mxu0
        %v1980 = vrcp.pop %v1865
        %v1981 = vrcp.pop %v1868
        %v1982 = vrcp.pop %v1871
        %v1983 = vrcp.pop %v1874
        %v1984 = vrcp.pop %v1877
        %v1985 = vrcp.pop %v1880
        %v1986 = vrcp.pop %v1883
        %v1987 = vrcp.pop %v1886
        %v1988 = vmul.f32 %v1950, %v1980
        %v1989 = vmul.f32 %v1953, %v1981
        %v1990 = vmul.f32 %v1958, %v1982
        %v1991 = vmul.f32 %v1961, %v1983
        %v1992 = vmul.f32 %v1966, %v1984
        %v1993 = vmul.f32 %v1969, %v1985
        %v1994 = vmul.f32 %v1974, %v1986
        %v1995 = vmul.f32 %v1977, %v1987
        %v1996 = vpack.c.bf16 %v1989, %v1988
        %v1997 = vpack.c.bf16 %v1991, %v1990
        %v1998 = vpack.c.bf16 %v1993, %v1992
        %v1999 = vpack.c.bf16 %v1995, %v1994
        %v2004 = vunpack.c.l.b16 %v1996
        %v2005 = vunpack.c.h.b16 %v1996
        %v2006 = vunpack.c.l.b16 %v1997
        %v2007 = vunpack.c.h.b16 %v1997
        %v2008 = vunpack.c.l.b16 %v1998
        %v2009 = vunpack.c.h.b16 %v1998
        %v2010 = vunpack.c.l.b16 %v1999
        %v2011 = vunpack.c.h.b16 %v1999
        %v2012 = vpack.c.b16 %v2004, %v2004
        %v2013 = vpack.c.b16 %v2005, %v2005
        %v2014 = vpack.c.b16 %v2006, %v2006
        %v2015 = vpack.c.b16 %v2007, %v2007
        %v2016 = vpack.c.b16 %v2008, %v2008
        %v2017 = vpack.c.b16 %v2009, %v2009
        %v2018 = vpack.c.b16 %v2010, %v2010
        %v2019 = vpack.c.b16 %v2011, %v2011
        %2020 = vrot.lane.b32.xlu0 %v2012, 96
        %v2021 = vpop.permute.xlu0 %2020
        %2022 = vrot.lane.b32.xlu0 %v2013, 96
        %v2023 = vpop.permute.xlu0 %2022
        %2024 = vrot.lane.b32.xlu0 %v2014, 96
        %v2025 = vpop.permute.xlu0 %2024
        %2026 = vrot.lane.b32.xlu0 %v2015, 96
        %v2027 = vpop.permute.xlu0 %2026
        %2028 = vrot.lane.b32.xlu0 %v2016, 96
        %v2029 = vpop.permute.xlu0 %2028
        %2030 = vrot.lane.b32.xlu0 %v2017, 96
        %v2031 = vpop.permute.xlu0 %2030
        %2032 = vrot.lane.b32.xlu0 %v2018, 96
        %v2033 = vpop.permute.xlu0 %2032
        %2034 = vrot.lane.b32.xlu0 %v2019, 96
        %v2035 = vpop.permute.xlu0 %2034
        %vm2044 = vcmask 1044224
        %2045 = vst.msk [vmem:[#allocation2] sm:$0xf] %vm2044, %v2021
        %2046 = vst.msk [vmem:[#allocation2 + $0x4] sm:$0xf] %vm2044, %v2023
        %2047 = vst.msk [vmem:[#allocation2 + $0x8] sm:$0xf] %vm2044, %v2025
        %2048 = vst.msk [vmem:[#allocation2 + $0xc] sm:$0xf] %vm2044, %v2027
        %2049 = vst.msk [vmem:[#allocation2 + $0x10] sm:$0xf] %vm2044, %v2029
        %2050 = vst.msk [vmem:[#allocation2 + $0x14] sm:$0xf] %vm2044, %v2031
        %2051 = vst.msk [vmem:[#allocation2 + $0x18] sm:$0xf] %vm2044, %v2033
        %2052 = vst.msk [vmem:[#allocation2 + $0x1c] sm:$0xf] %vm2044, %v2035
        %v2054 = vsel %vm711, %v699, 0
        %v2057 = vsel %vm711, %v702, 0
        %v2060 = vsel %vm711, %v705, 0
        %v2063 = vsel %vm711, %v708, 0
        %v2066 = vsel %vm711, %v700, 0
        %v2069 = vsel %vm711, %v703, 0
        %v2072 = vsel %vm711, %v706, 0
        %v2075 = vsel %vm711, %v709, 0
        %2077 = vmatprep.subr.bf16.mxu0 0
        %2078 = vmatpush1.bf16.xpose.msra.mxu0 0
        %2079 = vmatprep.subr.bf16.mxu0 0
        %2080 = vmatpush1.bf16.xpose.msra.mxu0 0
        %2081 = vmatprep.subr.bf16.mxu0 0
        %2082 = vmatpush1.bf16.xpose.msra.mxu0 0
        %2083 = vmatprep.subr.bf16.mxu0 0
        %2084 = vmatpush1.bf16.xpose.msra.mxu0 0
        %2085 = vmatprep.subr.bf16.mxu0 0
        %2086 = vmatpush1.bf16.xpose.msra.mxu0 %v2075
        %2087 = vmatprep.subr.bf16.mxu0 0
        %2088 = vmatpush1.bf16.xpose.msra.mxu0 %v2072
        %2089 = vmatprep.subr.bf16.mxu0 0
        %2090 = vmatpush1.bf16.xpose.msra.mxu0 %v2069
        %2091 = vmatprep.subr.bf16.mxu0 0
        %2092 = vmatpush1.bf16.xpose.msra.mxu0 %v2066
        %2093 = vmatprep.subr.bf16.mxu0 0
        %2094 = vmatpush2.bf16.xpose.msra.mxu0 0
        %2095 = vmatprep.subr.bf16.mxu0 0
        %2096 = vmatpush2.bf16.xpose.msra.mxu0 0
        %2097 = vmatprep.subr.bf16.mxu0 0
        %2098 = vmatpush2.bf16.xpose.msra.mxu0 0
        %2099 = vmatprep.subr.bf16.mxu0 0
        %2100 = vmatpush2.bf16.xpose.msra.mxu0 0
        %2101 = vmatprep.subr.bf16.mxu0 0
        %2102 = vmatpush2.bf16.xpose.msra.mxu0 0
        %2103 = vmatprep.subr.bf16.mxu0 0
        %2104 = vmatpush2.bf16.xpose.msra.mxu0 0
        %2105 = vmatprep.subr.bf16.mxu0 0
        %2106 = vmatpush2.bf16.xpose.msra.mxu0 0
        %2107 = vmatprep.subr.bf16.mxu0 0
        %2108 = vmatpush2.bf16.xpose.msra.mxu0 0
        %2109 = vmatprep.mubr.bf16.mxu0 0
        %2110 = vmatmul.mubr.bf16.gmra.mxu0 %v2054
        %v2111 = vpop.f32.mrf.mxu0
        %v2112 = vadd.f32 0.0, %v2111
        %v2113 = vpop.f32.mrf.mxu0
        %v2114 = vpop.f32.mrf.mxu0
        %v2115 = vadd.f32 0.0, %v2114
        %v2116 = vpop.f32.mrf.mxu0
        %2117 = vmatprep.mubr.bf16.mxu0 0
        %2118 = vmatmul.mubr.bf16.gmra.mxu0 %v2057
        %v2119 = vpop.f32.mrf.mxu0
        %v2120 = vadd.f32 0.0, %v2119
        %v2121 = vpop.f32.mrf.mxu0
        %v2122 = vpop.f32.mrf.mxu0
        %v2123 = vadd.f32 0.0, %v2122
        %v2124 = vpop.f32.mrf.mxu0
        %2125 = vmatprep.mubr.bf16.mxu0 0
        %2126 = vmatmul.mubr.bf16.gmra.mxu0 %v2060
        %v2127 = vpop.f32.mrf.mxu0
        %v2128 = vadd.f32 0.0, %v2127
        %v2129 = vpop.f32.mrf.mxu0
        %v2130 = vpop.f32.mrf.mxu0
        %v2131 = vadd.f32 0.0, %v2130
        %v2132 = vpop.f32.mrf.mxu0
        %2133 = vmatprep.mubr.bf16.mxu0 0
        %2134 = vmatmul.mubr.bf16.gmra.mxu0 %v2063
        %v2135 = vpop.f32.mrf.mxu0
        %v2136 = vadd.f32 0.0, %v2135
        %v2137 = vpop.f32.mrf.mxu0
        %v2138 = vpop.f32.mrf.mxu0
        %v2139 = vadd.f32 0.0, %v2138
        %v2140 = vpop.f32.mrf.mxu0
        %2141 = vdwg.mxu0
        %v2142 = vsel %vm801, %v2112, -inf
        %2143 = vmax.xlane.f32.xlu0 %v2142
        %v2144 = vpop.xlane.xlu0 %2143
        %v2145 = vsel %vm801, %v2115, -inf
        %2146 = vmax.xlane.f32.xlu0 %v2145
        %v2147 = vpop.xlane.xlu0 %2146
        %v2148 = vsel %vm801, %v2120, -inf
        %2149 = vmax.xlane.f32.xlu0 %v2148
        %v2150 = vpop.xlane.xlu0 %2149
        %v2151 = vsel %vm801, %v2123, -inf
        %2152 = vmax.xlane.f32.xlu0 %v2151
        %v2153 = vpop.xlane.xlu0 %2152
        %v2154 = vsel %vm801, %v2128, -inf
        %2155 = vmax.xlane.f32.xlu0 %v2154
        %v2156 = vpop.xlane.xlu0 %2155
        %v2157 = vsel %vm801, %v2131, -inf
        %2158 = vmax.xlane.f32.xlu0 %v2157
        %v2159 = vpop.xlane.xlu0 %2158
        %v2160 = vsel %vm801, %v2136, -inf
        %2161 = vmax.xlane.f32.xlu0 %v2160
        %v2162 = vpop.xlane.xlu0 %2161
        %v2163 = vsel %vm801, %v2139, -inf
        %2164 = vmax.xlane.f32.xlu0 %v2163
        %v2165 = vpop.xlane.xlu0 %2164
        %v2166 = vsub.f32 %v2112, %v2144
        %v2167 = vsub.f32 %v2115, %v2147
        %v2168 = vsub.f32 %v2120, %v2150
        %v2169 = vsub.f32 %v2123, %v2153
        %v2170 = vsub.f32 %v2128, %v2156
        %v2171 = vsub.f32 %v2131, %v2159
        %v2172 = vsub.f32 %v2136, %v2162
        %v2173 = vsub.f32 %v2139, %v2165
        %v2174 = vmul.f32 %v2166, 1.442695
        %v2175 = vpow.pop %v2174
        %v2176 = vmul.f32 %v2167, 1.442695
        %v2177 = vpow.pop %v2176
        %v2178 = vmul.f32 %v2168, 1.442695
        %v2179 = vpow.pop %v2178
        %v2180 = vmul.f32 %v2169, 1.442695
        %v2181 = vpow.pop %v2180
        %v2182 = vmul.f32 %v2170, 1.442695
        %v2183 = vpow.pop %v2182
        %v2184 = vmul.f32 %v2171, 1.442695
        %v2185 = vpow.pop %v2184
        %v2186 = vmul.f32 %v2172, 1.442695
        %v2187 = vpow.pop %v2186
        %v2188 = vmul.f32 %v2173, 1.442695
        %v2189 = vpow.pop %v2188
        %v2190 = vsel %vm801, %v2175, 0.0
        %2191 = vadd.xlane.f32.xlu0 %v2190
        %v2192 = vpop.xlane.xlu0 %2191
        %v2193 = vsel %vm801, %v2177, 0.0
        %2194 = vadd.xlane.f32.xlu0 %v2193
        %v2195 = vpop.xlane.xlu0 %2194
        %v2196 = vsel %vm801, %v2179, 0.0
        %2197 = vadd.xlane.f32.xlu0 %v2196
        %v2198 = vpop.xlane.xlu0 %2197
        %v2199 = vsel %vm801, %v2181, 0.0
        %2200 = vadd.xlane.f32.xlu0 %v2199
        %v2201 = vpop.xlane.xlu0 %2200
        %v2202 = vsel %vm801, %v2183, 0.0
        %2203 = vadd.xlane.f32.xlu0 %v2202
        %v2204 = vpop.xlane.xlu0 %2203
        %v2205 = vsel %vm801, %v2185, 0.0
        %2206 = vadd.xlane.f32.xlu0 %v2205
        %v2207 = vpop.xlane.xlu0 %2206
        %v2208 = vsel %vm801, %v2187, 0.0
        %2209 = vadd.xlane.f32.xlu0 %v2208
        %v2210 = vpop.xlane.xlu0 %2209
        %v2211 = vsel %vm801, %v2189, 0.0
        %2212 = vadd.xlane.f32.xlu0 %v2211
        %v2213 = vpop.xlane.xlu0 %2212
        %v2214 = vpack.c.bf16 %v2177, %v2175
        %v2215 = vpack.c.bf16 %v2181, %v2179
        %v2216 = vpack.c.bf16 %v2185, %v2183
        %v2217 = vpack.c.bf16 %v2189, %v2187
        %v2219 = vsel %vm801, %v2214, 0
        %v2222 = vsel %vm801, %v2215, 0
        %v2225 = vsel %vm801, %v2216, 0
        %v2228 = vsel %vm801, %v2217, 0
        %2230 = vmatprep.subr.bf16.mxu0 0
        %2231 = vmatpush1.bf16.msra.mxu0 0
        %2232 = vmatprep.subr.bf16.mxu0 0
        %2233 = vmatpush1.bf16.msra.mxu0 0
        %2234 = vmatprep.subr.bf16.mxu0 0
        %2235 = vmatpush1.bf16.msra.mxu0 0
        %2236 = vmatprep.subr.bf16.mxu0 0
        %2237 = vmatpush1.bf16.msra.mxu0 0
        %2238 = vmatprep.subr.bf16.mxu0 0
        %2239 = vmatpush1.bf16.msra.mxu0 %v710
        %2240 = vmatprep.subr.bf16.mxu0 0
        %2241 = vmatpush1.bf16.msra.mxu0 %v707
        %2242 = vmatprep.subr.bf16.mxu0 0
        %2243 = vmatpush1.bf16.msra.mxu0 %v704
        %2244 = vmatprep.subr.bf16.mxu0 0
        %2245 = vmatpush1.bf16.msra.mxu0 %v701
        %2246 = vmatprep.subr.bf16.mxu0 0
        %2247 = vmatpush2.bf16.msra.mxu0 0
        %2248 = vmatprep.subr.bf16.mxu0 0
        %2249 = vmatpush2.bf16.msra.mxu0 0
        %2250 = vmatprep.subr.bf16.mxu0 0
        %2251 = vmatpush2.bf16.msra.mxu0 0
        %2252 = vmatprep.subr.bf16.mxu0 0
        %2253 = vmatpush2.bf16.msra.mxu0 0
        %2254 = vmatprep.subr.bf16.mxu0 0
        %2255 = vmatpush2.bf16.msra.mxu0 0
        %2256 = vmatprep.subr.bf16.mxu0 0
        %2257 = vmatpush2.bf16.msra.mxu0 0
        %2258 = vmatprep.subr.bf16.mxu0 0
        %2259 = vmatpush2.bf16.msra.mxu0 0
        %2260 = vmatprep.subr.bf16.mxu0 0
        %2261 = vmatpush2.bf16.msra.mxu0 0
        %2262 = vmatprep.mubr.bf16.mxu0 0
        %2263 = vmatmul.mubr.bf16.gmra.mxu0 %v2219
        %v2264 = vpop.f32.mrf.mxu0
        %v2265 = vadd.f32 0.0, %v2264
        %v2266 = vpop.f32.mrf.mxu0
        %v2267 = vpop.f32.mrf.mxu0
        %v2268 = vadd.f32 0.0, %v2267
        %v2269 = vpop.f32.mrf.mxu0
        %2270 = vmatprep.mubr.bf16.mxu0 0
        %2271 = vmatmul.mubr.bf16.gmra.mxu0 %v2222
        %v2272 = vpop.f32.mrf.mxu0
        %v2273 = vadd.f32 0.0, %v2272
        %v2274 = vpop.f32.mrf.mxu0
        %v2275 = vpop.f32.mrf.mxu0
        %v2276 = vadd.f32 0.0, %v2275
        %v2277 = vpop.f32.mrf.mxu0
        %2278 = vmatprep.mubr.bf16.mxu0 0
        %2279 = vmatmul.mubr.bf16.gmra.mxu0 %v2225
        %v2280 = vpop.f32.mrf.mxu0
        %v2281 = vadd.f32 0.0, %v2280
        %v2282 = vpop.f32.mrf.mxu0
        %v2283 = vpop.f32.mrf.mxu0
        %v2284 = vadd.f32 0.0, %v2283
        %v2285 = vpop.f32.mrf.mxu0
        %2286 = vmatprep.mubr.bf16.mxu0 0
        %2287 = vmatmul.mubr.bf16.gmra.mxu0 %v2228
        %v2288 = vpop.f32.mrf.mxu0
        %v2289 = vadd.f32 0.0, %v2288
        %v2290 = vpop.f32.mrf.mxu0
        %v2291 = vpop.f32.mrf.mxu0
        %v2292 = vadd.f32 0.0, %v2291
        %v2293 = vpop.f32.mrf.mxu0
        %2294 = vdwg.mxu0
        %v2295 = vrcp.pop %v2192
        %v2296 = vrcp.pop %v2195
        %v2297 = vrcp.pop %v2198
        %v2298 = vrcp.pop %v2201
        %v2299 = vrcp.pop %v2204
        %v2300 = vrcp.pop %v2207
        %v2301 = vrcp.pop %v2210
        %v2302 = vrcp.pop %v2213
        %v2303 = vmul.f32 %v2265, %v2295
        %v2304 = vmul.f32 %v2268, %v2296
        %v2305 = vmul.f32 %v2273, %v2297
        %v2306 = vmul.f32 %v2276, %v2298
        %v2307 = vmul.f32 %v2281, %v2299
        %v2308 = vmul.f32 %v2284, %v2300
        %v2309 = vmul.f32 %v2289, %v2301
        %v2310 = vmul.f32 %v2292, %v2302
        %v2311 = vpack.c.bf16 %v2304, %v2303
        %v2312 = vpack.c.bf16 %v2306, %v2305
        %v2313 = vpack.c.bf16 %v2308, %v2307
        %v2314 = vpack.c.bf16 %v2310, %v2309
        %v2319 = vunpack.c.l.b16 %v2311
        %v2320 = vunpack.c.h.b16 %v2311
        %v2321 = vunpack.c.l.b16 %v2312
        %v2322 = vunpack.c.h.b16 %v2312
        %v2323 = vunpack.c.l.b16 %v2313
        %v2324 = vunpack.c.h.b16 %v2313
        %v2325 = vunpack.c.l.b16 %v2314
        %v2326 = vunpack.c.h.b16 %v2314
        %v2327 = vpack.c.b16 %v2319, %v2319
        %v2328 = vpack.c.b16 %v2320, %v2320
        %v2329 = vpack.c.b16 %v2321, %v2321
        %v2330 = vpack.c.b16 %v2322, %v2322
        %v2331 = vpack.c.b16 %v2323, %v2323
        %v2332 = vpack.c.b16 %v2324, %v2324
        %v2333 = vpack.c.b16 %v2325, %v2325
        %v2334 = vpack.c.b16 %v2326, %v2326
        %2343 = vst.msk [vmem:[#allocation2 + $0x20] sm:$0xf] %vm1003, %v2327
        %2344 = vst.msk [vmem:[#allocation2 + $0x24] sm:$0xf] %vm1003, %v2328
        %2345 = vst.msk [vmem:[#allocation2 + $0x28] sm:$0xf] %vm1003, %v2329
        %2346 = vst.msk [vmem:[#allocation2 + $0x2c] sm:$0xf] %vm1003, %v2330
        %2347 = vst.msk [vmem:[#allocation2 + $0x30] sm:$0xf] %vm1003, %v2331
        %2348 = vst.msk [vmem:[#allocation2 + $0x34] sm:$0xf] %vm1003, %v2332
        %2349 = vst.msk [vmem:[#allocation2 + $0x38] sm:$0xf] %vm1003, %v2333
        %2350 = vst.msk [vmem:[#allocation2 + $0x3c] sm:$0xf] %vm1003, %v2334
        %2355 = vrot.lane.b32.xlu0 %v699, 96
        %v2356 = vpop.permute.xlu0 %2355
        %2357 = vrot.lane.b32.xlu0 %v702, 96
        %v2358 = vpop.permute.xlu0 %2357
        %2359 = vrot.lane.b32.xlu0 %v705, 96
        %v2360 = vpop.permute.xlu0 %2359
        %2361 = vrot.lane.b32.xlu0 %v708, 96
        %v2362 = vpop.permute.xlu0 %2361
        %2367 = vrot.lane.b32.xlu0 %v700, 96
        %v2368 = vpop.permute.xlu0 %2367
        %2369 = vrot.lane.b32.xlu0 %v703, 96
        %v2370 = vpop.permute.xlu0 %2369
        %2371 = vrot.lane.b32.xlu0 %v706, 96
        %v2372 = vpop.permute.xlu0 %2371
        %2373 = vrot.lane.b32.xlu0 %v709, 96
        %v2374 = vpop.permute.xlu0 %2373
        %v2376 = vsel %vm711, %v2356, 0
        %v2379 = vsel %vm711, %v2358, 0
        %v2382 = vsel %vm711, %v2360, 0
        %v2385 = vsel %vm711, %v2362, 0
        %v2388 = vsel %vm711, %v2368, 0
        %v2391 = vsel %vm711, %v2370, 0
        %v2394 = vsel %vm711, %v2372, 0
        %v2397 = vsel %vm711, %v2374, 0
        %2399 = vmatprep.subr.bf16.mxu0 0
        %2400 = vmatpush1.bf16.xpose.msra.mxu0 0
        %2401 = vmatprep.subr.bf16.mxu0 0
        %2402 = vmatpush1.bf16.xpose.msra.mxu0 0
        %2403 = vmatprep.subr.bf16.mxu0 0
        %2404 = vmatpush1.bf16.xpose.msra.mxu0 0
        %2405 = vmatprep.subr.bf16.mxu0 0
        %2406 = vmatpush1.bf16.xpose.msra.mxu0 0
        %2407 = vmatprep.subr.bf16.mxu0 0
        %2408 = vmatpush1.bf16.xpose.msra.mxu0 %v2397
        %2409 = vmatprep.subr.bf16.mxu0 0
        %2410 = vmatpush1.bf16.xpose.msra.mxu0 %v2394
        %2411 = vmatprep.subr.bf16.mxu0 0
        %2412 = vmatpush1.bf16.xpose.msra.mxu0 %v2391
        %2413 = vmatprep.subr.bf16.mxu0 0
        %2414 = vmatpush1.bf16.xpose.msra.mxu0 %v2388
        %2415 = vmatprep.subr.bf16.mxu0 0
        %2416 = vmatpush2.bf16.xpose.msra.mxu0 0
        %2417 = vmatprep.subr.bf16.mxu0 0
        %2418 = vmatpush2.bf16.xpose.msra.mxu0 0
        %2419 = vmatprep.subr.bf16.mxu0 0
        %2420 = vmatpush2.bf16.xpose.msra.mxu0 0
        %2421 = vmatprep.subr.bf16.mxu0 0
        %2422 = vmatpush2.bf16.xpose.msra.mxu0 0
        %2423 = vmatprep.subr.bf16.mxu0 0
        %2424 = vmatpush2.bf16.xpose.msra.mxu0 0
        %2425 = vmatprep.subr.bf16.mxu0 0
        %2426 = vmatpush2.bf16.xpose.msra.mxu0 0
        %2427 = vmatprep.subr.bf16.mxu0 0
        %2428 = vmatpush2.bf16.xpose.msra.mxu0 0
        %2429 = vmatprep.subr.bf16.mxu0 0
        %2430 = vmatpush2.bf16.xpose.msra.mxu0 0
        %2431 = vmatprep.mubr.bf16.mxu0 0
        %2432 = vmatmul.mubr.bf16.gmra.mxu0 %v2376
        %v2433 = vpop.f32.mrf.mxu0
        %v2434 = vadd.f32 0.0, %v2433
        %v2435 = vpop.f32.mrf.mxu0
        %v2436 = vpop.f32.mrf.mxu0
        %v2437 = vadd.f32 0.0, %v2436
        %v2438 = vpop.f32.mrf.mxu0
        %2439 = vmatprep.mubr.bf16.mxu0 0
        %2440 = vmatmul.mubr.bf16.gmra.mxu0 %v2379
        %v2441 = vpop.f32.mrf.mxu0
        %v2442 = vadd.f32 0.0, %v2441
        %v2443 = vpop.f32.mrf.mxu0
        %v2444 = vpop.f32.mrf.mxu0
        %v2445 = vadd.f32 0.0, %v2444
        %v2446 = vpop.f32.mrf.mxu0
        %2447 = vmatprep.mubr.bf16.mxu0 0
        %2448 = vmatmul.mubr.bf16.gmra.mxu0 %v2382
        %v2449 = vpop.f32.mrf.mxu0
        %v2450 = vadd.f32 0.0, %v2449
        %v2451 = vpop.f32.mrf.mxu0
        %v2452 = vpop.f32.mrf.mxu0
        %v2453 = vadd.f32 0.0, %v2452
        %v2454 = vpop.f32.mrf.mxu0
        %2455 = vmatprep.mubr.bf16.mxu0 0
        %2456 = vmatmul.mubr.bf16.gmra.mxu0 %v2385
        %v2457 = vpop.f32.mrf.mxu0
        %v2458 = vadd.f32 0.0, %v2457
        %v2459 = vpop.f32.mrf.mxu0
        %v2460 = vpop.f32.mrf.mxu0
        %v2461 = vadd.f32 0.0, %v2460
        %v2462 = vpop.f32.mrf.mxu0
        %2463 = vdwg.mxu0
        %v2464 = vsel %vm801, %v2434, -inf
        %2465 = vmax.xlane.f32.xlu0 %v2464
        %v2466 = vpop.xlane.xlu0 %2465
        %v2467 = vsel %vm801, %v2437, -inf
        %2468 = vmax.xlane.f32.xlu0 %v2467
        %v2469 = vpop.xlane.xlu0 %2468
        %v2470 = vsel %vm801, %v2442, -inf
        %2471 = vmax.xlane.f32.xlu0 %v2470
        %v2472 = vpop.xlane.xlu0 %2471
        %v2473 = vsel %vm801, %v2445, -inf
        %2474 = vmax.xlane.f32.xlu0 %v2473
        %v2475 = vpop.xlane.xlu0 %2474
        %v2476 = vsel %vm801, %v2450, -inf
        %2477 = vmax.xlane.f32.xlu0 %v2476
        %v2478 = vpop.xlane.xlu0 %2477
        %v2479 = vsel %vm801, %v2453, -inf
        %2480 = vmax.xlane.f32.xlu0 %v2479
        %v2481 = vpop.xlane.xlu0 %2480
        %v2482 = vsel %vm801, %v2458, -inf
        %2483 = vmax.xlane.f32.xlu0 %v2482
        %v2484 = vpop.xlane.xlu0 %2483
        %v2485 = vsel %vm801, %v2461, -inf
        %2486 = vmax.xlane.f32.xlu0 %v2485
        %v2487 = vpop.xlane.xlu0 %2486
        %v2488 = vsub.f32 %v2434, %v2466
        %v2489 = vsub.f32 %v2437, %v2469
        %v2490 = vsub.f32 %v2442, %v2472
        %v2491 = vsub.f32 %v2445, %v2475
        %v2492 = vsub.f32 %v2450, %v2478
        %v2493 = vsub.f32 %v2453, %v2481
        %v2494 = vsub.f32 %v2458, %v2484
        %v2495 = vsub.f32 %v2461, %v2487
        %v2496 = vmul.f32 %v2488, 1.442695
        %v2497 = vpow.pop %v2496
        %v2498 = vmul.f32 %v2489, 1.442695
        %v2499 = vpow.pop %v2498
        %v2500 = vmul.f32 %v2490, 1.442695
        %v2501 = vpow.pop %v2500
        %v2502 = vmul.f32 %v2491, 1.442695
        %v2503 = vpow.pop %v2502
        %v2504 = vmul.f32 %v2492, 1.442695
        %v2505 = vpow.pop %v2504
        %v2506 = vmul.f32 %v2493, 1.442695
        %v2507 = vpow.pop %v2506
        %v2508 = vmul.f32 %v2494, 1.442695
        %v2509 = vpow.pop %v2508
        %v2510 = vmul.f32 %v2495, 1.442695
        %v2511 = vpow.pop %v2510
        %v2512 = vsel %vm801, %v2497, 0.0
        %2513 = vadd.xlane.f32.xlu0 %v2512
        %v2514 = vpop.xlane.xlu0 %2513
        %v2515 = vsel %vm801, %v2499, 0.0
        %2516 = vadd.xlane.f32.xlu0 %v2515
        %v2517 = vpop.xlane.xlu0 %2516
        %v2518 = vsel %vm801, %v2501, 0.0
        %2519 = vadd.xlane.f32.xlu0 %v2518
        %v2520 = vpop.xlane.xlu0 %2519
        %v2521 = vsel %vm801, %v2503, 0.0
        %2522 = vadd.xlane.f32.xlu0 %v2521
        %v2523 = vpop.xlane.xlu0 %2522
        %v2524 = vsel %vm801, %v2505, 0.0
        %2525 = vadd.xlane.f32.xlu0 %v2524
        %v2526 = vpop.xlane.xlu0 %2525
        %v2527 = vsel %vm801, %v2507, 0.0
        %2528 = vadd.xlane.f32.xlu0 %v2527
        %v2529 = vpop.xlane.xlu0 %2528
        %v2530 = vsel %vm801, %v2509, 0.0
        %2531 = vadd.xlane.f32.xlu0 %v2530
        %v2532 = vpop.xlane.xlu0 %2531
        %v2533 = vsel %vm801, %v2511, 0.0
        %2534 = vadd.xlane.f32.xlu0 %v2533
        %v2535 = vpop.xlane.xlu0 %2534
        %v2536 = vpack.c.bf16 %v2499, %v2497
        %v2537 = vpack.c.bf16 %v2503, %v2501
        %v2538 = vpack.c.bf16 %v2507, %v2505
        %v2539 = vpack.c.bf16 %v2511, %v2509
        %2544 = vrot.lane.b32.xlu0 %v701, 96
        %v2545 = vpop.permute.xlu0 %2544
        %2546 = vrot.lane.b32.xlu0 %v704, 96
        %v2547 = vpop.permute.xlu0 %2546
        %2548 = vrot.lane.b32.xlu0 %v707, 96
        %v2549 = vpop.permute.xlu0 %2548
        %2550 = vrot.lane.b32.xlu0 %v710, 96
        %v2551 = vpop.permute.xlu0 %2550
        %v2557 = vsel %vm801, %v2536, 0
        %v2560 = vsel %vm801, %v2537, 0
        %v2563 = vsel %vm801, %v2538, 0
        %v2566 = vsel %vm801, %v2539, 0
        %2568 = vmatprep.subr.bf16.mxu0 0
        %2569 = vmatpush1.bf16.msra.mxu0 0
        %2570 = vmatprep.subr.bf16.mxu0 0
        %2571 = vmatpush1.bf16.msra.mxu0 0
        %2572 = vmatprep.subr.bf16.mxu0 0
        %2573 = vmatpush1.bf16.msra.mxu0 0
        %2574 = vmatprep.subr.bf16.mxu0 0
        %2575 = vmatpush1.bf16.msra.mxu0 0
        %2576 = vmatprep.subr.bf16.mxu0 0
        %2577 = vmatpush1.bf16.msra.mxu0 %v2551
        %2578 = vmatprep.subr.bf16.mxu0 0
        %2579 = vmatpush1.bf16.msra.mxu0 %v2549
        %2580 = vmatprep.subr.bf16.mxu0 0
        %2581 = vmatpush1.bf16.msra.mxu0 %v2547
        %2582 = vmatprep.subr.bf16.mxu0 0
        %2583 = vmatpush1.bf16.msra.mxu0 %v2545
        %2584 = vmatprep.subr.bf16.mxu0 0
        %2585 = vmatpush2.bf16.msra.mxu0 0
        %2586 = vmatprep.subr.bf16.mxu0 0
        %2587 = vmatpush2.bf16.msra.mxu0 0
        %2588 = vmatprep.subr.bf16.mxu0 0
        %2589 = vmatpush2.bf16.msra.mxu0 0
        %2590 = vmatprep.subr.bf16.mxu0 0
        %2591 = vmatpush2.bf16.msra.mxu0 0
        %2592 = vmatprep.subr.bf16.mxu0 0
        %2593 = vmatpush2.bf16.msra.mxu0 0
        %2594 = vmatprep.subr.bf16.mxu0 0
        %2595 = vmatpush2.bf16.msra.mxu0 0
        %2596 = vmatprep.subr.bf16.mxu0 0
        %2597 = vmatpush2.bf16.msra.mxu0 0
        %2598 = vmatprep.subr.bf16.mxu0 0
        %2599 = vmatpush2.bf16.msra.mxu0 0
        %2600 = vmatprep.mubr.bf16.mxu0 0
        %2601 = vmatmul.mubr.bf16.gmra.mxu0 %v2557
        %v2602 = vpop.f32.mrf.mxu0
        %v2603 = vadd.f32 0.0, %v2602
        %v2604 = vpop.f32.mrf.mxu0
        %v2605 = vpop.f32.mrf.mxu0
        %v2606 = vadd.f32 0.0, %v2605
        %v2607 = vpop.f32.mrf.mxu0
        %2608 = vmatprep.mubr.bf16.mxu0 0
        %2609 = vmatmul.mubr.bf16.gmra.mxu0 %v2560
        %v2610 = vpop.f32.mrf.mxu0
        %v2611 = vadd.f32 0.0, %v2610
        %v2612 = vpop.f32.mrf.mxu0
        %v2613 = vpop.f32.mrf.mxu0
        %v2614 = vadd.f32 0.0, %v2613
        %v2615 = vpop.f32.mrf.mxu0
        %2616 = vmatprep.mubr.bf16.mxu0 0
        %2617 = vmatmul.mubr.bf16.gmra.mxu0 %v2563
        %v2618 = vpop.f32.mrf.mxu0
        %v2619 = vadd.f32 0.0, %v2618
        %v2620 = vpop.f32.mrf.mxu0
        %v2621 = vpop.f32.mrf.mxu0
        %v2622 = vadd.f32 0.0, %v2621
        %v2623 = vpop.f32.mrf.mxu0
        %2624 = vmatprep.mubr.bf16.mxu0 0
        %2625 = vmatmul.mubr.bf16.gmra.mxu0 %v2566
        %v2626 = vpop.f32.mrf.mxu0
        %v2627 = vadd.f32 0.0, %v2626
        %v2628 = vpop.f32.mrf.mxu0
        %v2629 = vpop.f32.mrf.mxu0
        %v2630 = vadd.f32 0.0, %v2629
        %v2631 = vpop.f32.mrf.mxu0
        %2632 = vdwg.mxu0
        %v2633 = vrcp.pop %v2514
        %v2634 = vrcp.pop %v2517
        %v2635 = vrcp.pop %v2520
        %v2636 = vrcp.pop %v2523
        %v2637 = vrcp.pop %v2526
        %v2638 = vrcp.pop %v2529
        %v2639 = vrcp.pop %v2532
        %v2640 = vrcp.pop %v2535
        %v2641 = vmul.f32 %v2603, %v2633
        %v2642 = vmul.f32 %v2606, %v2634
        %v2643 = vmul.f32 %v2611, %v2635
        %v2644 = vmul.f32 %v2614, %v2636
        %v2645 = vmul.f32 %v2619, %v2637
        %v2646 = vmul.f32 %v2622, %v2638
        %v2647 = vmul.f32 %v2627, %v2639
        %v2648 = vmul.f32 %v2630, %v2640
        %v2649 = vpack.c.bf16 %v2642, %v2641
        %v2650 = vpack.c.bf16 %v2644, %v2643
        %v2651 = vpack.c.bf16 %v2646, %v2645
        %v2652 = vpack.c.bf16 %v2648, %v2647
        %v2657 = vunpack.c.l.b16 %v2649
        %v2658 = vunpack.c.h.b16 %v2649
        %v2659 = vunpack.c.l.b16 %v2650
        %v2660 = vunpack.c.h.b16 %v2650
        %v2661 = vunpack.c.l.b16 %v2651
        %v2662 = vunpack.c.h.b16 %v2651
        %v2663 = vunpack.c.l.b16 %v2652
        %v2664 = vunpack.c.h.b16 %v2652
        %v2665 = vpack.c.b16 %v2657, %v2657
        %v2666 = vpack.c.b16 %v2658, %v2658
        %v2667 = vpack.c.b16 %v2659, %v2659
        %v2668 = vpack.c.b16 %v2660, %v2660
        %v2669 = vpack.c.b16 %v2661, %v2661
        %v2670 = vpack.c.b16 %v2662, %v2662
        %v2671 = vpack.c.b16 %v2663, %v2663
        %v2672 = vpack.c.b16 %v2664, %v2664
        %2673 = vrot.lane.b32.xlu0 %v2665, 32
        %v2674 = vpop.permute.xlu0 %2673
        %2675 = vrot.lane.b32.xlu0 %v2666, 32
        %v2676 = vpop.permute.xlu0 %2675
        %2677 = vrot.lane.b32.xlu0 %v2667, 32
        %v2678 = vpop.permute.xlu0 %2677
        %2679 = vrot.lane.b32.xlu0 %v2668, 32
        %v2680 = vpop.permute.xlu0 %2679
        %2681 = vrot.lane.b32.xlu0 %v2669, 32
        %v2682 = vpop.permute.xlu0 %2681
        %2683 = vrot.lane.b32.xlu0 %v2670, 32
        %v2684 = vpop.permute.xlu0 %2683
        %2685 = vrot.lane.b32.xlu0 %v2671, 32
        %v2686 = vpop.permute.xlu0 %2685
        %2687 = vrot.lane.b32.xlu0 %v2672, 32
        %v2688 = vpop.permute.xlu0 %2687
        %2697 = vst.msk [vmem:[#allocation2 + $0x20] sm:$0xf] %vm1358, %v2674
        %2698 = vst.msk [vmem:[#allocation2 + $0x24] sm:$0xf] %vm1358, %v2676
        %2699 = vst.msk [vmem:[#allocation2 + $0x28] sm:$0xf] %vm1358, %v2678
        %2700 = vst.msk [vmem:[#allocation2 + $0x2c] sm:$0xf] %vm1358, %v2680
        %2701 = vst.msk [vmem:[#allocation2 + $0x30] sm:$0xf] %vm1358, %v2682
        %2702 = vst.msk [vmem:[#allocation2 + $0x34] sm:$0xf] %vm1358, %v2684
        %2703 = vst.msk [vmem:[#allocation2 + $0x38] sm:$0xf] %vm1358, %v2686
        %2704 = vst.msk [vmem:[#allocation2 + $0x3c] sm:$0xf] %vm1358, %v2688
        %2705 = vrot.lane.b32.xlu0 %v699, 64
        %v2706 = vpop.permute.xlu0 %2705
        %2707 = vrot.lane.b32.xlu0 %v702, 64
        %v2708 = vpop.permute.xlu0 %2707
        %2709 = vrot.lane.b32.xlu0 %v705, 64
        %v2710 = vpop.permute.xlu0 %2709
        %2711 = vrot.lane.b32.xlu0 %v708, 64
        %v2712 = vpop.permute.xlu0 %2711
        %2713 = vrot.lane.b32.xlu0 %v700, 64
        %v2714 = vpop.permute.xlu0 %2713
        %2715 = vrot.lane.b32.xlu0 %v703, 64
        %v2716 = vpop.permute.xlu0 %2715
        %2717 = vrot.lane.b32.xlu0 %v706, 64
        %v2718 = vpop.permute.xlu0 %2717
        %2719 = vrot.lane.b32.xlu0 %v709, 64
        %v2720 = vpop.permute.xlu0 %2719
        %v2722 = vsel %vm711, %v2706, 0
        %v2725 = vsel %vm711, %v2708, 0
        %v2728 = vsel %vm711, %v2710, 0
        %v2731 = vsel %vm711, %v2712, 0
        %v2734 = vsel %vm711, %v2714, 0
        %v2737 = vsel %vm711, %v2716, 0
        %v2740 = vsel %vm711, %v2718, 0
        %v2743 = vsel %vm711, %v2720, 0
        %2745 = vmatprep.subr.bf16.mxu0 0
        %2746 = vmatpush1.bf16.xpose.msra.mxu0 0
        %2747 = vmatprep.subr.bf16.mxu0 0
        %2748 = vmatpush1.bf16.xpose.msra.mxu0 0
        %2749 = vmatprep.subr.bf16.mxu0 0
        %2750 = vmatpush1.bf16.xpose.msra.mxu0 0
        %2751 = vmatprep.subr.bf16.mxu0 0
        %2752 = vmatpush1.bf16.xpose.msra.mxu0 0
        %2753 = vmatprep.subr.bf16.mxu0 0
        %2754 = vmatpush1.bf16.xpose.msra.mxu0 %v2743
        %2755 = vmatprep.subr.bf16.mxu0 0
        %2756 = vmatpush1.bf16.xpose.msra.mxu0 %v2740
        %2757 = vmatprep.subr.bf16.mxu0 0
        %2758 = vmatpush1.bf16.xpose.msra.mxu0 %v2737
        %2759 = vmatprep.subr.bf16.mxu0 0
        %2760 = vmatpush1.bf16.xpose.msra.mxu0 %v2734
        %2761 = vmatprep.subr.bf16.mxu0 0
        %2762 = vmatpush2.bf16.xpose.msra.mxu0 0
        %2763 = vmatprep.subr.bf16.mxu0 0
        %2764 = vmatpush2.bf16.xpose.msra.mxu0 0
        %2765 = vmatprep.subr.bf16.mxu0 0
        %2766 = vmatpush2.bf16.xpose.msra.mxu0 0
        %2767 = vmatprep.subr.bf16.mxu0 0
        %2768 = vmatpush2.bf16.xpose.msra.mxu0 0
        %2769 = vmatprep.subr.bf16.mxu0 0
        %2770 = vmatpush2.bf16.xpose.msra.mxu0 0
        %2771 = vmatprep.subr.bf16.mxu0 0
        %2772 = vmatpush2.bf16.xpose.msra.mxu0 0
        %2773 = vmatprep.subr.bf16.mxu0 0
        %2774 = vmatpush2.bf16.xpose.msra.mxu0 0
        %2775 = vmatprep.subr.bf16.mxu0 0
        %2776 = vmatpush2.bf16.xpose.msra.mxu0 0
        %2777 = vmatprep.mubr.bf16.mxu0 0
        %2778 = vmatmul.mubr.bf16.gmra.mxu0 %v2722
        %v2779 = vpop.f32.mrf.mxu0
        %v2780 = vadd.f32 0.0, %v2779
        %v2781 = vpop.f32.mrf.mxu0
        %v2782 = vpop.f32.mrf.mxu0
        %v2783 = vadd.f32 0.0, %v2782
        %v2784 = vpop.f32.mrf.mxu0
        %2785 = vmatprep.mubr.bf16.mxu0 0
        %2786 = vmatmul.mubr.bf16.gmra.mxu0 %v2725
        %v2787 = vpop.f32.mrf.mxu0
        %v2788 = vadd.f32 0.0, %v2787
        %v2789 = vpop.f32.mrf.mxu0
        %v2790 = vpop.f32.mrf.mxu0
        %v2791 = vadd.f32 0.0, %v2790
        %v2792 = vpop.f32.mrf.mxu0
        %2793 = vmatprep.mubr.bf16.mxu0 0
        %2794 = vmatmul.mubr.bf16.gmra.mxu0 %v2728
        %v2795 = vpop.f32.mrf.mxu0
        %v2796 = vadd.f32 0.0, %v2795
        %v2797 = vpop.f32.mrf.mxu0
        %v2798 = vpop.f32.mrf.mxu0
        %v2799 = vadd.f32 0.0, %v2798
        %v2800 = vpop.f32.mrf.mxu0
        %2801 = vmatprep.mubr.bf16.mxu0 0
        %2802 = vmatmul.mubr.bf16.gmra.mxu0 %v2731
        %v2803 = vpop.f32.mrf.mxu0
        %v2804 = vadd.f32 0.0, %v2803
        %v2805 = vpop.f32.mrf.mxu0
        %v2806 = vpop.f32.mrf.mxu0
        %v2807 = vadd.f32 0.0, %v2806
        %v2808 = vpop.f32.mrf.mxu0
        %2809 = vdwg.mxu0
        %v2810 = vsel %vm801, %v2780, -inf
        %2811 = vmax.xlane.f32.xlu0 %v2810
        %v2812 = vpop.xlane.xlu0 %2811
        %v2813 = vsel %vm801, %v2783, -inf
        %2814 = vmax.xlane.f32.xlu0 %v2813
        %v2815 = vpop.xlane.xlu0 %2814
        %v2816 = vsel %vm801, %v2788, -inf
        %2817 = vmax.xlane.f32.xlu0 %v2816
        %v2818 = vpop.xlane.xlu0 %2817
        %v2819 = vsel %vm801, %v2791, -inf
        %2820 = vmax.xlane.f32.xlu0 %v2819
        %v2821 = vpop.xlane.xlu0 %2820
        %v2822 = vsel %vm801, %v2796, -inf
        %2823 = vmax.xlane.f32.xlu0 %v2822
        %v2824 = vpop.xlane.xlu0 %2823
        %v2825 = vsel %vm801, %v2799, -inf
        %2826 = vmax.xlane.f32.xlu0 %v2825
        %v2827 = vpop.xlane.xlu0 %2826
        %v2828 = vsel %vm801, %v2804, -inf
        %2829 = vmax.xlane.f32.xlu0 %v2828
        %v2830 = vpop.xlane.xlu0 %2829
        %v2831 = vsel %vm801, %v2807, -inf
        %2832 = vmax.xlane.f32.xlu0 %v2831
        %v2833 = vpop.xlane.xlu0 %2832
        %v2834 = vsub.f32 %v2780, %v2812
        %v2835 = vsub.f32 %v2783, %v2815
        %v2836 = vsub.f32 %v2788, %v2818
        %v2837 = vsub.f32 %v2791, %v2821
        %v2838 = vsub.f32 %v2796, %v2824
        %v2839 = vsub.f32 %v2799, %v2827
        %v2840 = vsub.f32 %v2804, %v2830
        %v2841 = vsub.f32 %v2807, %v2833
        %v2842 = vmul.f32 %v2834, 1.442695
        %v2843 = vpow.pop %v2842
        %v2844 = vmul.f32 %v2835, 1.442695
        %v2845 = vpow.pop %v2844
        %v2846 = vmul.f32 %v2836, 1.442695
        %v2847 = vpow.pop %v2846
        %v2848 = vmul.f32 %v2837, 1.442695
        %v2849 = vpow.pop %v2848
        %v2850 = vmul.f32 %v2838, 1.442695
        %v2851 = vpow.pop %v2850
        %v2852 = vmul.f32 %v2839, 1.442695
        %v2853 = vpow.pop %v2852
        %v2854 = vmul.f32 %v2840, 1.442695
        %v2855 = vpow.pop %v2854
        %v2856 = vmul.f32 %v2841, 1.442695
        %v2857 = vpow.pop %v2856
        %v2858 = vsel %vm801, %v2843, 0.0
        %2859 = vadd.xlane.f32.xlu0 %v2858
        %v2860 = vpop.xlane.xlu0 %2859
        %v2861 = vsel %vm801, %v2845, 0.0
        %2862 = vadd.xlane.f32.xlu0 %v2861
        %v2863 = vpop.xlane.xlu0 %2862
        %v2864 = vsel %vm801, %v2847, 0.0
        %2865 = vadd.xlane.f32.xlu0 %v2864
        %v2866 = vpop.xlane.xlu0 %2865
        %v2867 = vsel %vm801, %v2849, 0.0
        %2868 = vadd.xlane.f32.xlu0 %v2867
        %v2869 = vpop.xlane.xlu0 %2868
        %v2870 = vsel %vm801, %v2851, 0.0
        %2871 = vadd.xlane.f32.xlu0 %v2870
        %v2872 = vpop.xlane.xlu0 %2871
        %v2873 = vsel %vm801, %v2853, 0.0
        %2874 = vadd.xlane.f32.xlu0 %v2873
        %v2875 = vpop.xlane.xlu0 %2874
        %v2876 = vsel %vm801, %v2855, 0.0
        %2877 = vadd.xlane.f32.xlu0 %v2876
        %v2878 = vpop.xlane.xlu0 %2877
        %v2879 = vsel %vm801, %v2857, 0.0
        %2880 = vadd.xlane.f32.xlu0 %v2879
        %v2881 = vpop.xlane.xlu0 %2880
        %v2882 = vpack.c.bf16 %v2845, %v2843
        %v2883 = vpack.c.bf16 %v2849, %v2847
        %v2884 = vpack.c.bf16 %v2853, %v2851
        %v2885 = vpack.c.bf16 %v2857, %v2855
        %2886 = vrot.lane.b32.xlu0 %v701, 64
        %v2887 = vpop.permute.xlu0 %2886
        %2888 = vrot.lane.b32.xlu0 %v704, 64
        %v2889 = vpop.permute.xlu0 %2888
        %2890 = vrot.lane.b32.xlu0 %v707, 64
        %v2891 = vpop.permute.xlu0 %2890
        %2892 = vrot.lane.b32.xlu0 %v710, 64
        %v2893 = vpop.permute.xlu0 %2892
        %v2899 = vsel %vm801, %v2882, 0
        %v2902 = vsel %vm801, %v2883, 0
        %v2905 = vsel %vm801, %v2884, 0
        %v2908 = vsel %vm801, %v2885, 0
        %2910 = vmatprep.subr.bf16.mxu0 0
        %2911 = vmatpush1.bf16.msra.mxu0 0
        %2912 = vmatprep.subr.bf16.mxu0 0
        %2913 = vmatpush1.bf16.msra.mxu0 0
        %2914 = vmatprep.subr.bf16.mxu0 0
        %2915 = vmatpush1.bf16.msra.mxu0 0
        %2916 = vmatprep.subr.bf16.mxu0 0
        %2917 = vmatpush1.bf16.msra.mxu0 0
        %2918 = vmatprep.subr.bf16.mxu0 0
        %2919 = vmatpush1.bf16.msra.mxu0 %v2893
        %2920 = vmatprep.subr.bf16.mxu0 0
        %2921 = vmatpush1.bf16.msra.mxu0 %v2891
        %2922 = vmatprep.subr.bf16.mxu0 0
        %2923 = vmatpush1.bf16.msra.mxu0 %v2889
        %2924 = vmatprep.subr.bf16.mxu0 0
        %2925 = vmatpush1.bf16.msra.mxu0 %v2887
        %2926 = vmatprep.subr.bf16.mxu0 0
        %2927 = vmatpush2.bf16.msra.mxu0 0
        %2928 = vmatprep.subr.bf16.mxu0 0
        %2929 = vmatpush2.bf16.msra.mxu0 0
        %2930 = vmatprep.subr.bf16.mxu0 0
        %2931 = vmatpush2.bf16.msra.mxu0 0
        %2932 = vmatprep.subr.bf16.mxu0 0
        %2933 = vmatpush2.bf16.msra.mxu0 0
        %2934 = vmatprep.subr.bf16.mxu0 0
        %2935 = vmatpush2.bf16.msra.mxu0 0
        %2936 = vmatprep.subr.bf16.mxu0 0
        %2937 = vmatpush2.bf16.msra.mxu0 0
        %2938 = vmatprep.subr.bf16.mxu0 0
        %2939 = vmatpush2.bf16.msra.mxu0 0
        %2940 = vmatprep.subr.bf16.mxu0 0
        %2941 = vmatpush2.bf16.msra.mxu0 0
        %2942 = vmatprep.mubr.bf16.mxu0 0
        %2943 = vmatmul.mubr.bf16.gmra.mxu0 %v2899
        %v2944 = vpop.f32.mrf.mxu0
        %v2945 = vadd.f32 0.0, %v2944
        %v2946 = vpop.f32.mrf.mxu0
        %v2947 = vpop.f32.mrf.mxu0
        %v2948 = vadd.f32 0.0, %v2947
        %v2949 = vpop.f32.mrf.mxu0
        %2950 = vmatprep.mubr.bf16.mxu0 0
        %2951 = vmatmul.mubr.bf16.gmra.mxu0 %v2902
        %v2952 = vpop.f32.mrf.mxu0
        %v2953 = vadd.f32 0.0, %v2952
        %v2954 = vpop.f32.mrf.mxu0
        %v2955 = vpop.f32.mrf.mxu0
        %v2956 = vadd.f32 0.0, %v2955
        %v2957 = vpop.f32.mrf.mxu0
        %2958 = vmatprep.mubr.bf16.mxu0 0
        %2959 = vmatmul.mubr.bf16.gmra.mxu0 %v2905
        %v2960 = vpop.f32.mrf.mxu0
        %v2961 = vadd.f32 0.0, %v2960
        %v2962 = vpop.f32.mrf.mxu0
        %v2963 = vpop.f32.mrf.mxu0
        %v2964 = vadd.f32 0.0, %v2963
        %v2965 = vpop.f32.mrf.mxu0
        %2966 = vmatprep.mubr.bf16.mxu0 0
        %2967 = vmatmul.mubr.bf16.gmra.mxu0 %v2908
        %v2968 = vpop.f32.mrf.mxu0
        %v2969 = vadd.f32 0.0, %v2968
        %v2970 = vpop.f32.mrf.mxu0
        %v2971 = vpop.f32.mrf.mxu0
        %v2972 = vadd.f32 0.0, %v2971
        %v2973 = vpop.f32.mrf.mxu0
        %2974 = vdwg.mxu0
        %v2975 = vrcp.pop %v2860
        %v2976 = vrcp.pop %v2863
        %v2977 = vrcp.pop %v2866
        %v2978 = vrcp.pop %v2869
        %v2979 = vrcp.pop %v2872
        %v2980 = vrcp.pop %v2875
        %v2981 = vrcp.pop %v2878
        %v2982 = vrcp.pop %v2881
        %v2983 = vmul.f32 %v2945, %v2975
        %v2984 = vmul.f32 %v2948, %v2976
        %v2985 = vmul.f32 %v2953, %v2977
        %v2986 = vmul.f32 %v2956, %v2978
        %v2987 = vmul.f32 %v2961, %v2979
        %v2988 = vmul.f32 %v2964, %v2980
        %v2989 = vmul.f32 %v2969, %v2981
        %v2990 = vmul.f32 %v2972, %v2982
        %v2991 = vpack.c.bf16 %v2984, %v2983
        %v2992 = vpack.c.bf16 %v2986, %v2985
        %v2993 = vpack.c.bf16 %v2988, %v2987
        %v2994 = vpack.c.bf16 %v2990, %v2989
        %v2999 = vunpack.c.l.b16 %v2991
        %v3000 = vunpack.c.h.b16 %v2991
        %v3001 = vunpack.c.l.b16 %v2992
        %v3002 = vunpack.c.h.b16 %v2992
        %v3003 = vunpack.c.l.b16 %v2993
        %v3004 = vunpack.c.h.b16 %v2993
        %v3005 = vunpack.c.l.b16 %v2994
        %v3006 = vunpack.c.h.b16 %v2994
        %v3007 = vpack.c.b16 %v2999, %v2999
        %v3008 = vpack.c.b16 %v3000, %v3000
        %v3009 = vpack.c.b16 %v3001, %v3001
        %v3010 = vpack.c.b16 %v3002, %v3002
        %v3011 = vpack.c.b16 %v3003, %v3003
        %v3012 = vpack.c.b16 %v3004, %v3004
        %v3013 = vpack.c.b16 %v3005, %v3005
        %v3014 = vpack.c.b16 %v3006, %v3006
        %3015 = vrot.lane.b32.xlu0 %v3007, 64
        %v3016 = vpop.permute.xlu0 %3015
        %3017 = vrot.lane.b32.xlu0 %v3008, 64
        %v3018 = vpop.permute.xlu0 %3017
        %3019 = vrot.lane.b32.xlu0 %v3009, 64
        %v3020 = vpop.permute.xlu0 %3019
        %3021 = vrot.lane.b32.xlu0 %v3010, 64
        %v3022 = vpop.permute.xlu0 %3021
        %3023 = vrot.lane.b32.xlu0 %v3011, 64
        %v3024 = vpop.permute.xlu0 %3023
        %3025 = vrot.lane.b32.xlu0 %v3012, 64
        %v3026 = vpop.permute.xlu0 %3025
        %3027 = vrot.lane.b32.xlu0 %v3013, 64
        %v3028 = vpop.permute.xlu0 %3027
        %3029 = vrot.lane.b32.xlu0 %v3014, 64
        %v3030 = vpop.permute.xlu0 %3029
        %3039 = vst.msk [vmem:[#allocation2 + $0x20] sm:$0xf] %vm1701, %v3016
        %3040 = vst.msk [vmem:[#allocation2 + $0x24] sm:$0xf] %vm1701, %v3018
        %3041 = vst.msk [vmem:[#allocation2 + $0x28] sm:$0xf] %vm1701, %v3020
        %3042 = vst.msk [vmem:[#allocation2 + $0x2c] sm:$0xf] %vm1701, %v3022
        %3043 = vst.msk [vmem:[#allocation2 + $0x30] sm:$0xf] %vm1701, %v3024
        %3044 = vst.msk [vmem:[#allocation2 + $0x34] sm:$0xf] %vm1701, %v3026
        %3045 = vst.msk [vmem:[#allocation2 + $0x38] sm:$0xf] %vm1701, %v3028
        %3046 = vst.msk [vmem:[#allocation2 + $0x3c] sm:$0xf] %vm1701, %v3030
        %3047 = vrot.lane.b32.xlu0 %v699, 32
        %v3048 = vpop.permute.xlu0 %3047
        %3049 = vrot.lane.b32.xlu0 %v702, 32
        %v3050 = vpop.permute.xlu0 %3049
        %3051 = vrot.lane.b32.xlu0 %v705, 32
        %v3052 = vpop.permute.xlu0 %3051
        %3053 = vrot.lane.b32.xlu0 %v708, 32
        %v3054 = vpop.permute.xlu0 %3053
        %3055 = vrot.lane.b32.xlu0 %v700, 32
        %v3056 = vpop.permute.xlu0 %3055
        %3057 = vrot.lane.b32.xlu0 %v703, 32
        %v3058 = vpop.permute.xlu0 %3057
        %3059 = vrot.lane.b32.xlu0 %v706, 32
        %v3060 = vpop.permute.xlu0 %3059
        %3061 = vrot.lane.b32.xlu0 %v709, 32
        %v3062 = vpop.permute.xlu0 %3061
        %v3064 = vsel %vm711, %v3048, 0
        %v3067 = vsel %vm711, %v3050, 0
        %v3070 = vsel %vm711, %v3052, 0
        %v3073 = vsel %vm711, %v3054, 0
        %v3076 = vsel %vm711, %v3056, 0
        %v3079 = vsel %vm711, %v3058, 0
        %v3082 = vsel %vm711, %v3060, 0
        %v3085 = vsel %vm711, %v3062, 0
        %3087 = vmatprep.subr.bf16.mxu0 0
        %3088 = vmatpush1.bf16.xpose.msra.mxu0 0
        %3089 = vmatprep.subr.bf16.mxu0 0
        %3090 = vmatpush1.bf16.xpose.msra.mxu0 0
        %3091 = vmatprep.subr.bf16.mxu0 0
        %3092 = vmatpush1.bf16.xpose.msra.mxu0 0
        %3093 = vmatprep.subr.bf16.mxu0 0
        %3094 = vmatpush1.bf16.xpose.msra.mxu0 0
        %3095 = vmatprep.subr.bf16.mxu0 0
        %3096 = vmatpush1.bf16.xpose.msra.mxu0 %v3085
        %3097 = vmatprep.subr.bf16.mxu0 0
        %3098 = vmatpush1.bf16.xpose.msra.mxu0 %v3082
        %3099 = vmatprep.subr.bf16.mxu0 0
        %3100 = vmatpush1.bf16.xpose.msra.mxu0 %v3079
        %3101 = vmatprep.subr.bf16.mxu0 0
        %3102 = vmatpush1.bf16.xpose.msra.mxu0 %v3076
        %3103 = vmatprep.subr.bf16.mxu0 0
        %3104 = vmatpush2.bf16.xpose.msra.mxu0 0
        %3105 = vmatprep.subr.bf16.mxu0 0
        %3106 = vmatpush2.bf16.xpose.msra.mxu0 0
        %3107 = vmatprep.subr.bf16.mxu0 0
        %3108 = vmatpush2.bf16.xpose.msra.mxu0 0
        %3109 = vmatprep.subr.bf16.mxu0 0
        %3110 = vmatpush2.bf16.xpose.msra.mxu0 0
        %3111 = vmatprep.subr.bf16.mxu0 0
        %3112 = vmatpush2.bf16.xpose.msra.mxu0 0
        %3113 = vmatprep.subr.bf16.mxu0 0
        %3114 = vmatpush2.bf16.xpose.msra.mxu0 0
        %3115 = vmatprep.subr.bf16.mxu0 0
        %3116 = vmatpush2.bf16.xpose.msra.mxu0 0
        %3117 = vmatprep.subr.bf16.mxu0 0
        %3118 = vmatpush2.bf16.xpose.msra.mxu0 0
        %3119 = vmatprep.mubr.bf16.mxu0 0
        %3120 = vmatmul.mubr.bf16.gmra.mxu0 %v3064
        %v3121 = vpop.f32.mrf.mxu0
        %v3122 = vadd.f32 0.0, %v3121
        %v3123 = vpop.f32.mrf.mxu0
        %v3124 = vpop.f32.mrf.mxu0
        %v3125 = vadd.f32 0.0, %v3124
        %v3126 = vpop.f32.mrf.mxu0
        %3127 = vmatprep.mubr.bf16.mxu0 0
        %3128 = vmatmul.mubr.bf16.gmra.mxu0 %v3067
        %v3129 = vpop.f32.mrf.mxu0
        %v3130 = vadd.f32 0.0, %v3129
        %v3131 = vpop.f32.mrf.mxu0
        %v3132 = vpop.f32.mrf.mxu0
        %v3133 = vadd.f32 0.0, %v3132
        %v3134 = vpop.f32.mrf.mxu0
        %3135 = vmatprep.mubr.bf16.mxu0 0
        %3136 = vmatmul.mubr.bf16.gmra.mxu0 %v3070
        %v3137 = vpop.f32.mrf.mxu0
        %v3138 = vadd.f32 0.0, %v3137
        %v3139 = vpop.f32.mrf.mxu0
        %v3140 = vpop.f32.mrf.mxu0
        %v3141 = vadd.f32 0.0, %v3140
        %v3142 = vpop.f32.mrf.mxu0
        %3143 = vmatprep.mubr.bf16.mxu0 0
        %3144 = vmatmul.mubr.bf16.gmra.mxu0 %v3073
        %v3145 = vpop.f32.mrf.mxu0
        %v3146 = vadd.f32 0.0, %v3145
        %v3147 = vpop.f32.mrf.mxu0
        %v3148 = vpop.f32.mrf.mxu0
        %v3149 = vadd.f32 0.0, %v3148
        %v3150 = vpop.f32.mrf.mxu0
        %3151 = vdwg.mxu0
        %v3152 = vsel %vm801, %v3122, -inf
        %3153 = vmax.xlane.f32.xlu0 %v3152
        %v3154 = vpop.xlane.xlu0 %3153
        %v3155 = vsel %vm801, %v3125, -inf
        %3156 = vmax.xlane.f32.xlu0 %v3155
        %v3157 = vpop.xlane.xlu0 %3156
        %v3158 = vsel %vm801, %v3130, -inf
        %3159 = vmax.xlane.f32.xlu0 %v3158
        %v3160 = vpop.xlane.xlu0 %3159
        %v3161 = vsel %vm801, %v3133, -inf
        %3162 = vmax.xlane.f32.xlu0 %v3161
        %v3163 = vpop.xlane.xlu0 %3162
        %v3164 = vsel %vm801, %v3138, -inf
        %3165 = vmax.xlane.f32.xlu0 %v3164
        %v3166 = vpop.xlane.xlu0 %3165
        %v3167 = vsel %vm801, %v3141, -inf
        %3168 = vmax.xlane.f32.xlu0 %v3167
        %v3169 = vpop.xlane.xlu0 %3168
        %v3170 = vsel %vm801, %v3146, -inf
        %3171 = vmax.xlane.f32.xlu0 %v3170
        %v3172 = vpop.xlane.xlu0 %3171
        %v3173 = vsel %vm801, %v3149, -inf
        %3174 = vmax.xlane.f32.xlu0 %v3173
        %v3175 = vpop.xlane.xlu0 %3174
        %v3176 = vsub.f32 %v3122, %v3154
        %v3177 = vsub.f32 %v3125, %v3157
        %v3178 = vsub.f32 %v3130, %v3160
        %v3179 = vsub.f32 %v3133, %v3163
        %v3180 = vsub.f32 %v3138, %v3166
        %v3181 = vsub.f32 %v3141, %v3169
        %v3182 = vsub.f32 %v3146, %v3172
        %v3183 = vsub.f32 %v3149, %v3175
        %v3184 = vmul.f32 %v3176, 1.442695
        %v3185 = vpow.pop %v3184
        %v3186 = vmul.f32 %v3177, 1.442695
        %v3187 = vpow.pop %v3186
        %v3188 = vmul.f32 %v3178, 1.442695
        %v3189 = vpow.pop %v3188
        %v3190 = vmul.f32 %v3179, 1.442695
        %v3191 = vpow.pop %v3190
        %v3192 = vmul.f32 %v3180, 1.442695
        %v3193 = vpow.pop %v3192
        %v3194 = vmul.f32 %v3181, 1.442695
        %v3195 = vpow.pop %v3194
        %v3196 = vmul.f32 %v3182, 1.442695
        %v3197 = vpow.pop %v3196
        %v3198 = vmul.f32 %v3183, 1.442695
        %v3199 = vpow.pop %v3198
        %v3200 = vsel %vm801, %v3185, 0.0
        %3201 = vadd.xlane.f32.xlu0 %v3200
        %v3202 = vpop.xlane.xlu0 %3201
        %v3203 = vsel %vm801, %v3187, 0.0
        %3204 = vadd.xlane.f32.xlu0 %v3203
        %v3205 = vpop.xlane.xlu0 %3204
        %v3206 = vsel %vm801, %v3189, 0.0
        %3207 = vadd.xlane.f32.xlu0 %v3206
        %v3208 = vpop.xlane.xlu0 %3207
        %v3209 = vsel %vm801, %v3191, 0.0
        %3210 = vadd.xlane.f32.xlu0 %v3209
        %v3211 = vpop.xlane.xlu0 %3210
        %v3212 = vsel %vm801, %v3193, 0.0
        %3213 = vadd.xlane.f32.xlu0 %v3212
        %v3214 = vpop.xlane.xlu0 %3213
        %v3215 = vsel %vm801, %v3195, 0.0
        %3216 = vadd.xlane.f32.xlu0 %v3215
        %v3217 = vpop.xlane.xlu0 %3216
        %v3218 = vsel %vm801, %v3197, 0.0
        %3219 = vadd.xlane.f32.xlu0 %v3218
        %v3220 = vpop.xlane.xlu0 %3219
        %v3221 = vsel %vm801, %v3199, 0.0
        %3222 = vadd.xlane.f32.xlu0 %v3221
        %v3223 = vpop.xlane.xlu0 %3222
        %v3224 = vpack.c.bf16 %v3187, %v3185
        %v3225 = vpack.c.bf16 %v3191, %v3189
        %v3226 = vpack.c.bf16 %v3195, %v3193
        %v3227 = vpack.c.bf16 %v3199, %v3197
        %3228 = vrot.lane.b32.xlu0 %v701, 32
        %v3229 = vpop.permute.xlu0 %3228
        %3230 = vrot.lane.b32.xlu0 %v704, 32
        %v3231 = vpop.permute.xlu0 %3230
        %3232 = vrot.lane.b32.xlu0 %v707, 32
        %v3233 = vpop.permute.xlu0 %3232
        %3234 = vrot.lane.b32.xlu0 %v710, 32
        %v3235 = vpop.permute.xlu0 %3234
        %v3241 = vsel %vm801, %v3224, 0
        %v3244 = vsel %vm801, %v3225, 0
        %v3247 = vsel %vm801, %v3226, 0
        %v3250 = vsel %vm801, %v3227, 0
        %3252 = vmatprep.subr.bf16.mxu0 0
        %3253 = vmatpush1.bf16.msra.mxu0 0
        %3254 = vmatprep.subr.bf16.mxu0 0
        %3255 = vmatpush1.bf16.msra.mxu0 0
        %3256 = vmatprep.subr.bf16.mxu0 0
        %3257 = vmatpush1.bf16.msra.mxu0 0
        %3258 = vmatprep.subr.bf16.mxu0 0
        %3259 = vmatpush1.bf16.msra.mxu0 0
        %3260 = vmatprep.subr.bf16.mxu0 0
        %3261 = vmatpush1.bf16.msra.mxu0 %v3235
        %3262 = vmatprep.subr.bf16.mxu0 0
        %3263 = vmatpush1.bf16.msra.mxu0 %v3233
        %3264 = vmatprep.subr.bf16.mxu0 0
        %3265 = vmatpush1.bf16.msra.mxu0 %v3231
        %3266 = vmatprep.subr.bf16.mxu0 0
        %3267 = vmatpush1.bf16.msra.mxu0 %v3229
        %3268 = vmatprep.subr.bf16.mxu0 0
        %3269 = vmatpush2.bf16.msra.mxu0 0
        %3270 = vmatprep.subr.bf16.mxu0 0
        %3271 = vmatpush2.bf16.msra.mxu0 0
        %3272 = vmatprep.subr.bf16.mxu0 0
        %3273 = vmatpush2.bf16.msra.mxu0 0
        %3274 = vmatprep.subr.bf16.mxu0 0
        %3275 = vmatpush2.bf16.msra.mxu0 0
        %3276 = vmatprep.subr.bf16.mxu0 0
        %3277 = vmatpush2.bf16.msra.mxu0 0
        %3278 = vmatprep.subr.bf16.mxu0 0
        %3279 = vmatpush2.bf16.msra.mxu0 0
        %3280 = vmatprep.subr.bf16.mxu0 0
        %3281 = vmatpush2.bf16.msra.mxu0 0
        %3282 = vmatprep.subr.bf16.mxu0 0
        %3283 = vmatpush2.bf16.msra.mxu0 0
        %3284 = vmatprep.mubr.bf16.mxu0 0
        %3285 = vmatmul.mubr.bf16.gmra.mxu0 %v3241
        %v3286 = vpop.f32.mrf.mxu0
        %v3287 = vadd.f32 0.0, %v3286
        %v3288 = vpop.f32.mrf.mxu0
        %v3289 = vpop.f32.mrf.mxu0
        %v3290 = vadd.f32 0.0, %v3289
        %v3291 = vpop.f32.mrf.mxu0
        %3292 = vmatprep.mubr.bf16.mxu0 0
        %3293 = vmatmul.mubr.bf16.gmra.mxu0 %v3244
        %v3294 = vpop.f32.mrf.mxu0
        %v3295 = vadd.f32 0.0, %v3294
        %v3296 = vpop.f32.mrf.mxu0
        %v3297 = vpop.f32.mrf.mxu0
        %v3298 = vadd.f32 0.0, %v3297
        %v3299 = vpop.f32.mrf.mxu0
        %3300 = vmatprep.mubr.bf16.mxu0 0
        %3301 = vmatmul.mubr.bf16.gmra.mxu0 %v3247
        %v3302 = vpop.f32.mrf.mxu0
        %v3303 = vadd.f32 0.0, %v3302
        %v3304 = vpop.f32.mrf.mxu0
        %v3305 = vpop.f32.mrf.mxu0
        %v3306 = vadd.f32 0.0, %v3305
        %v3307 = vpop.f32.mrf.mxu0
        %3308 = vmatprep.mubr.bf16.mxu0 0
        %3309 = vmatmul.mubr.bf16.gmra.mxu0 %v3250
        %v3310 = vpop.f32.mrf.mxu0
        %v3311 = vadd.f32 0.0, %v3310
        %v3312 = vpop.f32.mrf.mxu0
        %v3313 = vpop.f32.mrf.mxu0
        %v3314 = vadd.f32 0.0, %v3313
        %v3315 = vpop.f32.mrf.mxu0
        %3316 = vdwg.mxu0
        %v3317 = vrcp.pop %v3202
        %v3318 = vrcp.pop %v3205
        %v3319 = vrcp.pop %v3208
        %v3320 = vrcp.pop %v3211
        %v3321 = vrcp.pop %v3214
        %v3322 = vrcp.pop %v3217
        %v3323 = vrcp.pop %v3220
        %v3324 = vrcp.pop %v3223
        %v3325 = vmul.f32 %v3287, %v3317
        %v3326 = vmul.f32 %v3290, %v3318
        %v3327 = vmul.f32 %v3295, %v3319
        %v3328 = vmul.f32 %v3298, %v3320
        %v3329 = vmul.f32 %v3303, %v3321
        %v3330 = vmul.f32 %v3306, %v3322
        %v3331 = vmul.f32 %v3311, %v3323
        %v3332 = vmul.f32 %v3314, %v3324
        %v3333 = vpack.c.bf16 %v3326, %v3325
        %v3334 = vpack.c.bf16 %v3328, %v3327
        %v3335 = vpack.c.bf16 %v3330, %v3329
        %v3336 = vpack.c.bf16 %v3332, %v3331
        %v3341 = vunpack.c.l.b16 %v3333
        %v3342 = vunpack.c.h.b16 %v3333
        %v3343 = vunpack.c.l.b16 %v3334
        %v3344 = vunpack.c.h.b16 %v3334
        %v3345 = vunpack.c.l.b16 %v3335
        %v3346 = vunpack.c.h.b16 %v3335
        %v3347 = vunpack.c.l.b16 %v3336
        %v3348 = vunpack.c.h.b16 %v3336
        %v3349 = vpack.c.b16 %v3341, %v3341
        %v3350 = vpack.c.b16 %v3342, %v3342
        %v3351 = vpack.c.b16 %v3343, %v3343
        %v3352 = vpack.c.b16 %v3344, %v3344
        %v3353 = vpack.c.b16 %v3345, %v3345
        %v3354 = vpack.c.b16 %v3346, %v3346
        %v3355 = vpack.c.b16 %v3347, %v3347
        %v3356 = vpack.c.b16 %v3348, %v3348
        %3357 = vrot.lane.b32.xlu0 %v3349, 96
        %v3358 = vpop.permute.xlu0 %3357
        %3359 = vrot.lane.b32.xlu0 %v3350, 96
        %v3360 = vpop.permute.xlu0 %3359
        %3361 = vrot.lane.b32.xlu0 %v3351, 96
        %v3362 = vpop.permute.xlu0 %3361
        %3363 = vrot.lane.b32.xlu0 %v3352, 96
        %v3364 = vpop.permute.xlu0 %3363
        %3365 = vrot.lane.b32.xlu0 %v3353, 96
        %v3366 = vpop.permute.xlu0 %3365
        %3367 = vrot.lane.b32.xlu0 %v3354, 96
        %v3368 = vpop.permute.xlu0 %3367
        %3369 = vrot.lane.b32.xlu0 %v3355, 96
        %v3370 = vpop.permute.xlu0 %3369
        %3371 = vrot.lane.b32.xlu0 %v3356, 96
        %v3372 = vpop.permute.xlu0 %3371
        %3381 = vst.msk [vmem:[#allocation2 + $0x20] sm:$0xf] %vm2044, %v3358
        %3382 = vst.msk [vmem:[#allocation2 + $0x24] sm:$0xf] %vm2044, %v3360
        %3383 = vst.msk [vmem:[#allocation2 + $0x28] sm:$0xf] %vm2044, %v3362
        %3384 = vst.msk [vmem:[#allocation2 + $0x2c] sm:$0xf] %vm2044, %v3364
        %3385 = vst.msk [vmem:[#allocation2 + $0x30] sm:$0xf] %vm2044, %v3366
        %3386 = vst.msk [vmem:[#allocation2 + $0x34] sm:$0xf] %vm2044, %v3368
        %3387 = vst.msk [vmem:[#allocation2 + $0x38] sm:$0xf] %vm2044, %v3370
        %3388 = vst.msk [vmem:[#allocation2 + $0x3c] sm:$0xf] %vm2044, %v3372
        %v3389 = vld [vmem:[#allocation2] sm:$0xf]
        %v3390 = vld [vmem:[#allocation2 + $0x4] sm:$0xf]
        %v3391 = vld [vmem:[#allocation2 + $0x8] sm:$0xf]
        %v3392 = vld [vmem:[#allocation2 + $0xc] sm:$0xf]
        %v3393 = vld [vmem:[#allocation2 + $0x10] sm:$0xf]
        %v3394 = vld [vmem:[#allocation2 + $0x14] sm:$0xf]
        %v3395 = vld [vmem:[#allocation2 + $0x18] sm:$0xf]
        %v3396 = vld [vmem:[#allocation2 + $0x1c] sm:$0xf]
        %v3397 = vld [vmem:[#allocation2 + $0x20] sm:$0xf]
        %v3398 = vld [vmem:[#allocation2 + $0x24] sm:$0xf]
        %v3399 = vld [vmem:[#allocation2 + $0x28] sm:$0xf]
        %v3400 = vld [vmem:[#allocation2 + $0x2c] sm:$0xf]
        %v3401 = vld [vmem:[#allocation2 + $0x30] sm:$0xf]
        %v3402 = vld [vmem:[#allocation2 + $0x34] sm:$0xf]
        %v3403 = vld [vmem:[#allocation2 + $0x38] sm:$0xf]
        %v3404 = vld [vmem:[#allocation2 + $0x3c] sm:$0xf]
        %v3405 = vld [vmem:[#allocation8] sm:$0xf]
        %v3406 = vld [vmem:[#allocation8 + $0x4] sm:$0xf]
        %v3407 = vld [vmem:[#allocation8 + $0x8] sm:$0xf]
        %v3408 = vld [vmem:[#allocation8 + $0xc] sm:$0xf]
        %v3409 = vld [vmem:[#allocation8 + $0x10] sm:$0xf]
        %v3410 = vld [vmem:[#allocation8 + $0x14] sm:$0xf]
        %v3411 = vld [vmem:[#allocation8 + $0x18] sm:$0xf]
        %v3412 = vld [vmem:[#allocation8 + $0x1c] sm:$0xf]
        %v3413 = vld [vmem:[#allocation8 + $0x20] sm:$0xf]
        %v3414 = vld [vmem:[#allocation8 + $0x24] sm:$0xf]
        %v3415 = vld [vmem:[#allocation8 + $0x28] sm:$0xf]
        %v3416 = vld [vmem:[#allocation8 + $0x2c] sm:$0xf]
        %v3417 = vld [vmem:[#allocation8 + $0x30] sm:$0xf]
        %v3418 = vld [vmem:[#allocation8 + $0x34] sm:$0xf]
        %v3419 = vld [vmem:[#allocation8 + $0x38] sm:$0xf]
        %v3420 = vld [vmem:[#allocation8 + $0x3c] sm:$0xf]
        %v3421 = vld [vmem:[%s4] sm:$0x1]
        %v3423 = vlaneseq
        %v3424 = vshrl.u32 %v3423, 7
        %v3425 = vsub.s32 0, %v3424
        %v3426 = vrot.slane %v3421, %v3425
        %v3444 = vunpack.c.l.b16 %v3389
        %v3445 = vunpack.c.l.b16 %v3390
        %v3446 = vunpack.c.l.b16 %v3391
        %v3447 = vunpack.c.l.b16 %v3392
        %v3448 = vunpack.c.l.b16 %v3393
        %v3449 = vunpack.c.l.b16 %v3394
        %v3450 = vunpack.c.l.b16 %v3395
        %v3451 = vunpack.c.l.b16 %v3396
        %v3452 = vunpack.c.l.b16 %v3397
        %v3453 = vunpack.c.l.b16 %v3398
        %v3454 = vunpack.c.l.b16 %v3399
        %v3455 = vunpack.c.l.b16 %v3400
        %v3456 = vunpack.c.l.b16 %v3401
        %v3457 = vunpack.c.l.b16 %v3402
        %v3458 = vunpack.c.l.b16 %v3403
        %v3459 = vunpack.c.l.b16 %v3404
        %v3460 = vpack.c.b16 %v3445, %v3444
        %v3461 = vpack.c.b16 %v3447, %v3446
        %v3462 = vpack.c.b16 %v3449, %v3448
        %v3463 = vpack.c.b16 %v3451, %v3450
        %v3464 = vpack.c.b16 %v3453, %v3452
        %v3465 = vpack.c.b16 %v3455, %v3454
        %v3466 = vpack.c.b16 %v3457, %v3456
        %v3467 = vpack.c.b16 %v3459, %v3458
        %v3492 = vunpack.c.l.b16 %v3405
        %v3493 = vunpack.c.l.b16 %v3406
        %v3494 = vunpack.c.l.b16 %v3407
        %v3495 = vunpack.c.l.b16 %v3408
        %v3496 = vunpack.c.l.b16 %v3409
        %v3497 = vunpack.c.l.b16 %v3410
        %v3498 = vunpack.c.l.b16 %v3411
        %v3499 = vunpack.c.l.b16 %v3412
        %v3500 = vunpack.c.l.b16 %v3413
        %v3501 = vunpack.c.l.b16 %v3414
        %v3502 = vunpack.c.l.b16 %v3415
        %v3503 = vunpack.c.l.b16 %v3416
        %v3504 = vunpack.c.l.b16 %v3417
        %v3505 = vunpack.c.l.b16 %v3418
        %v3506 = vunpack.c.l.b16 %v3419
        %v3507 = vunpack.c.l.b16 %v3420
        %v3508 = vpack.c.b16 %v3493, %v3492
        %v3509 = vpack.c.b16 %v3495, %v3494
        %v3510 = vpack.c.b16 %v3497, %v3496
        %v3511 = vpack.c.b16 %v3499, %v3498
        %v3512 = vpack.c.b16 %v3501, %v3500
        %v3513 = vpack.c.b16 %v3503, %v3502
        %v3514 = vpack.c.b16 %v3505, %v3504
        %v3515 = vpack.c.b16 %v3507, %v3506
        %3524 = vmatprep.subr.bf16.mxu0 0
        %3525 = vmatpush1.bf16.msra.mxu0 %v3515
        %3526 = vmatprep.subr.bf16.mxu0 0
        %3527 = vmatpush1.bf16.msra.mxu0 %v3514
        %3528 = vmatprep.subr.bf16.mxu0 0
        %3529 = vmatpush1.bf16.msra.mxu0 %v3513
        %3530 = vmatprep.subr.bf16.mxu0 0
        %3531 = vmatpush1.bf16.msra.mxu0 %v3512
        %3532 = vmatprep.subr.bf16.mxu0 0
        %3533 = vmatpush1.bf16.msra.mxu0 %v3511
        %3534 = vmatprep.subr.bf16.mxu0 0
        %3535 = vmatpush1.bf16.msra.mxu0 %v3510
        %3536 = vmatprep.subr.bf16.mxu0 0
        %3537 = vmatpush1.bf16.msra.mxu0 %v3509
        %3538 = vmatprep.subr.bf16.mxu0 0
        %3539 = vmatpush1.bf16.msra.mxu0 %v3508
        %3540 = vmatprep.subr.bf16.mxu0 0
        %3541 = vmatpush2.bf16.msra.mxu0 0
        %3542 = vmatprep.subr.bf16.mxu0 0
        %3543 = vmatpush2.bf16.msra.mxu0 0
        %3544 = vmatprep.subr.bf16.mxu0 0
        %3545 = vmatpush2.bf16.msra.mxu0 0
        %3546 = vmatprep.subr.bf16.mxu0 0
        %3547 = vmatpush2.bf16.msra.mxu0 0
        %3548 = vmatprep.subr.bf16.mxu0 0
        %3549 = vmatpush2.bf16.msra.mxu0 0
        %3550 = vmatprep.subr.bf16.mxu0 0
        %3551 = vmatpush2.bf16.msra.mxu0 0
        %3552 = vmatprep.subr.bf16.mxu0 0
        %3553 = vmatpush2.bf16.msra.mxu0 0
        %3554 = vmatprep.subr.bf16.mxu0 0
        %3555 = vmatpush2.bf16.msra.mxu0 0
        %3556 = vmatprep.mubr.bf16.mxu0 0
        %3557 = vmatmul.mubr.bf16.gmra.mxu0 %v3460
        %v3558 = vpop.f32.mrf.mxu0
        %v3559 = vadd.f32 %v3426, %v3558
        %v3560 = vpop.f32.mrf.mxu0
        %v3561 = vpop.f32.mrf.mxu0
        %v3562 = vadd.f32 %v3426, %v3561
        %v3563 = vpop.f32.mrf.mxu0
        %3564 = vmatprep.mubr.bf16.mxu0 0
        %3565 = vmatmul.mubr.bf16.gmra.mxu0 %v3461
        %v3566 = vpop.f32.mrf.mxu0
        %v3567 = vadd.f32 %v3426, %v3566
        %v3568 = vpop.f32.mrf.mxu0
        %v3569 = vpop.f32.mrf.mxu0
        %v3570 = vadd.f32 %v3426, %v3569
        %v3571 = vpop.f32.mrf.mxu0
        %3572 = vmatprep.mubr.bf16.mxu0 0
        %3573 = vmatmul.mubr.bf16.gmra.mxu0 %v3462
        %v3574 = vpop.f32.mrf.mxu0
        %v3575 = vadd.f32 %v3426, %v3574
        %v3576 = vpop.f32.mrf.mxu0
        %v3577 = vpop.f32.mrf.mxu0
        %v3578 = vadd.f32 %v3426, %v3577
        %v3579 = vpop.f32.mrf.mxu0
        %3580 = vmatprep.mubr.bf16.mxu0 0
        %3581 = vmatmul.mubr.bf16.gmra.mxu0 %v3463
        %v3582 = vpop.f32.mrf.mxu0
        %v3583 = vadd.f32 %v3426, %v3582
        %v3584 = vpop.f32.mrf.mxu0
        %v3585 = vpop.f32.mrf.mxu0
        %v3586 = vadd.f32 %v3426, %v3585
        %v3587 = vpop.f32.mrf.mxu0
        %3588 = vmatprep.mubr.bf16.mxu0 0
        %3589 = vmatmul.mubr.bf16.gmra.mxu0 %v3464
        %v3590 = vpop.f32.mrf.mxu0
        %v3591 = vadd.f32 %v3426, %v3590
        %v3592 = vpop.f32.mrf.mxu0
        %v3593 = vpop.f32.mrf.mxu0
        %v3594 = vadd.f32 %v3426, %v3593
        %v3595 = vpop.f32.mrf.mxu0
        %3596 = vmatprep.mubr.bf16.mxu0 0
        %3597 = vmatmul.mubr.bf16.gmra.mxu0 %v3465
        %v3598 = vpop.f32.mrf.mxu0
        %v3599 = vadd.f32 %v3426, %v3598
        %v3600 = vpop.f32.mrf.mxu0
        %v3601 = vpop.f32.mrf.mxu0
        %v3602 = vadd.f32 %v3426, %v3601
        %v3603 = vpop.f32.mrf.mxu0
        %3604 = vmatprep.mubr.bf16.mxu0 0
        %3605 = vmatmul.mubr.bf16.gmra.mxu0 %v3466
        %v3606 = vpop.f32.mrf.mxu0
        %v3607 = vadd.f32 %v3426, %v3606
        %v3608 = vpop.f32.mrf.mxu0
        %v3609 = vpop.f32.mrf.mxu0
        %v3610 = vadd.f32 %v3426, %v3609
        %v3611 = vpop.f32.mrf.mxu0
        %3612 = vmatprep.mubr.bf16.mxu0 0
        %3613 = vmatmul.mubr.bf16.gmra.mxu0 %v3467
        %v3614 = vpop.f32.mrf.mxu0
        %v3615 = vadd.f32 %v3426, %v3614
        %v3616 = vpop.f32.mrf.mxu0
        %v3617 = vpop.f32.mrf.mxu0
        %v3618 = vadd.f32 %v3426, %v3617
        %v3619 = vpop.f32.mrf.mxu0
        %3620 = vdwg.mxu0
        %3621 = vst [vmem:[%s272] sm:$0xff] %v3559
        %3622 = vst [vmem:[%s272 + $0x8] sm:$0xff] %v3562
        %3623 = vst [vmem:[%s272 + $0x10] sm:$0xff] %v3567
        %3624 = vst [vmem:[%s272 + $0x18] sm:$0xff] %v3570
        %3625 = vst [vmem:[%s272 + $0x20] sm:$0xff] %v3575
        %3626 = vst [vmem:[%s272 + $0x28] sm:$0xff] %v3578
        %3627 = vst [vmem:[%s272 + $0x30] sm:$0xff] %v3583
        %3628 = vst [vmem:[%s272 + $0x38] sm:$0xff] %v3586
        %3629 = vst [vmem:[%s272 + $0x40] sm:$0xff] %v3591
        %3630 = vst [vmem:[%s272 + $0x48] sm:$0xff] %v3594
        %3631 = vst [vmem:[%s272 + $0x50] sm:$0xff] %v3599
        %3632 = vst [vmem:[%s272 + $0x58] sm:$0xff] %v3602
        %3633 = vst [vmem:[%s272 + $0x60] sm:$0xff] %v3607
        %3634 = vst [vmem:[%s272 + $0x68] sm:$0xff] %v3610
        %3635 = vst [vmem:[%s272 + $0x70] sm:$0xff] %v3615
        %3636 = vst [vmem:[%s272 + $0x78] sm:$0xff] %v3618
        %s3637 = sand.u32 %s141, 1
        %s3638 = scalar_lea.sflag [#allocation5], %s3637
        %s3639 = sand.u32 %s141, 1
        %s3640 = smul.addr %s3639, 128
        %s3641 = scalar_lea.vmem [#allocation9], %s3640
        // Predicated region
        $region53: #{tpu_custom_call.1} parent=39 // pred_check
          %p3642 = pneg %p151
        $region54: #{tpu_custom_call.1} parent=39 // pred_check_branch
          %3644 = sbr.rel (%p3642) target = $region56
        $region55: #{tpu_custom_call.1} parent=39 // pred_region
          %s3645 = smul.u32 2, %s23
          %s3647 = ssub.s32 2048, 2048
          %3648 = vsyncadd %s3638, %s3647
          %s3649 = smul.addr %s3645, 8
          %s3650 = smul.addr %s3649, 128
          %s3651 = scalar_lea.hbm %s5, %s3650
          %s3652 = sshll.u32 %s3641, 4
          %s3653 = int_to_ptr.vmem [resolvable:$true] %s3652
          %3658 = dma.vmem_to_hbm [thread:$0]  %s3653, 2048, %s3651, %s3638, 128, 128, 8
        $region56: #{tpu_custom_call.1} parent=39 // pred_fallthru
          _
      $region40: #{tpu_custom_call.1} parent=5 // pred_fallthru
        _
      %p3659 = scmp.le.s32.totalorder 2, %s18
      // Predicated region
      $region57: #{tpu_custom_call.1} parent=5 // pred_check
        %p3660 = pneg %p3659
      $region58: #{tpu_custom_call.1} parent=5 // pred_check_branch
        %3662 = sbr.rel (%p3660) target = $region60
      $region59: #{tpu_custom_call.1} parent=5 // pred_region
        %s3663 = ssub.s32 %s18, 2
        // Predicated region
        $region61: #{tpu_custom_call.1} parent=59 // pred_check
          %p3664 = pneg %p157
        $region62: #{tpu_custom_call.1} parent=59 // pred_check_branch
          %3666 = sbr.rel (%p3664) target = $region64
        $region63: #{tpu_custom_call.1} parent=59 // pred_region
          %s3667 = sand.u32 %s142, 1
          %s3668 = scalar_lea.sflag [#allocation5], %s3667
          %s3669 = sand.u32 %s142, 1
          %s3670 = smul.addr %s3669, 128
          %s3671 = scalar_lea.vmem [#allocation9], %s3670
          %3672 = dma.done %s3668, 2048
        $region64: #{tpu_custom_call.1} parent=59 // pred_fallthru
          _
      $region60: #{tpu_custom_call.1} parent=5 // pred_fallthru
        _
    $region6: #{tpu_custom_call.1} parent=1 // loop_footer
      %s22 = sadd.s32 1, %s18
    $region7: #{tpu_custom_call.1} parent=1 // loop_footer_branch
      %17 = sbr.rel target = $region3
    $region8: #{tpu_custom_call.1} parent=1 // loop_exit
      _
    %3673 = vsyncpa [#allocation4], 1
    %s3674 = scalar_lea.sflag [#allocation4], 1
    %3675 = vsyncpa %s3674, 1
    %3676 = vsyncpa [#allocation7], 1
    %3677 = vsyncpa [#allocation5], 1
    %s3678 = scalar_lea.sflag [#allocation5], 1
    %3679 = vsyncpa %s3678, 1

</llo_original>
